<compile_context>
chip_gen: v6e
topology: v6e:2x2x1
jax: 0.10.0
libtpu: 0.0.40
codegen_flags: <defaults>
</compile_context>

<pallas_src>
import functools

import jax
import jax.numpy as jnp
from jax.experimental import pallas as pl
from jax.experimental.pallas import tpu as pltpu

EPS = 1e-5
C_LANE = 128       # lane-dense channel padding for the conv output
TM_CAP = 256       # max pixel rows (N*H*W) per conv tile


# ---------------------------------------------------------------------------
# Kernel 1: fused Conv3x3 (patches @ weights) + training-mode BatchNorm + ReLU
# ---------------------------------------------------------------------------
def conv_bn_relu_kernel(p_ref, w_ref, g_ref, beta_ref, o_ref,
                        sum_ref, ssq_ref, scale_ref, shift_ref, *, inv_m):
    ph = pl.program_id(1)              # 0: stats accumulation, 1: normalize + write
    m = pl.program_id(2)               # M-tile index (reduction axis, last in grid)
    nm = pl.num_programs(2)

    # Conv tile on the MXU, f32 accumulate. Conv bias intentionally omitted:
    # training-mode BN subtracts the batch mean, which cancels it exactly.
    y = jnp.dot(p_ref[...], w_ref[...], preferred_element_type=jnp.float32)

    @pl.when(ph == 0)
    def _accumulate_stats():
        @pl.when(m == 0)
        def _init():
            sum_ref[...] = jnp.zeros_like(sum_ref)
            ssq_ref[...] = jnp.zeros_like(ssq_ref)

        sum_ref[...] += jnp.sum(y, axis=0, keepdims=True)
        ssq_ref[...] += jnp.sum(y * y, axis=0, keepdims=True)

        # keep the phase-0 writeback deterministic; overwritten in phase 1
        o_ref[...] = y.astype(o_ref.dtype)

        @pl.when(m == nm - 1)
        def _finalize():
            mean = sum_ref[...] * inv_m
            var = jnp.maximum(ssq_ref[...] * inv_m - mean * mean, 0.0)
            scale = g_ref[...] * jax.lax.rsqrt(var + EPS)      # rsqrt -> EUP slot
            scale_ref[...] = scale
            shift_ref[...] = beta_ref[...] - mean * scale

    @pl.when(ph == 1)
    def _normalize_and_write():
        o_ref[...] = jnp.maximum(
            y * scale_ref[...] + shift_ref[...], 0.0).astype(o_ref.dtype)


def _pick_row_tile(m_total, cap=TM_CAP):
    t = cap
    while t >= 8:
        if m_total % t == 0:
            return t
        t //= 2
    return m_total          # fallback: single full block (always legal)


def conv_bn_relu(patches, w_mat, gamma_row, beta_row):
    m_total, k = patches.shape
    cpad = w_mat.shape[1]
    tm = _pick_row_tile(m_total)
    n_m = m_total // tm
    n_c = cpad // C_LANE

    kernel = functools.partial(conv_bn_relu_kernel, inv_m=1.0 / float(m_total))

    flops = 4 * m_total * k * cpad + 8 * m_total * cpad         # 2 phases of matmul
    bytes_accessed = 4 * (2 * m_total * k + k * cpad + m_total * cpad + 2 * cpad)

    return pl.pallas_call(
        kernel,
        out_shape=jax.ShapeDtypeStruct((m_total, cpad), jnp.float32),
        grid_spec=pltpu.PrefetchScalarGridSpec(
            num_scalar_prefetch=0,
            grid=(n_c, 2, n_m),              # (C_out tiles, BN phase, M tiles)
            in_specs=[
                pl.BlockSpec((tm, k), lambda c, ph, m: (m, 0)),
                pl.BlockSpec((k, C_LANE), lambda c, ph, m: (0, c)),
                pl.BlockSpec((1, C_LANE), lambda c, ph, m: (0, c)),
                pl.BlockSpec((1, C_LANE), lambda c, ph, m: (0, c)),
            ],
            out_specs=pl.BlockSpec((tm, C_LANE), lambda c, ph, m: (m, c)),
            scratch_shapes=[
                pltpu.VMEM((1, C_LANE), jnp.float32),   # per-channel sum
                pltpu.VMEM((1, C_LANE), jnp.float32),   # per-channel sum of squares
                pltpu.VMEM((1, C_LANE), jnp.float32),   # folded BN scale
                pltpu.VMEM((1, C_LANE), jnp.float32),   # folded BN shift
            ],
        ),
        compiler_params=pltpu.CompilerParams(
            dimension_semantics=("parallel", "arbitrary", "arbitrary"),
            vmem_limit_bytes=32 * 1024 * 1024,   # explicit & safe on v5e/v6e/v7x
        ),
        cost_estimate=pl.CostEstimate(
            flops=flops, transcendentals=cpad, bytes_accessed=bytes_accessed),
    )(patches, w_mat, gamma_row, beta_row)


def im2col_3x3(x_nhwc):
    """3x3 / stride 1 / pad 1 patch extraction. Returns (N*H*W, 9*C), tap-major."""
    n, h, w, c = x_nhwc.shape
    xp = jnp.pad(x_nhwc, ((0, 0), (1, 1), (1, 1), (0, 0)))
    cols = [xp[:, dy:dy + h, dx:dx + w, :] for dy in range(3) for dx in range(3)]
    patches = jnp.stack(cols, axis=3)                    # (N, H, W, 9, C)
    return patches.reshape(n * h * w, 9 * c)


def single_conv_forward(x_nchw, w, gamma, beta):
    """Conv2d(3x3, pad=1) -> BatchNorm2d(training batch stats) -> ReLU (NCHW in/out)."""
    n, _c_in, h, wd = x_nchw.shape
    c_out = w.shape[0]
    cpad = max(C_LANE, -(-c_out // C_LANE) * C_LANE)

    x = jnp.transpose(x_nchw, (0, 2, 3, 1))                       # NHWC
    patches = im2col_3x3(x)                                       # (M, 9*C_in)
    k = patches.shape[1]

    w_mat = jnp.transpose(w, (2, 3, 1, 0)).reshape(k, c_out)      # (ky,kx,ci) x co
    w_mat = jnp.pad(w_mat, ((0, 0), (0, cpad - c_out)))
    g_row = jnp.pad(gamma, (0, cpad - c_out)).reshape(1, cpad)
    b_row = jnp.pad(beta, (0, cpad - c_out)).reshape(1, cpad)

    y = conv_bn_relu(patches, w_mat, g_row, b_row)                # (M, cpad)
    y = y[:, :c_out].reshape(n, h, wd, c_out)
    return jnp.transpose(y, (0, 3, 1, 2))                         # NCHW


# ---------------------------------------------------------------------------
# Kernel 2: bilinear resize (align_corners=True) as Rh @ X @ Rw^T  +  residual add
# ---------------------------------------------------------------------------
def resize_add_kernel(src_ref, rh_ref, rwt_ref, res_ref, o_ref):
    t = jnp.dot(src_ref[0], rwt_ref[...], preferred_element_type=jnp.float32)
    y = jnp.dot(rh_ref[...], t, preferred_element_type=jnp.float32)
    o_ref[0] = (y + res_ref[0]).astype(o_ref.dtype)


def resize_add(src, rh, rwt, res):
    nc, h, w = src.shape
    h2, w2 = res.shape[1], res.shape[2]
    return pl.pallas_call(
        resize_add_kernel,
        out_shape=jax.ShapeDtypeStruct((nc, h2, w2), jnp.float32),
        grid_spec=pltpu.PrefetchScalarGridSpec(
            num_scalar_prefetch=0,
            grid=(nc,),
            in_specs=[
                pl.BlockSpec((1, h, w), lambda i: (i, 0, 0)),
                pl.BlockSpec((h2, h), lambda i: (0, 0)),
                pl.BlockSpec((w, w2), lambda i: (0, 0)),
                pl.BlockSpec((1, h2, w2), lambda i: (i, 0, 0)),
            ],
            out_specs=pl.BlockSpec((1, h2, w2), lambda i: (i, 0, 0)),
        ),
        compiler_params=pltpu.CompilerParams(
            dimension_semantics=("parallel",)),
    )(src, rh, rwt, res)


def interp_matrix(d_in, d_out):
    """Row-interp matrix for bilinear align_corners=True: out = M @ in."""
    if d_out == 1:
        src = jnp.zeros((1,), jnp.float32)
    else:
        src = jnp.arange(d_out, dtype=jnp.float32) * ((d_in - 1) / (d_out - 1))
    lo = jnp.clip(jnp.floor(src).astype(jnp.int32), 0, d_in - 1)
    hi = jnp.clip(lo + 1, 0, d_in - 1)
    w_hi = src - lo.astype(jnp.float32)
    rows = jnp.arange(d_out)
    m = jnp.zeros((d_out, d_in), jnp.float32)
    m = m.at[rows, lo].add(1.0 - w_hi)
    m = m.at[rows, hi].add(w_hi)
    return m


# ---------------------------------------------------------------------------
# CrossResidualBlock forward
# ---------------------------------------------------------------------------
def cross_residual_block_forward(x1, x2, factor, params):
    w, _b_unused, gamma, beta = params   # conv bias cancels inside training-mode BN
    n = x1.shape[0]
    c_out, c_in = w.shape[0], w.shape[1]
    assert x1.shape[1] == c_in and x2.shape[1] == c_in and c_out == c_in, \
        "CrossResidualBlock residual adds require ch_in == ch_out"

    h2s, w2s = x2.shape[2], x2.shape[3]
    h1s, w1s = x1.shape[2], x1.shape[3]

    # branch 1: x = conv1(x2) -> downsample to x2.spatial/factor -> + x1
    c2 = single_conv_forward(x2, w, gamma, beta)                  # (N, C, H2, W2)
    ht, wt = int(h2s / factor), int(w2s / factor)
    x_out = resize_add(c2.reshape(n * c_out, h2s, w2s),
                       interp_matrix(h2s, ht),
                       interp_matrix(w2s, wt).T,
                       x1.reshape(n * c_out, ht, wt))
    x_out = x_out.reshape(n, c_out, ht, wt)

    # branch 2: y = conv1(x1) -> upsample to x1.spatial*factor -> + x2
    c1 = single_conv_forward(x1, w, gamma, beta)                  # (N, C, H1, W1)
    ht2, wt2 = int(h1s * factor), int(w1s * factor)
    y_out = resize_add(c1.reshape(n * c_out, h1s, w1s),
                       interp_matrix(h1s, ht2),
                       interp_matrix(w1s, wt2).T,
                       x2.reshape(n * c_out, ht2, wt2))
    y_out = y_out.reshape(n, c_out, ht2, wt2)
    return x_out, y_out


# ---------------------------------------------------------------------------
# Pure-JAX reference (mirrors the PyTorch module, training-mode BN)
# ---------------------------------------------------------------------------
def bilinear_resize_ref(x, h_out, w_out):
    _, _, h, w = x.shape

    def coords(d_in, d_out):
        if d_out == 1:
            return jnp.zeros((1,), jnp.float32)
        return jnp.arange(d_out, dtype=jnp.float32) * ((d_in - 1) / (d_out - 1))

    ys, xs = coords(h, h_out), coords(w, w_out)
    y0 = jnp.clip(jnp.floor(ys).astype(jnp.int32), 0, h - 1)
    y1 = jnp.clip(y0 + 1, 0, h - 1)
    x0 = jnp.clip(jnp.floor(xs).astype(jnp.int32), 0, w - 1)
    x1 = jnp.clip(x0 + 1, 0, w - 1)
    wy = (ys - y0.astype(jnp.float32))[None, None, :, None]
    wx = (xs - x0.astype(jnp.float32))[None, None, None, :]

    def gather(yi, xi):
        return x[:, :, yi, :][:, :, :, xi]

    top = gather(y0, x0) * (1.0 - wx) + gather(y0, x1) * wx
    bot = gather(y1, x0) * (1.0 - wx) + gather(y1, x1) * wx
    return top * (1.0 - wy) + bot * wy


def reference_forward(x1, x2, factor, params):
    w, b, gamma, beta = params

    def single_conv_ref(x):
        y = jax.lax.conv_general_dilated(
            x, w, window_strides=(1, 1), padding=((1, 1), (1, 1)),
            dimension_numbers=("NCHW", "OIHW", "NCHW")) + b[None, :, None, None]
        mean = y.mean(axis=(0, 2, 3), keepdims=True)
        var = ((y - mean) ** 2).mean(axis=(0, 2, 3), keepdims=True)
        y = gamma[None, :, None, None] * (y - mean) / jnp.sqrt(var + EPS) \
            + beta[None, :, None, None]
        return jnp.maximum(y, 0.0)

    xb = single_conv_ref(x2)
    xb = bilinear_resize_ref(xb, int(x2.shape[-2] / factor), int(x2.shape[-1] / factor))
    xb = x1 + xb
    yb = single_conv_ref(x1)
    yb = bilinear_resize_ref(yb, int(x1.shape[-2] * factor), int(x1.shape[-1] * factor))
    yb = x2 + yb
    return xb, yb


def init_params(key, ch_in, ch_out):
    """Synthetic deterministic init (Conv2d-like uniform fan-in; BN affine ~ (1, 0))."""
    k1, k2, k3, k4 = jax.random.split(key, 4)
    bound = 1.0 / (ch_in * 9) ** 0.5
    w = jax.random.uniform(k1, (ch_out, ch_in, 3, 3), jnp.float32, -bound, bound)
    b = jax.random.uniform(k2, (ch_out,), jnp.float32, -bound, bound)
    gamma = 1.0 + 0.1 * jax.random.normal(k3, (ch_out,), jnp.float32)
    beta = 0.1 * jax.random.normal(k4, (ch_out,), jnp.float32)
    return (w, b, gamma, beta)


if __name__ == "__main__":
    key = jax.random.PRNGKey(0)
    k1, k2, kp = jax.random.split(key, 3)

    # ch_in == ch_out is required by the module's residual adds.
    N, C, H, W, FACTOR = 2, 8, 16, 16, 2
    x2 = jax.random.normal(k1, (N, C, H, W), jnp.float32)
    x1 = jax.random.normal(k2, (N, C, H // FACTOR, W // FACTOR), jnp.float32)
    params = init_params(kp, C, C)

    fwd = jax.jit(lambda a, b, p: cross_residual_block_forward(a, b, FACTOR, p))
    out_x, out_y = jax.block_until_ready(fwd(x1, x2, params))

    ref_x, ref_y = jax.block_until_ready(reference_forward(x1, x2, FACTOR, params))
    assert out_x.shape == x1.shape and out_y.shape == x2.shape
    assert jnp.allclose(out_x, ref_x, atol=1e-4, rtol=1e-3), \
        f"x branch max abs err = {jnp.max(jnp.abs(out_x - ref_x))}"
    assert jnp.allclose(out_y, ref_y, atol=1e-4, rtol=1e-3), \
        f"y branch max abs err = {jnp.max(jnp.abs(out_y - ref_y))}"

    print("KERNEL_OK")
</pallas_src>

<mosaic_0001>
module attributes {stable_mosaic.version = 11 : i64} {
  func.func private @main(%arg0: i32) attributes {dimension_semantics = [#tpu.dimension_semantics<core_parallel>], iteration_bounds = array<i64: 2>, tpu.core_type = #tpu.core_type<sc_scalar_subcore>, window_params = []} {
    return
  }
}

module attributes {stable_mosaic.version = 11 : i64} {
  func.func private @main(%arg0: i32) attributes {dimension_semantics = [#tpu.dimension_semantics<core_parallel>], iteration_bounds = array<i64: 2>, tpu.core_type = #tpu.core_type<sc_scalar_subcore>, window_params = []} {
    return
  }
}

module attributes {stable_mosaic.version = 11 : i64} {
  func.func @conv_bn_relu_kernel(%arg0: i32, %arg1: i32, %arg2: i32, %arg3: memref<256x72xf32, #tpu.memory_space<vmem>>, %arg4: memref<72x128xf32, #tpu.memory_space<vmem>>, %arg5: memref<1x128xf32, #tpu.memory_space<vmem>>, %arg6: memref<1x128xf32, #tpu.memory_space<vmem>>, %arg7: memref<256x128xf32, #tpu.memory_space<vmem>>, %arg8: memref<1x128xf32, #tpu.memory_space<vmem>>, %arg9: memref<1x128xf32, #tpu.memory_space<vmem>>, %arg10: memref<1x128xf32, #tpu.memory_space<vmem>>, %arg11: memref<1x128xf32, #tpu.memory_space<vmem>>) attributes {dimension_semantics = [#tpu.dimension_semantics<parallel>, #tpu.dimension_semantics<arbitrary>, #tpu.dimension_semantics<arbitrary>], iteration_bounds = array<i64: 1, 2, 2>, scalar_prefetch = 0 : i64, scratch_operands = 4 : i64, tpu.core_type = #tpu.core_type<tc>, window_params = [{transform_indices = @transform_0, window_bounds = array<i64: 256, 72>}, {transform_indices = @transform_1, window_bounds = array<i64: 72, 128>}, {transform_indices = @transform_2, window_bounds = array<i64: 1, 128>}, {transform_indices = @transform_3, window_bounds = array<i64: 1, 128>}, {transform_indices = @transform_4, window_bounds = array<i64: 256, 128>}]} {
    %c0 = arith.constant 0 : index
    %c0_0 = arith.constant 0 : index
    %0 = vector.load %arg3[%c0, %c0_0] : memref<256x72xf32, #tpu.memory_space<vmem>>, vector<256x72xf32>
    %c0_1 = arith.constant 0 : index
    %c0_2 = arith.constant 0 : index
    %1 = vector.load %arg4[%c0_1, %c0_2] : memref<72x128xf32, #tpu.memory_space<vmem>>, vector<72x128xf32>
    %cst = arith.constant dense<0.000000e+00> : vector<256x128xf32>
    %2 = tpu.matmul %0, %1, %cst {dimension_numbers = #tpu.dot_dimension_numbers<[1], [0], [0], [1], [0, 0, 1, 1], [], []>} : vector<256x72xf32>, vector<72x128xf32>, vector<256x128xf32> -> vector<256x128xf32>
    %c0_i32 = arith.constant 0 : i32
    %3 = arith.cmpi eq, %arg1, %c0_i32 : i32
    %4 = arith.extui %3 : i1 to i32
    %c0_i32_3 = arith.constant 0 : i32
    %5 = arith.cmpi ne, %4, %c0_i32_3 : i32
    scf.if %5 {
      %c0_i32_5 = arith.constant 0 : i32
      %9 = arith.cmpi eq, %arg2, %c0_i32_5 : i32
      %10 = arith.extui %9 : i1 to i32
      %c0_i32_6 = arith.constant 0 : i32
      %11 = arith.cmpi ne, %10, %c0_i32_6 : i32
      scf.if %11 {
        %cst_21 = arith.constant 0.000000e+00 : f32
        %27 = vector.broadcast %cst_21 : f32 to vector<1x128xf32>
        %c0_22 = arith.constant 0 : index
        %c0_23 = arith.constant 0 : index
        %28 = vector.load %arg8[%c0_22, %c0_23] : memref<1x128xf32, #tpu.memory_space<vmem>>, vector<1x128xf32>
        tpu.vector_store %arg8[%c0_22, %c0_23], %27 {strides = array<i32>} : memref<1x128xf32, #tpu.memory_space<vmem>>, vector<1x128xf32>,
        %cst_24 = arith.constant 0.000000e+00 : f32
        %29 = vector.broadcast %cst_24 : f32 to vector<1x128xf32>
        %c0_25 = arith.constant 0 : index
        %c0_26 = arith.constant 0 : index
        %30 = vector.load %arg9[%c0_25, %c0_26] : memref<1x128xf32, #tpu.memory_space<vmem>>, vector<1x128xf32>
        tpu.vector_store %arg9[%c0_25, %c0_26], %29 {strides = array<i32>} : memref<1x128xf32, #tpu.memory_space<vmem>>, vector<1x128xf32>,
      } else {
      }
      %c0_7 = arith.constant 0 : index
      %c0_8 = arith.constant 0 : index
      %12 = vector.load %arg8[%c0_7, %c0_8] : memref<1x128xf32, #tpu.memory_space<vmem>>, vector<1x128xf32>
      %cst_9 = arith.constant dense<0.000000e+00> : vector<128xf32>
      %13 = vector.multi_reduction <add>, %2, %cst_9 [0] : vector<256x128xf32> to vector<128xf32>
      %14 = vector.shape_cast %13 : vector<128xf32> to vector<1x128xf32>
      %15 = arith.addf %12, %14 : vector<1x128xf32>
      %c0_10 = arith.constant 0 : index
      %c0_11 = arith.constant 0 : index
      %16 = vector.load %arg8[%c0_10, %c0_11] : memref<1x128xf32, #tpu.memory_space<vmem>>, vector<1x128xf32>
      tpu.vector_store %arg8[%c0_10, %c0_11], %15 {strides = array<i32>} : memref<1x128xf32, #tpu.memory_space<vmem>>, vector<1x128xf32>,
      %c0_12 = arith.constant 0 : index
      %c0_13 = arith.constant 0 : index
      %17 = vector.load %arg9[%c0_12, %c0_13] : memref<1x128xf32, #tpu.memory_space<vmem>>, vector<1x128xf32>
      %18 = arith.mulf %2, %2 : vector<256x128xf32>
      %cst_14 = arith.constant dense<0.000000e+00> : vector<128xf32>
      %19 = vector.multi_reduction <add>, %18, %cst_14 [0] : vector<256x128xf32> to vector<128xf32>
      %20 = vector.shape_cast %19 : vector<128xf32> to vector<1x128xf32>
      %21 = arith.addf %17, %20 : vector<1x128xf32>
      %c0_15 = arith.constant 0 : index
      %c0_16 = arith.constant 0 : index
      %22 = vector.load %arg9[%c0_15, %c0_16] : memref<1x128xf32, #tpu.memory_space<vmem>>, vector<1x128xf32>
      tpu.vector_store %arg9[%c0_15, %c0_16], %21 {strides = array<i32>} : memref<1x128xf32, #tpu.memory_space<vmem>>, vector<1x128xf32>,
      %c0_17 = arith.constant 0 : index
      %c0_18 = arith.constant 0 : index
      %23 = vector.load %arg7[%c0_17, %c0_18] : memref<256x128xf32, #tpu.memory_space<vmem>>, vector<256x128xf32>
      tpu.vector_store %arg7[%c0_17, %c0_18], %2 {strides = array<i32>} : memref<256x128xf32, #tpu.memory_space<vmem>>, vector<256x128xf32>,
      %c1_i32_19 = arith.constant 1 : i32
      %24 = arith.cmpi eq, %arg2, %c1_i32_19 : i32
      %25 = arith.extui %24 : i1 to i32
      %c0_i32_20 = arith.constant 0 : i32
      %26 = arith.cmpi ne, %25, %c0_i32_20 : i32
      scf.if %26 {
        %c0_21 = arith.constant 0 : index
        %c0_22 = arith.constant 0 : index
        %27 = vector.load %arg8[%c0_21, %c0_22] : memref<1x128xf32, #tpu.memory_space<vmem>>, vector<1x128xf32>
        %cst_23 = arith.constant 0.001953125 : f32
        %28 = vector.broadcast %cst_23 : f32 to vector<1x128xf32>
        %29 = arith.mulf %27, %28 : vector<1x128xf32>
        %c0_24 = arith.constant 0 : index
        %c0_25 = arith.constant 0 : index
        %30 = vector.load %arg9[%c0_24, %c0_25] : memref<1x128xf32, #tpu.memory_space<vmem>>, vector<1x128xf32>
        %cst_26 = arith.constant 0.001953125 : f32
        %31 = vector.broadcast %cst_26 : f32 to vector<1x128xf32>
        %32 = arith.mulf %30, %31 : vector<1x128xf32>
        %33 = arith.mulf %29, %29 : vector<1x128xf32>
        %34 = arith.subf %32, %33 : vector<1x128xf32>
        %cst_27 = arith.constant 0.000000e+00 : f32
        %35 = vector.broadcast %cst_27 : f32 to vector<1x128xf32>
        %36 = arith.maximumf %34, %35 : vector<1x128xf32>
        %c0_28 = arith.constant 0 : index
        %c0_29 = arith.constant 0 : index
        %37 = vector.load %arg5[%c0_28, %c0_29] : memref<1x128xf32, #tpu.memory_space<vmem>>, vector<1x128xf32>
        %cst_30 = arith.constant 9.99999974E-6 : f32
        %38 = vector.broadcast %cst_30 : f32 to vector<1x128xf32>
        %39 = arith.addf %36, %38 : vector<1x128xf32>
        %40 = math.rsqrt %39 : vector<1x128xf32>
        %41 = arith.mulf %37, %40 : vector<1x128xf32>
        %c0_31 = arith.constant 0 : index
        %c0_32 = arith.constant 0 : index
        %42 = vector.load %arg10[%c0_31, %c0_32] : memref<1x128xf32, #tpu.memory_space<vmem>>, vector<1x128xf32>
        tpu.vector_store %arg10[%c0_31, %c0_32], %41 {strides = array<i32>} : memref<1x128xf32, #tpu.memory_space<vmem>>, vector<1x128xf32>,
        %c0_33 = arith.constant 0 : index
        %c0_34 = arith.constant 0 : index
        %43 = vector.load %arg6[%c0_33, %c0_34] : memref<1x128xf32, #tpu.memory_space<vmem>>, vector<1x128xf32>
        %44 = arith.mulf %29, %41 : vector<1x128xf32>
        %45 = arith.subf %43, %44 : vector<1x128xf32>
        %c0_35 = arith.constant 0 : index
        %c0_36 = arith.constant 0 : index
        %46 = vector.load %arg11[%c0_35, %c0_36] : memref<1x128xf32, #tpu.memory_space<vmem>>, vector<1x128xf32>
        tpu.vector_store %arg11[%c0_35, %c0_36], %45 {strides = array<i32>} : memref<1x128xf32, #tpu.memory_space<vmem>>, vector<1x128xf32>,
      } else {
      }
    } else {
    }
    %c1_i32 = arith.constant 1 : i32
    %6 = arith.cmpi eq, %arg1, %c1_i32 : i32
    %7 = arith.extui %6 : i1 to i32
    %c0_i32_4 = arith.constant 0 : i32
    %8 = arith.cmpi ne, %7, %c0_i32_4 : i32
    scf.if %8 {
      %c0_5 = arith.constant 0 : index
      %c0_6 = arith.constant 0 : index
      %9 = vector.load %arg10[%c0_5, %c0_6] : memref<1x128xf32, #tpu.memory_space<vmem>>, vector<1x128xf32>
      %10 = vector.broadcast %9 : vector<1x128xf32> to vector<256x128xf32>
      %11 = arith.mulf %2, %10 : vector<256x128xf32>
      %c0_7 = arith.constant 0 : index
      %c0_8 = arith.constant 0 : index
      %12 = vector.load %arg11[%c0_7, %c0_8] : memref<1x128xf32, #tpu.memory_space<vmem>>, vector<1x128xf32>
      %13 = vector.broadcast %12 : vector<1x128xf32> to vector<256x128xf32>
      %14 = arith.addf %11, %13 : vector<256x128xf32>
      %cst_9 = arith.constant 0.000000e+00 : f32
      %15 = vector.broadcast %cst_9 : f32 to vector<256x128xf32>
      %16 = arith.maximumf %14, %15 : vector<256x128xf32>
      %c0_10 = arith.constant 0 : index
      %c0_11 = arith.constant 0 : index
      %17 = vector.load %arg7[%c0_10, %c0_11] : memref<256x128xf32, #tpu.memory_space<vmem>>, vector<256x128xf32>
      tpu.vector_store %arg7[%c0_10, %c0_11], %16 {strides = array<i32>} : memref<256x128xf32, #tpu.memory_space<vmem>>, vector<256x128xf32>,
    } else {
    }
    return
  }
  func.func @transform_0(%arg0: i32, %arg1: i32, %arg2: i32) -> (i32, i32) {
    %c0_i32 = arith.constant 0 : i32
    %c0_i32_0 = arith.constant 0 : i32
    return %arg2, %c0_i32 : i32, i32
  }
  func.func @transform_1(%arg0: i32, %arg1: i32, %arg2: i32) -> (i32, i32) {
    %c0_i32 = arith.constant 0 : i32
    %c0_i32_0 = arith.constant 0 : i32
    return %c0_i32, %arg0 : i32, i32
  }
  func.func @transform_2(%arg0: i32, %arg1: i32, %arg2: i32) -> (i32, i32) {
    %c0_i32 = arith.constant 0 : i32
    %c0_i32_0 = arith.constant 0 : i32
    return %c0_i32, %arg0 : i32, i32
  }
  func.func @transform_3(%arg0: i32, %arg1: i32, %arg2: i32) -> (i32, i32) {
    %c0_i32 = arith.constant 0 : i32
    %c0_i32_0 = arith.constant 0 : i32
    return %c0_i32, %arg0 : i32, i32
  }
  func.func @transform_4(%arg0: i32, %arg1: i32, %arg2: i32) -> (i32, i32) {
    %c0_i32 = arith.constant 0 : i32
    return %arg2, %arg0 : i32, i32
  }
}

module attributes {stable_mosaic.version = 11 : i64} {
  func.func @conv_bn_relu_kernel(%arg0: i32, %arg1: i32, %arg2: i32, %arg3: memref<128x72xf32, #tpu.memory_space<vmem>>, %arg4: memref<72x128xf32, #tpu.memory_space<vmem>>, %arg5: memref<1x128xf32, #tpu.memory_space<vmem>>, %arg6: memref<1x128xf32, #tpu.memory_space<vmem>>, %arg7: memref<128x128xf32, #tpu.memory_space<vmem>>, %arg8: memref<1x128xf32, #tpu.memory_space<vmem>>, %arg9: memref<1x128xf32, #tpu.memory_space<vmem>>, %arg10: memref<1x128xf32, #tpu.memory_space<vmem>>, %arg11: memref<1x128xf32, #tpu.memory_space<vmem>>) attributes {dimension_semantics = [#tpu.dimension_semantics<parallel>, #tpu.dimension_semantics<arbitrary>, #tpu.dimension_semantics<arbitrary>], iteration_bounds = array<i64: 1, 2, 1>, scalar_prefetch = 0 : i64, scratch_operands = 4 : i64, tpu.core_type = #tpu.core_type<tc>, window_params = [{transform_indices = @transform_0, window_bounds = array<i64: 128, 72>}, {transform_indices = @transform_1, window_bounds = array<i64: 72, 128>}, {transform_indices = @transform_2, window_bounds = array<i64: 1, 128>}, {transform_indices = @transform_3, window_bounds = array<i64: 1, 128>}, {transform_indices = @transform_4, window_bounds = array<i64: 128, 128>}]} {
    %c0 = arith.constant 0 : index
    %c0_0 = arith.constant 0 : index
    %0 = vector.load %arg3[%c0, %c0_0] : memref<128x72xf32, #tpu.memory_space<vmem>>, vector<128x72xf32>
    %c0_1 = arith.constant 0 : index
    %c0_2 = arith.constant 0 : index
    %1 = vector.load %arg4[%c0_1, %c0_2] : memref<72x128xf32, #tpu.memory_space<vmem>>, vector<72x128xf32>
    %cst = arith.constant dense<0.000000e+00> : vector<128x128xf32>
    %2 = tpu.matmul %0, %1, %cst {dimension_numbers = #tpu.dot_dimension_numbers<[1], [0], [0], [1], [0, 0, 1, 1], [], []>} : vector<128x72xf32>, vector<72x128xf32>, vector<128x128xf32> -> vector<128x128xf32>
    %c0_i32 = arith.constant 0 : i32
    %3 = arith.cmpi eq, %arg1, %c0_i32 : i32
    %4 = arith.extui %3 : i1 to i32
    %c0_i32_3 = arith.constant 0 : i32
    %5 = arith.cmpi ne, %4, %c0_i32_3 : i32
    scf.if %5 {
      %c0_i32_5 = arith.constant 0 : i32
      %9 = arith.cmpi eq, %arg2, %c0_i32_5 : i32
      %10 = arith.extui %9 : i1 to i32
      %c0_i32_6 = arith.constant 0 : i32
      %11 = arith.cmpi ne, %10, %c0_i32_6 : i32
      scf.if %11 {
        %cst_21 = arith.constant 0.000000e+00 : f32
        %27 = vector.broadcast %cst_21 : f32 to vector<1x128xf32>
        %c0_22 = arith.constant 0 : index
        %c0_23 = arith.constant 0 : index
        %28 = vector.load %arg8[%c0_22, %c0_23] : memref<1x128xf32, #tpu.memory_space<vmem>>, vector<1x128xf32>
        tpu.vector_store %arg8[%c0_22, %c0_23], %27 {strides = array<i32>} : memref<1x128xf32, #tpu.memory_space<vmem>>, vector<1x128xf32>,
        %cst_24 = arith.constant 0.000000e+00 : f32
        %29 = vector.broadcast %cst_24 : f32 to vector<1x128xf32>
        %c0_25 = arith.constant 0 : index
        %c0_26 = arith.constant 0 : index
        %30 = vector.load %arg9[%c0_25, %c0_26] : memref<1x128xf32, #tpu.memory_space<vmem>>, vector<1x128xf32>
        tpu.vector_store %arg9[%c0_25, %c0_26], %29 {strides = array<i32>} : memref<1x128xf32, #tpu.memory_space<vmem>>, vector<1x128xf32>,
      } else {
      }
      %c0_7 = arith.constant 0 : index
      %c0_8 = arith.constant 0 : index
      %12 = vector.load %arg8[%c0_7, %c0_8] : memref<1x128xf32, #tpu.memory_space<vmem>>, vector<1x128xf32>
      %cst_9 = arith.constant dense<0.000000e+00> : vector<128xf32>
      %13 = vector.multi_reduction <add>, %2, %cst_9 [0] : vector<128x128xf32> to vector<128xf32>
      %14 = vector.shape_cast %13 : vector<128xf32> to vector<1x128xf32>
      %15 = arith.addf %12, %14 : vector<1x128xf32>
      %c0_10 = arith.constant 0 : index
      %c0_11 = arith.constant 0 : index
      %16 = vector.load %arg8[%c0_10, %c0_11] : memref<1x128xf32, #tpu.memory_space<vmem>>, vector<1x128xf32>
      tpu.vector_store %arg8[%c0_10, %c0_11], %15 {strides = array<i32>} : memref<1x128xf32, #tpu.memory_space<vmem>>, vector<1x128xf32>,
      %c0_12 = arith.constant 0 : index
      %c0_13 = arith.constant 0 : index
      %17 = vector.load %arg9[%c0_12, %c0_13] : memref<1x128xf32, #tpu.memory_space<vmem>>, vector<1x128xf32>
      %18 = arith.mulf %2, %2 : vector<128x128xf32>
      %cst_14 = arith.constant dense<0.000000e+00> : vector<128xf32>
      %19 = vector.multi_reduction <add>, %18, %cst_14 [0] : vector<128x128xf32> to vector<128xf32>
      %20 = vector.shape_cast %19 : vector<128xf32> to vector<1x128xf32>
      %21 = arith.addf %17, %20 : vector<1x128xf32>
      %c0_15 = arith.constant 0 : index
      %c0_16 = arith.constant 0 : index
      %22 = vector.load %arg9[%c0_15, %c0_16] : memref<1x128xf32, #tpu.memory_space<vmem>>, vector<1x128xf32>
      tpu.vector_store %arg9[%c0_15, %c0_16], %21 {strides = array<i32>} : memref<1x128xf32, #tpu.memory_space<vmem>>, vector<1x128xf32>,
      %c0_17 = arith.constant 0 : index
      %c0_18 = arith.constant 0 : index
      %23 = vector.load %arg7[%c0_17, %c0_18] : memref<128x128xf32, #tpu.memory_space<vmem>>, vector<128x128xf32>
      tpu.vector_store %arg7[%c0_17, %c0_18], %2 {strides = array<i32>} : memref<128x128xf32, #tpu.memory_space<vmem>>, vector<128x128xf32>,
      %c0_i32_19 = arith.constant 0 : i32
      %24 = arith.cmpi eq, %arg2, %c0_i32_19 : i32
      %25 = arith.extui %24 : i1 to i32
      %c0_i32_20 = arith.constant 0 : i32
      %26 = arith.cmpi ne, %25, %c0_i32_20 : i32
      scf.if %26 {
        %c0_21 = arith.constant 0 : index
        %c0_22 = arith.constant 0 : index
        %27 = vector.load %arg8[%c0_21, %c0_22] : memref<1x128xf32, #tpu.memory_space<vmem>>, vector<1x128xf32>
        %cst_23 = arith.constant 7.812500e-03 : f32
        %28 = vector.broadcast %cst_23 : f32 to vector<1x128xf32>
        %29 = arith.mulf %27, %28 : vector<1x128xf32>
        %c0_24 = arith.constant 0 : index
        %c0_25 = arith.constant 0 : index
        %30 = vector.load %arg9[%c0_24, %c0_25] : memref<1x128xf32, #tpu.memory_space<vmem>>, vector<1x128xf32>
        %cst_26 = arith.constant 7.812500e-03 : f32
        %31 = vector.broadcast %cst_26 : f32 to vector<1x128xf32>
        %32 = arith.mulf %30, %31 : vector<1x128xf32>
        %33 = arith.mulf %29, %29 : vector<1x128xf32>
        %34 = arith.subf %32, %33 : vector<1x128xf32>
        %cst_27 = arith.constant 0.000000e+00 : f32
        %35 = vector.broadcast %cst_27 : f32 to vector<1x128xf32>
        %36 = arith.maximumf %34, %35 : vector<1x128xf32>
        %c0_28 = arith.constant 0 : index
        %c0_29 = arith.constant 0 : index
        %37 = vector.load %arg5[%c0_28, %c0_29] : memref<1x128xf32, #tpu.memory_space<vmem>>, vector<1x128xf32>
        %cst_30 = arith.constant 9.99999974E-6 : f32
        %38 = vector.broadcast %cst_30 : f32 to vector<1x128xf32>
        %39 = arith.addf %36, %38 : vector<1x128xf32>
        %40 = math.rsqrt %39 : vector<1x128xf32>
        %41 = arith.mulf %37, %40 : vector<1x128xf32>
        %c0_31 = arith.constant 0 : index
        %c0_32 = arith.constant 0 : index
        %42 = vector.load %arg10[%c0_31, %c0_32] : memref<1x128xf32, #tpu.memory_space<vmem>>, vector<1x128xf32>
        tpu.vector_store %arg10[%c0_31, %c0_32], %41 {strides = array<i32>} : memref<1x128xf32, #tpu.memory_space<vmem>>, vector<1x128xf32>,
        %c0_33 = arith.constant 0 : index
        %c0_34 = arith.constant 0 : index
        %43 = vector.load %arg6[%c0_33, %c0_34] : memref<1x128xf32, #tpu.memory_space<vmem>>, vector<1x128xf32>
        %44 = arith.mulf %29, %41 : vector<1x128xf32>
        %45 = arith.subf %43, %44 : vector<1x128xf32>
        %c0_35 = arith.constant 0 : index
        %c0_36 = arith.constant 0 : index
        %46 = vector.load %arg11[%c0_35, %c0_36] : memref<1x128xf32, #tpu.memory_space<vmem>>, vector<1x128xf32>
        tpu.vector_store %arg11[%c0_35, %c0_36], %45 {strides = array<i32>} : memref<1x128xf32, #tpu.memory_space<vmem>>, vector<1x128xf32>,
      } else {
      }
    } else {
    }
    %c1_i32 = arith.constant 1 : i32
    %6 = arith.cmpi eq, %arg1, %c1_i32 : i32
    %7 = arith.extui %6 : i1 to i32
    %c0_i32_4 = arith.constant 0 : i32
    %8 = arith.cmpi ne, %7, %c0_i32_4 : i32
    scf.if %8 {
      %c0_5 = arith.constant 0 : index
      %c0_6 = arith.constant 0 : index
      %9 = vector.load %arg10[%c0_5, %c0_6] : memref<1x128xf32, #tpu.memory_space<vmem>>, vector<1x128xf32>
      %10 = vector.broadcast %9 : vector<1x128xf32> to vector<128x128xf32>
      %11 = arith.mulf %2, %10 : vector<128x128xf32>
      %c0_7 = arith.constant 0 : index
      %c0_8 = arith.constant 0 : index
      %12 = vector.load %arg11[%c0_7, %c0_8] : memref<1x128xf32, #tpu.memory_space<vmem>>, vector<1x128xf32>
      %13 = vector.broadcast %12 : vector<1x128xf32> to vector<128x128xf32>
      %14 = arith.addf %11, %13 : vector<128x128xf32>
      %cst_9 = arith.constant 0.000000e+00 : f32
      %15 = vector.broadcast %cst_9 : f32 to vector<128x128xf32>
      %16 = arith.maximumf %14, %15 : vector<128x128xf32>
      %c0_10 = arith.constant 0 : index
      %c0_11 = arith.constant 0 : index
      %17 = vector.load %arg7[%c0_10, %c0_11] : memref<128x128xf32, #tpu.memory_space<vmem>>, vector<128x128xf32>
      tpu.vector_store %arg7[%c0_10, %c0_11], %16 {strides = array<i32>} : memref<128x128xf32, #tpu.memory_space<vmem>>, vector<128x128xf32>,
    } else {
    }
    return
  }
  func.func @transform_0(%arg0: i32, %arg1: i32, %arg2: i32) -> (i32, i32) {
    %c0_i32 = arith.constant 0 : i32
    %c0_i32_0 = arith.constant 0 : i32
    return %arg2, %c0_i32 : i32, i32
  }
  func.func @transform_1(%arg0: i32, %arg1: i32, %arg2: i32) -> (i32, i32) {
    %c0_i32 = arith.constant 0 : i32
    %c0_i32_0 = arith.constant 0 : i32
    return %c0_i32, %arg0 : i32, i32
  }
  func.func @transform_2(%arg0: i32, %arg1: i32, %arg2: i32) -> (i32, i32) {
    %c0_i32 = arith.constant 0 : i32
    %c0_i32_0 = arith.constant 0 : i32
    return %c0_i32, %arg0 : i32, i32
  }
  func.func @transform_3(%arg0: i32, %arg1: i32, %arg2: i32) -> (i32, i32) {
    %c0_i32 = arith.constant 0 : i32
    %c0_i32_0 = arith.constant 0 : i32
    return %c0_i32, %arg0 : i32, i32
  }
  func.func @transform_4(%arg0: i32, %arg1: i32, %arg2: i32) -> (i32, i32) {
    %c0_i32 = arith.constant 0 : i32
    return %arg2, %arg0 : i32, i32
  }
}

module attributes {stable_mosaic.version = 11 : i64} {
  func.func @resize_add_kernel(%arg0: i32, %arg1: memref<1x8x8xf32, #tpu.memory_space<vmem>>, %arg2: memref<16x8xf32, #tpu.memory_space<vmem>>, %arg3: memref<8x16xf32, #tpu.memory_space<vmem>>, %arg4: memref<1x16x16xf32, #tpu.memory_space<vmem>>, %arg5: memref<1x16x16xf32, #tpu.memory_space<vmem>>) attributes {dimension_semantics = [#tpu.dimension_semantics<parallel>], iteration_bounds = array<i64: 16>, scalar_prefetch = 0 : i64, scratch_operands = 0 : i64, tpu.core_type = #tpu.core_type<tc>, window_params = [{transform_indices = @transform_0, window_bounds = array<i64: 1, 8, 8>}, {pipeline_mode = #tpu.pipeline_mode<synchronous>, transform_indices = @transform_1, window_bounds = array<i64: 16, 8>}, {pipeline_mode = #tpu.pipeline_mode<synchronous>, transform_indices = @transform_2, window_bounds = array<i64: 8, 16>}, {transform_indices = @transform_3, window_bounds = array<i64: 1, 16, 16>}, {transform_indices = @transform_4, window_bounds = array<i64: 1, 16, 16>}]} {
    %c0 = arith.constant 0 : index
    %c0_0 = arith.constant 0 : index
    %c0_1 = arith.constant 0 : index
    %0 = vector.load %arg1[%c0, %c0_0, %c0_1] : memref<1x8x8xf32, #tpu.memory_space<vmem>>, vector<1x8x8xf32>
    %1 = vector.shape_cast %0 : vector<1x8x8xf32> to vector<8x8xf32>
    %c0_2 = arith.constant 0 : index
    %c0_3 = arith.constant 0 : index
    %2 = vector.load %arg3[%c0_2, %c0_3] : memref<8x16xf32, #tpu.memory_space<vmem>>, vector<8x16xf32>
    %cst = arith.constant dense<0.000000e+00> : vector<8x16xf32>
    %3 = tpu.matmul %1, %2, %cst {dimension_numbers = #tpu.dot_dimension_numbers<[1], [0], [0], [1], [0, 0, 1, 1], [], []>} : vector<8x8xf32>, vector<8x16xf32>, vector<8x16xf32> -> vector<8x16xf32>
    %c0_4 = arith.constant 0 : index
    %c0_5 = arith.constant 0 : index
    %4 = vector.load %arg2[%c0_4, %c0_5] : memref<16x8xf32, #tpu.memory_space<vmem>>, vector<16x8xf32>
    %cst_6 = arith.constant dense<0.000000e+00> : vector<16x16xf32>
    %5 = tpu.matmul %4, %3, %cst_6 {dimension_numbers = #tpu.dot_dimension_numbers<[1], [0], [0], [1], [0, 0, 1, 1], [], []>} : vector<16x8xf32>, vector<8x16xf32>, vector<16x16xf32> -> vector<16x16xf32>
    %c0_7 = arith.constant 0 : index
    %c0_8 = arith.constant 0 : index
    %c0_9 = arith.constant 0 : index
    %6 = vector.load %arg4[%c0_7, %c0_8, %c0_9] : memref<1x16x16xf32, #tpu.memory_space<vmem>>, vector<1x16x16xf32>
    %7 = vector.shape_cast %6 : vector<1x16x16xf32> to vector<16x16xf32>
    %8 = arith.addf %5, %7 : vector<16x16xf32>
    %c0_10 = arith.constant 0 : index
    %c0_11 = arith.constant 0 : index
    %c0_12 = arith.constant 0 : index
    %9 = vector.load %arg5[%c0_10, %c0_11, %c0_12] : memref<1x16x16xf32, #tpu.memory_space<vmem>>, vector<1x16x16xf32>
    %10 = vector.shape_cast %9 : vector<1x16x16xf32> to vector<16x16xf32>
    %11 = vector.shape_cast %8 : vector<16x16xf32> to vector<1x16x16xf32>
    tpu.vector_store %arg5[%c0_10, %c0_11, %c0_12], %11 {strides = array<i32>} : memref<1x16x16xf32, #tpu.memory_space<vmem>>, vector<1x16x16xf32>,
    return
  }
  func.func @transform_0(%arg0: i32) -> (i32, i32, i32) {
    %c0_i32 = arith.constant 0 : i32
    %c0_i32_0 = arith.constant 0 : i32
    %c0_i32_1 = arith.constant 0 : i32
    return %arg0, %c0_i32, %c0_i32_0 : i32, i32, i32
  }
  func.func @transform_1(%arg0: i32) -> (i32, i32) {
    %c0_i32 = arith.constant 0 : i32
    %c0_i32_0 = arith.constant 0 : i32
    %c0_i32_1 = arith.constant 0 : i32
    return %c0_i32, %c0_i32_0 : i32, i32
  }
  func.func @transform_2(%arg0: i32) -> (i32, i32) {
    %c0_i32 = arith.constant 0 : i32
    %c0_i32_0 = arith.constant 0 : i32
    %c0_i32_1 = arith.constant 0 : i32
    return %c0_i32, %c0_i32_0 : i32, i32
  }
  func.func @transform_3(%arg0: i32) -> (i32, i32, i32) {
    %c0_i32 = arith.constant 0 : i32
    %c0_i32_0 = arith.constant 0 : i32
    %c0_i32_1 = arith.constant 0 : i32
    return %arg0, %c0_i32, %c0_i32_0 : i32, i32, i32
  }
  func.func @transform_4(%arg0: i32) -> (i32, i32, i32) {
    %c0_i32 = arith.constant 0 : i32
    %c0_i32_0 = arith.constant 0 : i32
    %c0_i32_1 = arith.constant 0 : i32
    return %arg0, %c0_i32, %c0_i32_0 : i32, i32, i32
  }
}

module attributes {stable_mosaic.version = 11 : i64} {
  func.func @resize_add_kernel(%arg0: i32, %arg1: memref<1x16x16xf32, #tpu.memory_space<vmem>>, %arg2: memref<8x16xf32, #tpu.memory_space<vmem>>, %arg3: memref<16x8xf32, #tpu.memory_space<vmem>>, %arg4: memref<1x8x8xf32, #tpu.memory_space<vmem>>, %arg5: memref<1x8x8xf32, #tpu.memory_space<vmem>>) attributes {dimension_semantics = [#tpu.dimension_semantics<parallel>], iteration_bounds = array<i64: 16>, scalar_prefetch = 0 : i64, scratch_operands = 0 : i64, tpu.core_type = #tpu.core_type<tc>, window_params = [{transform_indices = @transform_0, window_bounds = array<i64: 1, 16, 16>}, {pipeline_mode = #tpu.pipeline_mode<synchronous>, transform_indices = @transform_1, window_bounds = array<i64: 8, 16>}, {pipeline_mode = #tpu.pipeline_mode<synchronous>, transform_indices = @transform_2, window_bounds = array<i64: 16, 8>}, {transform_indices = @transform_3, window_bounds = array<i64: 1, 8, 8>}, {transform_indices = @transform_4, window_bounds = array<i64: 1, 8, 8>}]} {
    %c0 = arith.constant 0 : index
    %c0_0 = arith.constant 0 : index
    %c0_1 = arith.constant 0 : index
    %0 = vector.load %arg1[%c0, %c0_0, %c0_1] : memref<1x16x16xf32, #tpu.memory_space<vmem>>, vector<1x16x16xf32>
    %1 = vector.shape_cast %0 : vector<1x16x16xf32> to vector<16x16xf32>
    %c0_2 = arith.constant 0 : index
    %c0_3 = arith.constant 0 : index
    %2 = vector.load %arg3[%c0_2, %c0_3] : memref<16x8xf32, #tpu.memory_space<vmem>>, vector<16x8xf32>
    %cst = arith.constant dense<0.000000e+00> : vector<16x8xf32>
    %3 = tpu.matmul %1, %2, %cst {dimension_numbers = #tpu.dot_dimension_numbers<[1], [0], [0], [1], [0, 0, 1, 1], [], []>} : vector<16x16xf32>, vector<16x8xf32>, vector<16x8xf32> -> vector<16x8xf32>
    %c0_4 = arith.constant 0 : index
    %c0_5 = arith.constant 0 : index
    %4 = vector.load %arg2[%c0_4, %c0_5] : memref<8x16xf32, #tpu.memory_space<vmem>>, vector<8x16xf32>
    %cst_6 = arith.constant dense<0.000000e+00> : vector<8x8xf32>
    %5 = tpu.matmul %4, %3, %cst_6 {dimension_numbers = #tpu.dot_dimension_numbers<[1], [0], [0], [1], [0, 0, 1, 1], [], []>} : vector<8x16xf32>, vector<16x8xf32>, vector<8x8xf32> -> vector<8x8xf32>
    %c0_7 = arith.constant 0 : index
    %c0_8 = arith.constant 0 : index
    %c0_9 = arith.constant 0 : index
    %6 = vector.load %arg4[%c0_7, %c0_8, %c0_9] : memref<1x8x8xf32, #tpu.memory_space<vmem>>, vector<1x8x8xf32>
    %7 = vector.shape_cast %6 : vector<1x8x8xf32> to vector<8x8xf32>
    %8 = arith.addf %5, %7 : vector<8x8xf32>
    %c0_10 = arith.constant 0 : index
    %c0_11 = arith.constant 0 : index
    %c0_12 = arith.constant 0 : index
    %9 = vector.load %arg5[%c0_10, %c0_11, %c0_12] : memref<1x8x8xf32, #tpu.memory_space<vmem>>, vector<1x8x8xf32>
    %10 = vector.shape_cast %9 : vector<1x8x8xf32> to vector<8x8xf32>
    %11 = vector.shape_cast %8 : vector<8x8xf32> to vector<1x8x8xf32>
    tpu.vector_store %arg5[%c0_10, %c0_11, %c0_12], %11 {strides = array<i32>} : memref<1x8x8xf32, #tpu.memory_space<vmem>>, vector<1x8x8xf32>,
    return
  }
  func.func @transform_0(%arg0: i32) -> (i32, i32, i32) {
    %c0_i32 = arith.constant 0 : i32
    %c0_i32_0 = arith.constant 0 : i32
    %c0_i32_1 = arith.constant 0 : i32
    return %arg0, %c0_i32, %c0_i32_0 : i32, i32, i32
  }
  func.func @transform_1(%arg0: i32) -> (i32, i32) {
    %c0_i32 = arith.constant 0 : i32
    %c0_i32_0 = arith.constant 0 : i32
    %c0_i32_1 = arith.constant 0 : i32
    return %c0_i32, %c0_i32_0 : i32, i32
  }
  func.func @transform_2(%arg0: i32) -> (i32, i32) {
    %c0_i32 = arith.constant 0 : i32
    %c0_i32_0 = arith.constant 0 : i32
    %c0_i32_1 = arith.constant 0 : i32
    return %c0_i32, %c0_i32_0 : i32, i32
  }
  func.func @transform_3(%arg0: i32) -> (i32, i32, i32) {
    %c0_i32 = arith.constant 0 : i32
    %c0_i32_0 = arith.constant 0 : i32
    %c0_i32_1 = arith.constant 0 : i32
    return %arg0, %c0_i32, %c0_i32_0 : i32, i32, i32
  }
  func.func @transform_4(%arg0: i32) -> (i32, i32, i32) {
    %c0_i32 = arith.constant 0 : i32
    %c0_i32_0 = arith.constant 0 : i32
    %c0_i32_1 = arith.constant 0 : i32
    return %arg0, %c0_i32, %c0_i32_0 : i32, i32, i32
  }
}

</mosaic_0001>

<llo_original>
// kernel: _lambda_.4
$region0: #{_lambda_.4}
  #allocation0 [shape = 'u32[]', space=smem, size = 0x4, offset = 0x4, fixed_abs, tag = 'smem constant byte address 0x4 - core index']
  #allocation1 [shape = 'u32[144,128]{1,0:T(1,128)}', space=vmem, size = 0x12000, scoped, tag = 'internal scratch']
  #allocation2 [shape = 'f32[1,128]{1,0:T(1,128)}', space=vmem, size = 0x200, scoped, tag = 'scratch operand']
  #allocation3 [shape = 'f32[1,128]{1,0:T(1,128)}', space=vmem, size = 0x200, scoped, tag = 'scratch operand']
  #allocation4 [shape = 'f32[1,128]{1,0:T(1,128)}', space=vmem, size = 0x200, scoped, tag = 'scratch operand']
  #allocation5 [shape = 'f32[1,128]{1,0:T(1,128)}', space=vmem, size = 0x200, scoped, tag = 'scratch operand']
  %s0 = inlined_call_operand.vmem [shape: f32[512,72], index: 0, kind: input, shape index: {}]
  %s1 = inlined_call_operand.vmem [shape: f32[72,128], index: 1, kind: input, shape index: {}]
  %s2 = inlined_call_operand.vmem [shape: f32[1,128], index: 2, kind: input, shape index: {}]
  %s3 = inlined_call_operand.vmem [shape: f32[1,128], index: 3, kind: input, shape index: {}]
  %s4 = inlined_call_operand.vmem [shape: f32[512,128], index: 4, kind: output, shape index: {}]
  %s5 = sld [smem:[#allocation0]]
  $region65: #{_lambda_.4} parent=0
    _
  %s7 = ssub.s32 1, %s5
  %s8 = scalar_select 0, %s7, %s5
  loop: start=0, step=1, limit=6
  $region2: #{_lambda_.4} parent=0 // loop_pre_header
    _
  $region3: #{_lambda_.4} parent=0 // loop_header
    %s10 = sphi 0, %s14
    %p11 = scmp.ge.s32.totalorder %s10, 6
    %s17 = sphi 0, %s36
    %s18 = sphi 0, %s32
    %s19 = sphi 0, %s28
    %s20 = sphi 0, %s17
    %s21 = sphi 0, %s18
    %s22 = sphi 0, %s19
    %s23 = sphi 0, %s20
    %s24 = sphi 0, %s21
    %s25 = sphi 0, %s22
    %s39 = sphi 0, %s41
    %s42 = sphi 0, %s39
    %s43 = sphi 0, %s42
    %s59 = sphi 0, %s43
    %s65 = sphi 0, %s67
    %s68 = sphi 0, %s65
    %s69 = sphi 0, %s68
    %s85 = sphi 0, %s69
    %s91 = sphi 0, %s93
    %s94 = sphi 0, %s91
    %s95 = sphi 0, %s94
    %s111 = sphi 0, %s95
    %s117 = sphi 0, %s119
    %s120 = sphi 0, %s117
    %s121 = sphi 0, %s120
    %s137 = sphi 0, %s121
    %s145 = sphi 0, %s147
    %s148 = sphi 0, %s145
    %s149 = sphi 0, %s148
    %s165 = sphi 0, %s149
  $region4: #{_lambda_.4} parent=0 // loop_header_branch
    %13 = sbr.rel (%p11) target = $region8
  $region5: #{_lambda_.4} parent=0 // loop_body
    %s15 = ssub.s32 %s10, 1
    %s16 = ssub.s32 %s10, 2
    %s26 = sadd.s32 1, %s19
    %p27 = scmp.ge.s32.totalorder %s26, 2
    %s28 = scalar_select %p27, 0, %s26
    %s29 = sadd.s32 1, %s18
    %s30 = scalar_select %p27, %s29, %s18
    %p31 = scmp.ge.s32.totalorder %s30, 2
    %s32 = scalar_select %p31, 0, %s30
    %s33 = sadd.s32 1, %s17
    %s34 = scalar_select %p31, %s33, %s17
    %p35 = scmp.ge.s32.totalorder %s34, 1
    %s36 = scalar_select %p35, 0, %s34
    %s37 = ssub.s32 %s19, %s28
    %p38 = scmp.eq.s32.totalorder %s37, 0
    %s40 = sadd.s32 %s39, 1
    %s41 = scalar_select %p38, %s39, %s40
    %p44 = pneg %p38
    %p45 = scmp.eq.s32.totalorder %s10, 3
    %p46 = por %p44, %p45
    %p47 = scmp.ne.s32.totalorder %s39, %s42
    %p48 = scmp.eq.s32.totalorder %s10, 0
    %p49 = por %p47, %p48
    %p50 = scmp.ne.s32.totalorder %s39, %s42
    %p51 = scmp.eq.s32.totalorder %s15, 3
    %p52 = por %p50, %p51
    %p53 = scmp.ne.s32.totalorder %s42, %s43
    %p54 = scmp.eq.s32.totalorder %s15, 0
    %p55 = por %p53, %p54
    %p56 = scmp.ne.s32.totalorder %s42, %s43
    %p57 = scmp.eq.s32.totalorder %s16, 3
    %p58 = por %p56, %p57
    %p60 = scmp.ne.s32.totalorder %s43, %s59
    %p61 = scmp.eq.s32.totalorder %s16, 0
    %p62 = por %p60, %p61
    %s63 = ssub.s32 %s17, %s36
    %p64 = scmp.eq.s32.totalorder %s63, 0
    %s66 = sadd.s32 %s65, 1
    %s67 = scalar_select %p64, %s65, %s66
    %p70 = pneg %p64
    %p71 = scmp.eq.s32.totalorder %s10, 3
    %p72 = por %p70, %p71
    %p73 = scmp.ne.s32.totalorder %s65, %s68
    %p74 = scmp.eq.s32.totalorder %s10, 0
    %p75 = por %p73, %p74
    %p76 = scmp.ne.s32.totalorder %s65, %s68
    %p77 = scmp.eq.s32.totalorder %s15, 3
    %p78 = por %p76, %p77
    %p79 = scmp.ne.s32.totalorder %s68, %s69
    %p80 = scmp.eq.s32.totalorder %s15, 0
    %p81 = por %p79, %p80
    %p82 = scmp.ne.s32.totalorder %s68, %s69
    %p83 = scmp.eq.s32.totalorder %s16, 3
    %p84 = por %p82, %p83
    %p86 = scmp.ne.s32.totalorder %s69, %s85
    %p87 = scmp.eq.s32.totalorder %s16, 0
    %p88 = por %p86, %p87
    %s89 = ssub.s32 %s17, %s36
    %p90 = scmp.eq.s32.totalorder %s89, 0
    %s92 = sadd.s32 %s91, 1
    %s93 = scalar_select %p90, %s91, %s92
    %p96 = pneg %p90
    %p97 = scmp.eq.s32.totalorder %s10, 3
    %p98 = por %p96, %p97
    %p99 = scmp.ne.s32.totalorder %s91, %s94
    %p100 = scmp.eq.s32.totalorder %s10, 0
    %p101 = por %p99, %p100
    %p102 = scmp.ne.s32.totalorder %s91, %s94
    %p103 = scmp.eq.s32.totalorder %s15, 3
    %p104 = por %p102, %p103
    %p105 = scmp.ne.s32.totalorder %s94, %s95
    %p106 = scmp.eq.s32.totalorder %s15, 0
    %p107 = por %p105, %p106
    %p108 = scmp.ne.s32.totalorder %s94, %s95
    %p109 = scmp.eq.s32.totalorder %s16, 3
    %p110 = por %p108, %p109
    %p112 = scmp.ne.s32.totalorder %s95, %s111
    %p113 = scmp.eq.s32.totalorder %s16, 0
    %p114 = por %p112, %p113
    %s115 = ssub.s32 %s17, %s36
    %p116 = scmp.eq.s32.totalorder %s115, 0
    %s118 = sadd.s32 %s117, 1
    %s119 = scalar_select %p116, %s117, %s118
    %p122 = pneg %p116
    %p123 = scmp.eq.s32.totalorder %s10, 3
    %p124 = por %p122, %p123
    %p125 = scmp.ne.s32.totalorder %s117, %s120
    %p126 = scmp.eq.s32.totalorder %s10, 0
    %p127 = por %p125, %p126
    %p128 = scmp.ne.s32.totalorder %s117, %s120
    %p129 = scmp.eq.s32.totalorder %s15, 3
    %p130 = por %p128, %p129
    %p131 = scmp.ne.s32.totalorder %s120, %s121
    %p132 = scmp.eq.s32.totalorder %s15, 0
    %p133 = por %p131, %p132
    %p134 = scmp.ne.s32.totalorder %s120, %s121
    %p135 = scmp.eq.s32.totalorder %s16, 3
    %p136 = por %p134, %p135
    %p138 = scmp.ne.s32.totalorder %s121, %s137
    %p139 = scmp.eq.s32.totalorder %s16, 0
    %p140 = por %p138, %p139
    %s141 = ssub.s32 %s19, %s28
    %s142 = ssub.s32 %s17, %s36
    %s143 = sor.u32 %s141, %s142
    %p144 = scmp.eq.s32.totalorder %s143, 0
    %s146 = sadd.s32 %s145, 1
    %s147 = scalar_select %p144, %s145, %s146
    %p150 = pneg %p144
    %p151 = scmp.eq.s32.totalorder %s10, 3
    %p152 = por %p150, %p151
    %p153 = scmp.ne.s32.totalorder %s145, %s148
    %p154 = scmp.eq.s32.totalorder %s10, 0
    %p155 = por %p153, %p154
    %p156 = scmp.ne.s32.totalorder %s145, %s148
    %p157 = scmp.eq.s32.totalorder %s15, 3
    %p158 = por %p156, %p157
    %p159 = scmp.ne.s32.totalorder %s148, %s149
    %p160 = scmp.eq.s32.totalorder %s15, 0
    %p161 = por %p159, %p160
    %p162 = scmp.ne.s32.totalorder %s148, %s149
    %p163 = scmp.eq.s32.totalorder %s16, 3
    %p164 = por %p162, %p163
    %p166 = scmp.ne.s32.totalorder %s149, %s165
    %p167 = scmp.eq.s32.totalorder %s16, 0
    %p168 = por %p166, %p167
    %p169 = scmp.le.s32.totalorder 1, %s10
    %p170 = scmp.lt.s32.totalorder %s10, 5
    %p171 = pnand %p169, %p170
    %p172 = pneg %p171
    // Predicated region
    $region9: #{_lambda_.4} parent=5 // pred_check
      _
    $region10: #{_lambda_.4} parent=5 // pred_check_branch
      %174 = sbr.rel (%p171) target = $region12
    $region11: #{_lambda_.4} parent=5 // pred_region
      %s175 = ssub.s32 %s10, 1
      // Predicated region
      $region13: #{_lambda_.4} parent=11 // pred_check
        %p176 = pneg %p81
      $region14: #{_lambda_.4} parent=11 // pred_check_branch
        %178 = sbr.rel (%p176) target = $region16
      $region15: #{_lambda_.4} parent=11 // pred_region
        %p179 = scmp.lt.s32.totalorder %s20, 0
        %s180 = scalar_select %p179, %s20, 0
        %s181 = smul.addr %s180, 8
        %s182 = scalar_lea.vmem %s1, %s181
      $region16: #{_lambda_.4} parent=11 // pred_fallthru
        _
      // Predicated region
      $region17: #{_lambda_.4} parent=11 // pred_check
        %p183 = pneg %p107
      $region18: #{_lambda_.4} parent=11 // pred_check_branch
        %185 = sbr.rel (%p183) target = $region20
      $region19: #{_lambda_.4} parent=11 // pred_region
        %p186 = scmp.lt.s32.totalorder %s20, 0
        %s187 = scalar_select %p186, %s20, 0
        %s188 = scalar_lea.vmem %s2, %s187
      $region20: #{_lambda_.4} parent=11 // pred_fallthru
        _
      // Predicated region
      $region21: #{_lambda_.4} parent=11 // pred_check
        %p189 = pneg %p133
      $region22: #{_lambda_.4} parent=11 // pred_check_branch
        %191 = sbr.rel (%p189) target = $region24
      $region23: #{_lambda_.4} parent=11 // pred_region
        %p192 = scmp.lt.s32.totalorder %s20, 0
        %s193 = scalar_select %p192, %s20, 0
        %s194 = scalar_lea.vmem %s3, %s193
      $region24: #{_lambda_.4} parent=11 // pred_fallthru
        _
    $region12: #{_lambda_.4} parent=5 // pred_fallthru
      _
    %p195 = scmp.lt.s32.totalorder %s10, 4
    // Predicated region
    $region25: #{_lambda_.4} parent=5 // pred_check
      %p196 = pneg %p195
    $region26: #{_lambda_.4} parent=5 // pred_check_branch
      %198 = sbr.rel (%p196) target = $region28
    $region27: #{_lambda_.4} parent=5 // pred_region
      // Predicated region
      $region29: #{_lambda_.4} parent=27 // pred_check
        %p199 = pneg %p49
      $region30: #{_lambda_.4} parent=27 // pred_check_branch
        %201 = sbr.rel (%p199) target = $region32
      $region31: #{_lambda_.4} parent=27 // pred_region
        %s202 = smul.u32 32, %s19
        %p203 = scmp.lt.s32.totalorder %s202, 63
        %s204 = scalar_select %p203, %s202, 63
        %s205 = smul.addr %s204, 8
        %s206 = scalar_lea.vmem %s0, %s205
        %s207 = smul.u32 32, %s19
      $region32: #{_lambda_.4} parent=27 // pred_fallthru
        _
    $region28: #{_lambda_.4} parent=5 // pred_fallthru
      _
    %p208 = scmp.le.s32.totalorder 1, %s10
    %p209 = scmp.lt.s32.totalorder %s10, 5
    %p210 = pnand %p208, %p209
    %p211 = pneg %p210
    // Predicated region
    $region33: #{_lambda_.4} parent=5 // pred_check
      _
    $region34: #{_lambda_.4} parent=5 // pred_check_branch
      %213 = sbr.rel (%p210) target = $region36
    $region35: #{_lambda_.4} parent=5 // pred_region
      %s214 = ssub.s32 %s10, 1
      %s215 = smul.u32 32, %s22
      %p216 = scmp.lt.s32.totalorder %s215, 63
      %s217 = scalar_select %p216, %s215, 63
      %s218 = smul.addr %s217, 8
      %s219 = scalar_lea.vmem %s0, %s218
      %p220 = pneg %p55
      %p221 = pneg %p52
      %p222 = scmp.lt.s32.totalorder %s20, 0
      %s223 = scalar_select %p222, %s20, 0
      %s224 = smul.addr %s223, 8
      %s225 = scalar_lea.vmem %s1, %s224
      %p226 = pneg %p81
      %p227 = pneg %p78
      %p228 = scmp.lt.s32.totalorder %s20, 0
      %s229 = scalar_select %p228, %s20, 0
      %s230 = scalar_lea.vmem %s2, %s229
      %p231 = pneg %p107
      %p232 = pneg %p104
      %p233 = scmp.lt.s32.totalorder %s20, 0
      %s234 = scalar_select %p233, %s20, 0
      %s235 = scalar_lea.vmem %s3, %s234
      %p236 = pneg %p133
      %p237 = pneg %p130
      %p238 = pneg %p161
      %p239 = pneg %p158
      %s240 = smul.u32 32, %s22
      %p241 = scmp.lt.s32.totalorder %s240, 63
      %s242 = scalar_select %p241, %s240, 63
      %p243 = scmp.lt.s32.totalorder %s20, 0
      %s244 = scalar_select %p243, %s20, 0
      %s245 = sadd.s32 %s244, %s242
      %s246 = smul.addr %s245, 8
      %s247 = scalar_lea.vmem %s4, %s246
      %s248 = smul.u32 32, %s22
      %p249 = scmp.lt.s32.totalorder %s248, 63
      %s250 = scalar_select %p249, %s248, 63
      %s251 = smul.addr %s250, 8
      %s252 = scalar_lea.vmem %s0, %s251
      %s253 = smul.u32 32, %s22
      %p254 = scmp.lt.s32.totalorder %s20, 0
      %s255 = scalar_select %p254, %s20, 0
      %s256 = smul.addr %s255, 8
      %s257 = scalar_lea.vmem %s1, %s256
      %p258 = scmp.lt.s32.totalorder %s20, 0
      %s259 = scalar_select %p258, %s20, 0
      %s260 = scalar_lea.vmem %s2, %s259
      %p261 = scmp.lt.s32.totalorder %s20, 0
      %s262 = scalar_select %p261, %s20, 0
      %s263 = scalar_lea.vmem %s3, %s262
      %s264 = smul.u32 32, %s22
      %p265 = scmp.lt.s32.totalorder %s264, 63
      %s266 = scalar_select %p265, %s264, 63
      %p267 = scmp.lt.s32.totalorder %s20, 0
      %s268 = scalar_select %p267, %s20, 0
      %s269 = sadd.s32 %s268, %s266
      %s270 = smul.addr %s269, 8
      %s271 = scalar_lea.vmem %s4, %s270
      %s272 = smul.u32 32, %s22
      %v273 = vld [vmem:[%s252] sm:$0xff]
      %v274 = vld [vmem:[%s252 + $0x8] sm:$0xff]
      %v275 = vld [vmem:[%s252 + $0x10] sm:$0xff]
      %v276 = vld [vmem:[%s252 + $0x18] sm:$0xff]
      %v277 = vld [vmem:[%s252 + $0x20] sm:$0xff]
      %v278 = vld [vmem:[%s252 + $0x28] sm:$0xff]
      %v279 = vld [vmem:[%s252 + $0x30] sm:$0xff]
      %v280 = vld [vmem:[%s252 + $0x38] sm:$0xff]
      %v281 = vld [vmem:[%s252 + $0x40] sm:$0xff]
      %v282 = vld [vmem:[%s252 + $0x48] sm:$0xff]
      %v283 = vld [vmem:[%s252 + $0x50] sm:$0xff]
      %v284 = vld [vmem:[%s252 + $0x58] sm:$0xff]
      %v285 = vld [vmem:[%s252 + $0x60] sm:$0xff]
      %v286 = vld [vmem:[%s252 + $0x68] sm:$0xff]
      %v287 = vld [vmem:[%s252 + $0x70] sm:$0xff]
      %v288 = vld [vmem:[%s252 + $0x78] sm:$0xff]
      %v289 = vld [vmem:[%s252 + $0x80] sm:$0xff]
      %v290 = vld [vmem:[%s252 + $0x88] sm:$0xff]
      %v291 = vld [vmem:[%s252 + $0x90] sm:$0xff]
      %v292 = vld [vmem:[%s252 + $0x98] sm:$0xff]
      %v293 = vld [vmem:[%s252 + $0xa0] sm:$0xff]
      %v294 = vld [vmem:[%s252 + $0xa8] sm:$0xff]
      %v295 = vld [vmem:[%s252 + $0xb0] sm:$0xff]
      %v296 = vld [vmem:[%s252 + $0xb8] sm:$0xff]
      %v297 = vld [vmem:[%s252 + $0xc0] sm:$0xff]
      %v298 = vld [vmem:[%s252 + $0xc8] sm:$0xff]
      %v299 = vld [vmem:[%s252 + $0xd0] sm:$0xff]
      %v300 = vld [vmem:[%s252 + $0xd8] sm:$0xff]
      %v301 = vld [vmem:[%s252 + $0xe0] sm:$0xff]
      %v302 = vld [vmem:[%s252 + $0xe8] sm:$0xff]
      %v303 = vld [vmem:[%s252 + $0xf0] sm:$0xff]
      %v304 = vld [vmem:[%s252 + $0xf8] sm:$0xff]
      %v305 = vld [vmem:[%s257] sm:$0xff]
      %v306 = vld [vmem:[%s257 + $0x8] sm:$0xff]
      %v307 = vld [vmem:[%s257 + $0x10] sm:$0xff]
      %v308 = vld [vmem:[%s257 + $0x18] sm:$0xff]
      %v309 = vld [vmem:[%s257 + $0x20] sm:$0xff]
      %v310 = vld [vmem:[%s257 + $0x28] sm:$0xff]
      %v311 = vld [vmem:[%s257 + $0x30] sm:$0xff]
      %v312 = vld [vmem:[%s257 + $0x38] sm:$0xff]
      %v313 = vld [vmem:[%s257 + $0x40] sm:$0xff]
      %vm314 = vcmask 588800
      %v316 = vsel %vm314, %v273, 0
      %v319 = vsel %vm314, %v274, 0
      %v322 = vsel %vm314, %v275, 0
      %v325 = vsel %vm314, %v276, 0
      %v328 = vsel %vm314, %v277, 0
      %v331 = vsel %vm314, %v278, 0
      %v334 = vsel %vm314, %v279, 0
      %v337 = vsel %vm314, %v280, 0
      %v340 = vsel %vm314, %v281, 0
      %v343 = vsel %vm314, %v282, 0
      %v346 = vsel %vm314, %v283, 0
      %v349 = vsel %vm314, %v284, 0
      %v352 = vsel %vm314, %v285, 0
      %v355 = vsel %vm314, %v286, 0
      %v358 = vsel %vm314, %v287, 0
      %v361 = vsel %vm314, %v288, 0
      %v364 = vsel %vm314, %v289, 0
      %v367 = vsel %vm314, %v290, 0
      %v370 = vsel %vm314, %v291, 0
      %v373 = vsel %vm314, %v292, 0
      %v376 = vsel %vm314, %v293, 0
      %v379 = vsel %vm314, %v294, 0
      %v382 = vsel %vm314, %v295, 0
      %v385 = vsel %vm314, %v296, 0
      %v388 = vsel %vm314, %v297, 0
      %v391 = vsel %vm314, %v298, 0
      %v394 = vsel %vm314, %v299, 0
      %v397 = vsel %vm314, %v300, 0
      %v400 = vsel %vm314, %v301, 0
      %v403 = vsel %vm314, %v302, 0
      %v406 = vsel %vm314, %v303, 0
      %v409 = vsel %vm314, %v304, 0
      %411 = vmatprep.subr.mxu0 0.0
      %412 = vmatpush1.msra.mxu0 0.0
      %413 = vmatprep.subr.mxu0 0.0
      %414 = vmatpush1.msra.mxu0 0.0
      %415 = vmatprep.subr.mxu0 0.0
      %416 = vmatpush1.msra.mxu0 0.0
      %417 = vmatprep.subr.mxu0 0.0
      %418 = vmatpush1.msra.mxu0 0.0
      %419 = vmatprep.subr.mxu0 0.0
      %420 = vmatpush1.msra.mxu0 0.0
      %421 = vmatprep.subr.mxu0 0.0
      %422 = vmatpush1.msra.mxu0 0.0
      %423 = vmatprep.subr.mxu0 0.0
      %424 = vmatpush1.msra.mxu0 0.0
      %425 = vmatprep.subr.mxu0 0.0
      %426 = vmatpush1.msra.mxu0 %v313
      %427 = vmatprep.subr.mxu0 0.0
      %428 = vmatpush1.msra.mxu0 %v312
      %429 = vmatprep.subr.mxu0 0.0
      %430 = vmatpush1.msra.mxu0 %v311
      %431 = vmatprep.subr.mxu0 0.0
      %432 = vmatpush1.msra.mxu0 %v310
      %433 = vmatprep.subr.mxu0 0.0
      %434 = vmatpush1.msra.mxu0 %v309
      %435 = vmatprep.subr.mxu0 0.0
      %436 = vmatpush1.msra.mxu0 %v308
      %437 = vmatprep.subr.mxu0 0.0
      %438 = vmatpush1.msra.mxu0 %v307
      %439 = vmatprep.subr.mxu0 0.0
      %440 = vmatpush1.msra.mxu0 %v306
      %441 = vmatprep.subr.mxu0 0.0
      %442 = vmatpush1.msra.mxu0 %v305
      %443 = vmatprep.subr.mxu0 0.0
      %444 = vmatpush2.msra.mxu0 0.0
      %445 = vmatprep.subr.mxu0 0.0
      %446 = vmatpush2.msra.mxu0 0.0
      %447 = vmatprep.subr.mxu0 0.0
      %448 = vmatpush2.msra.mxu0 0.0
      %449 = vmatprep.subr.mxu0 0.0
      %450 = vmatpush2.msra.mxu0 0.0
      %451 = vmatprep.subr.mxu0 0.0
      %452 = vmatpush2.msra.mxu0 0.0
      %453 = vmatprep.subr.mxu0 0.0
      %454 = vmatpush2.msra.mxu0 0.0
      %455 = vmatprep.subr.mxu0 0.0
      %456 = vmatpush2.msra.mxu0 0.0
      %457 = vmatprep.subr.mxu0 0.0
      %458 = vmatpush2.msra.mxu0 0.0
      %459 = vmatprep.subr.mxu0 0.0
      %460 = vmatpush2.msra.mxu0 0.0
      %461 = vmatprep.subr.mxu0 0.0
      %462 = vmatpush2.msra.mxu0 0.0
      %463 = vmatprep.subr.mxu0 0.0
      %464 = vmatpush2.msra.mxu0 0.0
      %465 = vmatprep.subr.mxu0 0.0
      %466 = vmatpush2.msra.mxu0 0.0
      %467 = vmatprep.subr.mxu0 0.0
      %468 = vmatpush2.msra.mxu0 0.0
      %469 = vmatprep.subr.mxu0 0.0
      %470 = vmatpush2.msra.mxu0 0.0
      %471 = vmatprep.subr.mxu0 0.0
      %472 = vmatpush2.msra.mxu0 0.0
      %473 = vmatprep.subr.mxu0 0.0
      %474 = vmatpush2.msra.mxu0 0.0
      %475 = vmatprep.mubr.f32.mxu0 0.0
      %476 = vmatmul.mubr.f32.gmra.mxu0 %v316
      %v477 = vpop.f32.mrf.mxu0
      %v478 = vadd.f32 0.0, %v477
      %v479 = vpop.f32.mrf.mxu0
      %480 = vmatprep.mubr.f32.mxu0 0.0
      %481 = vmatmul.mubr.f32.gmra.mxu0 %v319
      %v482 = vpop.f32.mrf.mxu0
      %v483 = vadd.f32 0.0, %v482
      %v484 = vpop.f32.mrf.mxu0
      %485 = vmatprep.mubr.f32.mxu0 0.0
      %486 = vmatmul.mubr.f32.gmra.mxu0 %v322
      %v487 = vpop.f32.mrf.mxu0
      %v488 = vadd.f32 0.0, %v487
      %v489 = vpop.f32.mrf.mxu0
      %490 = vmatprep.mubr.f32.mxu0 0.0
      %491 = vmatmul.mubr.f32.gmra.mxu0 %v325
      %v492 = vpop.f32.mrf.mxu0
      %v493 = vadd.f32 0.0, %v492
      %v494 = vpop.f32.mrf.mxu0
      %495 = vmatprep.mubr.f32.mxu0 0.0
      %496 = vmatmul.mubr.f32.gmra.mxu0 %v328
      %v497 = vpop.f32.mrf.mxu0
      %v498 = vadd.f32 0.0, %v497
      %v499 = vpop.f32.mrf.mxu0
      %500 = vmatprep.mubr.f32.mxu0 0.0
      %501 = vmatmul.mubr.f32.gmra.mxu0 %v331
      %v502 = vpop.f32.mrf.mxu0
      %v503 = vadd.f32 0.0, %v502
      %v504 = vpop.f32.mrf.mxu0
      %505 = vmatprep.mubr.f32.mxu0 0.0
      %506 = vmatmul.mubr.f32.gmra.mxu0 %v334
      %v507 = vpop.f32.mrf.mxu0
      %v508 = vadd.f32 0.0, %v507
      %v509 = vpop.f32.mrf.mxu0
      %510 = vmatprep.mubr.f32.mxu0 0.0
      %511 = vmatmul.mubr.f32.gmra.mxu0 %v337
      %v512 = vpop.f32.mrf.mxu0
      %v513 = vadd.f32 0.0, %v512
      %v514 = vpop.f32.mrf.mxu0
      %515 = vmatprep.mubr.f32.mxu0 0.0
      %516 = vmatmul.mubr.f32.gmra.mxu0 %v340
      %v517 = vpop.f32.mrf.mxu0
      %v518 = vadd.f32 0.0, %v517
      %v519 = vpop.f32.mrf.mxu0
      %520 = vmatprep.mubr.f32.mxu0 0.0
      %521 = vmatmul.mubr.f32.gmra.mxu0 %v343
      %v522 = vpop.f32.mrf.mxu0
      %v523 = vadd.f32 0.0, %v522
      %v524 = vpop.f32.mrf.mxu0
      %525 = vmatprep.mubr.f32.mxu0 0.0
      %526 = vmatmul.mubr.f32.gmra.mxu0 %v346
      %v527 = vpop.f32.mrf.mxu0
      %v528 = vadd.f32 0.0, %v527
      %v529 = vpop.f32.mrf.mxu0
      %530 = vmatprep.mubr.f32.mxu0 0.0
      %531 = vmatmul.mubr.f32.gmra.mxu0 %v349
      %v532 = vpop.f32.mrf.mxu0
      %v533 = vadd.f32 0.0, %v532
      %v534 = vpop.f32.mrf.mxu0
      %535 = vmatprep.mubr.f32.mxu0 0.0
      %536 = vmatmul.mubr.f32.gmra.mxu0 %v352
      %v537 = vpop.f32.mrf.mxu0
      %v538 = vadd.f32 0.0, %v537
      %v539 = vpop.f32.mrf.mxu0
      %540 = vmatprep.mubr.f32.mxu0 0.0
      %541 = vmatmul.mubr.f32.gmra.mxu0 %v355
      %v542 = vpop.f32.mrf.mxu0
      %v543 = vadd.f32 0.0, %v542
      %v544 = vpop.f32.mrf.mxu0
      %545 = vmatprep.mubr.f32.mxu0 0.0
      %546 = vmatmul.mubr.f32.gmra.mxu0 %v358
      %v547 = vpop.f32.mrf.mxu0
      %v548 = vadd.f32 0.0, %v547
      %v549 = vpop.f32.mrf.mxu0
      %550 = vmatprep.mubr.f32.mxu0 0.0
      %551 = vmatmul.mubr.f32.gmra.mxu0 %v361
      %v552 = vpop.f32.mrf.mxu0
      %v553 = vadd.f32 0.0, %v552
      %v554 = vpop.f32.mrf.mxu0
      %555 = vmatprep.mubr.f32.mxu0 0.0
      %556 = vmatmul.mubr.f32.gmra.mxu0 %v364
      %v557 = vpop.f32.mrf.mxu0
      %v558 = vadd.f32 0.0, %v557
      %v559 = vpop.f32.mrf.mxu0
      %560 = vmatprep.mubr.f32.mxu0 0.0
      %561 = vmatmul.mubr.f32.gmra.mxu0 %v367
      %v562 = vpop.f32.mrf.mxu0
      %v563 = vadd.f32 0.0, %v562
      %v564 = vpop.f32.mrf.mxu0
      %565 = vmatprep.mubr.f32.mxu0 0.0
      %566 = vmatmul.mubr.f32.gmra.mxu0 %v370
      %v567 = vpop.f32.mrf.mxu0
      %v568 = vadd.f32 0.0, %v567
      %v569 = vpop.f32.mrf.mxu0
      %570 = vmatprep.mubr.f32.mxu0 0.0
      %571 = vmatmul.mubr.f32.gmra.mxu0 %v373
      %v572 = vpop.f32.mrf.mxu0
      %v573 = vadd.f32 0.0, %v572
      %v574 = vpop.f32.mrf.mxu0
      %575 = vmatprep.mubr.f32.mxu0 0.0
      %576 = vmatmul.mubr.f32.gmra.mxu0 %v376
      %v577 = vpop.f32.mrf.mxu0
      %v578 = vadd.f32 0.0, %v577
      %v579 = vpop.f32.mrf.mxu0
      %580 = vmatprep.mubr.f32.mxu0 0.0
      %581 = vmatmul.mubr.f32.gmra.mxu0 %v379
      %v582 = vpop.f32.mrf.mxu0
      %v583 = vadd.f32 0.0, %v582
      %v584 = vpop.f32.mrf.mxu0
      %585 = vmatprep.mubr.f32.mxu0 0.0
      %586 = vmatmul.mubr.f32.gmra.mxu0 %v382
      %v587 = vpop.f32.mrf.mxu0
      %v588 = vadd.f32 0.0, %v587
      %v589 = vpop.f32.mrf.mxu0
      %590 = vmatprep.mubr.f32.mxu0 0.0
      %591 = vmatmul.mubr.f32.gmra.mxu0 %v385
      %v592 = vpop.f32.mrf.mxu0
      %v593 = vadd.f32 0.0, %v592
      %v594 = vpop.f32.mrf.mxu0
      %595 = vmatprep.mubr.f32.mxu0 0.0
      %596 = vmatmul.mubr.f32.gmra.mxu0 %v388
      %v597 = vpop.f32.mrf.mxu0
      %v598 = vadd.f32 0.0, %v597
      %v599 = vpop.f32.mrf.mxu0
      %600 = vmatprep.mubr.f32.mxu0 0.0
      %601 = vmatmul.mubr.f32.gmra.mxu0 %v391
      %v602 = vpop.f32.mrf.mxu0
      %v603 = vadd.f32 0.0, %v602
      %v604 = vpop.f32.mrf.mxu0
      %605 = vmatprep.mubr.f32.mxu0 0.0
      %606 = vmatmul.mubr.f32.gmra.mxu0 %v394
      %v607 = vpop.f32.mrf.mxu0
      %v608 = vadd.f32 0.0, %v607
      %v609 = vpop.f32.mrf.mxu0
      %610 = vmatprep.mubr.f32.mxu0 0.0
      %611 = vmatmul.mubr.f32.gmra.mxu0 %v397
      %v612 = vpop.f32.mrf.mxu0
      %v613 = vadd.f32 0.0, %v612
      %v614 = vpop.f32.mrf.mxu0
      %615 = vmatprep.mubr.f32.mxu0 0.0
      %616 = vmatmul.mubr.f32.gmra.mxu0 %v400
      %v617 = vpop.f32.mrf.mxu0
      %v618 = vadd.f32 0.0, %v617
      %v619 = vpop.f32.mrf.mxu0
      %620 = vmatprep.mubr.f32.mxu0 0.0
      %621 = vmatmul.mubr.f32.gmra.mxu0 %v403
      %v622 = vpop.f32.mrf.mxu0
      %v623 = vadd.f32 0.0, %v622
      %v624 = vpop.f32.mrf.mxu0
      %625 = vmatprep.mubr.f32.mxu0 0.0
      %626 = vmatmul.mubr.f32.gmra.mxu0 %v406
      %v627 = vpop.f32.mrf.mxu0
      %v628 = vadd.f32 0.0, %v627
      %v629 = vpop.f32.mrf.mxu0
      %630 = vmatprep.mubr.f32.mxu0 0.0
      %631 = vmatmul.mubr.f32.gmra.mxu0 %v409
      %v632 = vpop.f32.mrf.mxu0
      %v633 = vadd.f32 0.0, %v632
      %v634 = vpop.f32.mrf.mxu0
      %635 = vdwg.mxu0
      %p636 = scmp.eq.s32.totalorder %s21, 0
      // Predicated region
      $region37: #{_lambda_.4} parent=35 // pred_check
        %p637 = pneg %p636
      $region38: #{_lambda_.4} parent=35 // pred_check_branch
        %639 = sbr.rel (%p637) target = $region40
      $region39: #{_lambda_.4} parent=35 // pred_region
        %p640 = scmp.eq.s32.totalorder %s22, 0
        // Predicated region
        $region41: #{_lambda_.4} parent=39 // pred_check
          %p641 = pneg %p640
        $region42: #{_lambda_.4} parent=39 // pred_check_branch
          %643 = sbr.rel (%p641) target = $region44
        $region43: #{_lambda_.4} parent=39 // pred_region
          %644 = vst [vmem:[#allocation2] sm:$0x1] 0.0
          %645 = vst [vmem:[#allocation3] sm:$0x1] 0.0
        $region44: #{_lambda_.4} parent=39 // pred_fallthru
          _
        %v646 = vld [vmem:[#allocation2] sm:$0x1]
        %v647 = vadd.f32 %v478, %v483
        %v648 = vadd.f32 %v647, %v488
        %v649 = vadd.f32 %v648, %v493
        %v650 = vadd.f32 %v649, %v498
        %v651 = vadd.f32 %v650, %v503
        %v652 = vadd.f32 %v651, %v508
        %v653 = vadd.f32 %v652, %v513
        %v654 = vadd.f32 %v653, %v518
        %v655 = vadd.f32 %v654, %v523
        %v656 = vadd.f32 %v655, %v528
        %v657 = vadd.f32 %v656, %v533
        %v658 = vadd.f32 %v657, %v538
        %v659 = vadd.f32 %v658, %v543
        %v660 = vadd.f32 %v659, %v548
        %v661 = vadd.f32 %v660, %v553
        %v662 = vadd.f32 %v661, %v558
        %v663 = vadd.f32 %v662, %v563
        %v664 = vadd.f32 %v663, %v568
        %v665 = vadd.f32 %v664, %v573
        %v666 = vadd.f32 %v665, %v578
        %v667 = vadd.f32 %v666, %v583
        %v668 = vadd.f32 %v667, %v588
        %v669 = vadd.f32 %v668, %v593
        %v670 = vadd.f32 %v669, %v598
        %v671 = vadd.f32 %v670, %v603
        %v672 = vadd.f32 %v671, %v608
        %v673 = vadd.f32 %v672, %v613
        %v674 = vadd.f32 %v673, %v618
        %v675 = vadd.f32 %v674, %v623
        %v676 = vadd.f32 %v675, %v628
        %v677 = vadd.f32 %v676, %v633
        %v678 = vrot.slane %v677, 4
        %v679 = vadd.f32 %v677, %v678
        %v680 = vrot.slane %v679, 2
        %v681 = vadd.f32 %v679, %v680
        %v682 = vrot.slane %v681, 1
        %v683 = vadd.f32 %v681, %v682
        %v684 = vadd.f32 %v646, %v683
        %685 = vst [vmem:[#allocation2] sm:$0x1] %v684
        %v686 = vld [vmem:[#allocation3] sm:$0x1]
        %v687 = vmul.f32 %v478, %v478
        %v688 = vmul.f32 %v483, %v483
        %v689 = vmul.f32 %v488, %v488
        %v690 = vmul.f32 %v493, %v493
        %v691 = vmul.f32 %v498, %v498
        %v692 = vmul.f32 %v503, %v503
        %v693 = vmul.f32 %v508, %v508
        %v694 = vmul.f32 %v513, %v513
        %v695 = vmul.f32 %v518, %v518
        %v696 = vmul.f32 %v523, %v523
        %v697 = vmul.f32 %v528, %v528
        %v698 = vmul.f32 %v533, %v533
        %v699 = vmul.f32 %v538, %v538
        %v700 = vmul.f32 %v543, %v543
        %v701 = vmul.f32 %v548, %v548
        %v702 = vmul.f32 %v553, %v553
        %v703 = vmul.f32 %v558, %v558
        %v704 = vmul.f32 %v563, %v563
        %v705 = vmul.f32 %v568, %v568
        %v706 = vmul.f32 %v573, %v573
        %v707 = vmul.f32 %v578, %v578
        %v708 = vmul.f32 %v583, %v583
        %v709 = vmul.f32 %v588, %v588
        %v710 = vmul.f32 %v593, %v593
        %v711 = vmul.f32 %v598, %v598
        %v712 = vmul.f32 %v603, %v603
        %v713 = vmul.f32 %v608, %v608
        %v714 = vmul.f32 %v613, %v613
        %v715 = vmul.f32 %v618, %v618
        %v716 = vmul.f32 %v623, %v623
        %v717 = vmul.f32 %v628, %v628
        %v718 = vmul.f32 %v633, %v633
        %v719 = vadd.f32 %v687, %v688
        %v720 = vadd.f32 %v719, %v689
        %v721 = vadd.f32 %v720, %v690
        %v722 = vadd.f32 %v721, %v691
        %v723 = vadd.f32 %v722, %v692
        %v724 = vadd.f32 %v723, %v693
        %v725 = vadd.f32 %v724, %v694
        %v726 = vadd.f32 %v725, %v695
        %v727 = vadd.f32 %v726, %v696
        %v728 = vadd.f32 %v727, %v697
        %v729 = vadd.f32 %v728, %v698
        %v730 = vadd.f32 %v729, %v699
        %v731 = vadd.f32 %v730, %v700
        %v732 = vadd.f32 %v731, %v701
        %v733 = vadd.f32 %v732, %v702
        %v734 = vadd.f32 %v733, %v703
        %v735 = vadd.f32 %v734, %v704
        %v736 = vadd.f32 %v735, %v705
        %v737 = vadd.f32 %v736, %v706
        %v738 = vadd.f32 %v737, %v707
        %v739 = vadd.f32 %v738, %v708
        %v740 = vadd.f32 %v739, %v709
        %v741 = vadd.f32 %v740, %v710
        %v742 = vadd.f32 %v741, %v711
        %v743 = vadd.f32 %v742, %v712
        %v744 = vadd.f32 %v743, %v713
        %v745 = vadd.f32 %v744, %v714
        %v746 = vadd.f32 %v745, %v715
        %v747 = vadd.f32 %v746, %v716
        %v748 = vadd.f32 %v747, %v717
        %v749 = vadd.f32 %v748, %v718
        %v750 = vrot.slane %v749, 4
        %v751 = vadd.f32 %v749, %v750
        %v752 = vrot.slane %v751, 2
        %v753 = vadd.f32 %v751, %v752
        %v754 = vrot.slane %v753, 1
        %v755 = vadd.f32 %v753, %v754
        %v756 = vadd.f32 %v686, %v755
        %757 = vst [vmem:[#allocation3] sm:$0x1] %v756
        %758 = vst [vmem:[%s271] sm:$0xff] %v478
        %759 = vst [vmem:[%s271 + $0x8] sm:$0xff] %v483
        %760 = vst [vmem:[%s271 + $0x10] sm:$0xff] %v488
        %761 = vst [vmem:[%s271 + $0x18] sm:$0xff] %v493
        %762 = vst [vmem:[%s271 + $0x20] sm:$0xff] %v498
        %763 = vst [vmem:[%s271 + $0x28] sm:$0xff] %v503
        %764 = vst [vmem:[%s271 + $0x30] sm:$0xff] %v508
        %765 = vst [vmem:[%s271 + $0x38] sm:$0xff] %v513
        %766 = vst [vmem:[%s271 + $0x40] sm:$0xff] %v518
        %767 = vst [vmem:[%s271 + $0x48] sm:$0xff] %v523
        %768 = vst [vmem:[%s271 + $0x50] sm:$0xff] %v528
        %769 = vst [vmem:[%s271 + $0x58] sm:$0xff] %v533
        %770 = vst [vmem:[%s271 + $0x60] sm:$0xff] %v538
        %771 = vst [vmem:[%s271 + $0x68] sm:$0xff] %v543
        %772 = vst [vmem:[%s271 + $0x70] sm:$0xff] %v548
        %773 = vst [vmem:[%s271 + $0x78] sm:$0xff] %v553
        %774 = vst [vmem:[%s271 + $0x80] sm:$0xff] %v558
        %775 = vst [vmem:[%s271 + $0x88] sm:$0xff] %v563
        %776 = vst [vmem:[%s271 + $0x90] sm:$0xff] %v568
        %777 = vst [vmem:[%s271 + $0x98] sm:$0xff] %v573
        %778 = vst [vmem:[%s271 + $0xa0] sm:$0xff] %v578
        %779 = vst [vmem:[%s271 + $0xa8] sm:$0xff] %v583
        %780 = vst [vmem:[%s271 + $0xb0] sm:$0xff] %v588
        %781 = vst [vmem:[%s271 + $0xb8] sm:$0xff] %v593
        %782 = vst [vmem:[%s271 + $0xc0] sm:$0xff] %v598
        %783 = vst [vmem:[%s271 + $0xc8] sm:$0xff] %v603
        %784 = vst [vmem:[%s271 + $0xd0] sm:$0xff] %v608
        %785 = vst [vmem:[%s271 + $0xd8] sm:$0xff] %v613
        %786 = vst [vmem:[%s271 + $0xe0] sm:$0xff] %v618
        %787 = vst [vmem:[%s271 + $0xe8] sm:$0xff] %v623
        %788 = vst [vmem:[%s271 + $0xf0] sm:$0xff] %v628
        %789 = vst [vmem:[%s271 + $0xf8] sm:$0xff] %v633
        %p790 = scmp.eq.s32.totalorder %s22, 1
        // Predicated region
        $region45: #{_lambda_.4} parent=39 // pred_check
          %p791 = pneg %p790
        $region46: #{_lambda_.4} parent=39 // pred_check_branch
          %793 = sbr.rel (%p791) target = $region48
        $region47: #{_lambda_.4} parent=39 // pred_region
          %v794 = vld [vmem:[#allocation2] sm:$0x1]
          %v795 = vmul.f32 %v794, 0.001953125
          %v796 = vld [vmem:[#allocation3] sm:$0x1]
          %v797 = vmul.f32 %v796, 0.001953125
          %v798 = vmul.f32 %v795, %v795
          %v799 = vsub.f32 %v797, %v798
          %v800 = vmax.f32 %v799, 0.0
          %v801 = vld [vmem:[%s260] sm:$0x1]
          %v802 = vadd.f32 %v800, 1e-05
          %v803 = vrsqrt.pop %v802
          %v804 = vmul.f32 %v801, %v803
          %805 = vst [vmem:[#allocation4] sm:$0x1] %v804
          %v806 = vld [vmem:[%s263] sm:$0x1]
          %v807 = vmul.f32 %v795, %v804
          %v808 = vsub.f32 %v806, %v807
          %809 = vst [vmem:[#allocation5] sm:$0x1] %v808
        $region48: #{_lambda_.4} parent=39 // pred_fallthru
          _
      $region40: #{_lambda_.4} parent=35 // pred_fallthru
        _
      %p810 = scmp.eq.s32.totalorder %s21, 1
      // Predicated region
      $region49: #{_lambda_.4} parent=35 // pred_check
        %p811 = pneg %p810
      $region50: #{_lambda_.4} parent=35 // pred_check_branch
        %813 = sbr.rel (%p811) target = $region52
      $region51: #{_lambda_.4} parent=35 // pred_region
        %v814 = vld [vmem:[#allocation4] sm:$0x1]
        %v816 = vlaneseq
        %v817 = vshrl.u32 %v816, 7
        %v818 = vsub.s32 0, %v817
        %v819 = vrot.slane %v814, %v818
        %v821 = vmul.f32 %v478, %v819
        %v822 = vmul.f32 %v483, %v819
        %v823 = vmul.f32 %v488, %v819
        %v824 = vmul.f32 %v493, %v819
        %v825 = vmul.f32 %v498, %v819
        %v826 = vmul.f32 %v503, %v819
        %v827 = vmul.f32 %v508, %v819
        %v828 = vmul.f32 %v513, %v819
        %v829 = vmul.f32 %v518, %v819
        %v830 = vmul.f32 %v523, %v819
        %v831 = vmul.f32 %v528, %v819
        %v832 = vmul.f32 %v533, %v819
        %v833 = vmul.f32 %v538, %v819
        %v834 = vmul.f32 %v543, %v819
        %v835 = vmul.f32 %v548, %v819
        %v836 = vmul.f32 %v553, %v819
        %v837 = vmul.f32 %v558, %v819
        %v838 = vmul.f32 %v563, %v819
        %v839 = vmul.f32 %v568, %v819
        %v840 = vmul.f32 %v573, %v819
        %v841 = vmul.f32 %v578, %v819
        %v842 = vmul.f32 %v583, %v819
        %v843 = vmul.f32 %v588, %v819
        %v844 = vmul.f32 %v593, %v819
        %v845 = vmul.f32 %v598, %v819
        %v846 = vmul.f32 %v603, %v819
        %v847 = vmul.f32 %v608, %v819
        %v848 = vmul.f32 %v613, %v819
        %v849 = vmul.f32 %v618, %v819
        %v850 = vmul.f32 %v623, %v819
        %v851 = vmul.f32 %v628, %v819
        %v852 = vmul.f32 %v633, %v819
        %v853 = vld [vmem:[#allocation5] sm:$0x1]
        %v855 = vlaneseq
        %v856 = vshrl.u32 %v855, 7
        %v857 = vsub.s32 0, %v856
        %v858 = vrot.slane %v853, %v857
        %v860 = vadd.f32 %v821, %v858
        %v861 = vadd.f32 %v822, %v858
        %v862 = vadd.f32 %v823, %v858
        %v863 = vadd.f32 %v824, %v858
        %v864 = vadd.f32 %v825, %v858
        %v865 = vadd.f32 %v826, %v858
        %v866 = vadd.f32 %v827, %v858
        %v867 = vadd.f32 %v828, %v858
        %v868 = vadd.f32 %v829, %v858
        %v869 = vadd.f32 %v830, %v858
        %v870 = vadd.f32 %v831, %v858
        %v871 = vadd.f32 %v832, %v858
        %v872 = vadd.f32 %v833, %v858
        %v873 = vadd.f32 %v834, %v858
        %v874 = vadd.f32 %v835, %v858
        %v875 = vadd.f32 %v836, %v858
        %v876 = vadd.f32 %v837, %v858
        %v877 = vadd.f32 %v838, %v858
        %v878 = vadd.f32 %v839, %v858
        %v879 = vadd.f32 %v840, %v858
        %v880 = vadd.f32 %v841, %v858
        %v881 = vadd.f32 %v842, %v858
        %v882 = vadd.f32 %v843, %v858
        %v883 = vadd.f32 %v844, %v858
        %v884 = vadd.f32 %v845, %v858
        %v885 = vadd.f32 %v846, %v858
        %v886 = vadd.f32 %v847, %v858
        %v887 = vadd.f32 %v848, %v858
        %v888 = vadd.f32 %v849, %v858
        %v889 = vadd.f32 %v850, %v858
        %v890 = vadd.f32 %v851, %v858
        %v891 = vadd.f32 %v852, %v858
        %v892 = vmax.f32 %v860, 0.0
        %v893 = vmax.f32 %v861, 0.0
        %v894 = vmax.f32 %v862, 0.0
        %v895 = vmax.f32 %v863, 0.0
        %v896 = vmax.f32 %v864, 0.0
        %v897 = vmax.f32 %v865, 0.0
        %v898 = vmax.f32 %v866, 0.0
        %v899 = vmax.f32 %v867, 0.0
        %v900 = vmax.f32 %v868, 0.0
        %v901 = vmax.f32 %v869, 0.0
        %v902 = vmax.f32 %v870, 0.0
        %v903 = vmax.f32 %v871, 0.0
        %v904 = vmax.f32 %v872, 0.0
        %v905 = vmax.f32 %v873, 0.0
        %v906 = vmax.f32 %v874, 0.0
        %v907 = vmax.f32 %v875, 0.0
        %v908 = vmax.f32 %v876, 0.0
        %v909 = vmax.f32 %v877, 0.0
        %v910 = vmax.f32 %v878, 0.0
        %v911 = vmax.f32 %v879, 0.0
        %v912 = vmax.f32 %v880, 0.0
        %v913 = vmax.f32 %v881, 0.0
        %v914 = vmax.f32 %v882, 0.0
        %v915 = vmax.f32 %v883, 0.0
        %v916 = vmax.f32 %v884, 0.0
        %v917 = vmax.f32 %v885, 0.0
        %v918 = vmax.f32 %v886, 0.0
        %v919 = vmax.f32 %v887, 0.0
        %v920 = vmax.f32 %v888, 0.0
        %v921 = vmax.f32 %v889, 0.0
        %v922 = vmax.f32 %v890, 0.0
        %v923 = vmax.f32 %v891, 0.0
        %924 = vst [vmem:[%s271] sm:$0xff] %v892
        %925 = vst [vmem:[%s271 + $0x8] sm:$0xff] %v893
        %926 = vst [vmem:[%s271 + $0x10] sm:$0xff] %v894
        %927 = vst [vmem:[%s271 + $0x18] sm:$0xff] %v895
        %928 = vst [vmem:[%s271 + $0x20] sm:$0xff] %v896
        %929 = vst [vmem:[%s271 + $0x28] sm:$0xff] %v897
        %930 = vst [vmem:[%s271 + $0x30] sm:$0xff] %v898
        %931 = vst [vmem:[%s271 + $0x38] sm:$0xff] %v899
        %932 = vst [vmem:[%s271 + $0x40] sm:$0xff] %v900
        %933 = vst [vmem:[%s271 + $0x48] sm:$0xff] %v901
        %934 = vst [vmem:[%s271 + $0x50] sm:$0xff] %v902
        %935 = vst [vmem:[%s271 + $0x58] sm:$0xff] %v903
        %936 = vst [vmem:[%s271 + $0x60] sm:$0xff] %v904
        %937 = vst [vmem:[%s271 + $0x68] sm:$0xff] %v905
        %938 = vst [vmem:[%s271 + $0x70] sm:$0xff] %v906
        %939 = vst [vmem:[%s271 + $0x78] sm:$0xff] %v907
        %940 = vst [vmem:[%s271 + $0x80] sm:$0xff] %v908
        %941 = vst [vmem:[%s271 + $0x88] sm:$0xff] %v909
        %942 = vst [vmem:[%s271 + $0x90] sm:$0xff] %v910
        %943 = vst [vmem:[%s271 + $0x98] sm:$0xff] %v911
        %944 = vst [vmem:[%s271 + $0xa0] sm:$0xff] %v912
        %945 = vst [vmem:[%s271 + $0xa8] sm:$0xff] %v913
        %946 = vst [vmem:[%s271 + $0xb0] sm:$0xff] %v914
        %947 = vst [vmem:[%s271 + $0xb8] sm:$0xff] %v915
        %948 = vst [vmem:[%s271 + $0xc0] sm:$0xff] %v916
        %949 = vst [vmem:[%s271 + $0xc8] sm:$0xff] %v917
        %950 = vst [vmem:[%s271 + $0xd0] sm:$0xff] %v918
        %951 = vst [vmem:[%s271 + $0xd8] sm:$0xff] %v919
        %952 = vst [vmem:[%s271 + $0xe0] sm:$0xff] %v920
        %953 = vst [vmem:[%s271 + $0xe8] sm:$0xff] %v921
        %954 = vst [vmem:[%s271 + $0xf0] sm:$0xff] %v922
        %955 = vst [vmem:[%s271 + $0xf8] sm:$0xff] %v923
      $region52: #{_lambda_.4} parent=35 // pred_fallthru
        _
      %s956 = smul.u32 32, %s22
      %p957 = scmp.lt.s32.totalorder %s956, 63
      %s958 = scalar_select %p957, %s956, 63
      %p959 = scmp.lt.s32.totalorder %s20, 0
      %s960 = scalar_select %p959, %s20, 0
      %s961 = sadd.s32 %s960, %s958
      %s962 = smul.addr %s961, 8
      %s963 = scalar_lea.vmem %s4, %s962
      // Predicated region
      $region53: #{_lambda_.4} parent=35 // pred_check
        %p964 = pneg %p158
      $region54: #{_lambda_.4} parent=35 // pred_check_branch
        %966 = sbr.rel (%p964) target = $region56
      $region55: #{_lambda_.4} parent=35 // pred_region
        %s967 = smul.u32 32, %s22
      $region56: #{_lambda_.4} parent=35 // pred_fallthru
        _
    $region36: #{_lambda_.4} parent=5 // pred_fallthru
      _
    %p968 = scmp.le.s32.totalorder 2, %s10
    // Predicated region
    $region57: #{_lambda_.4} parent=5 // pred_check
      %p969 = pneg %p968
    $region58: #{_lambda_.4} parent=5 // pred_check_branch
      %971 = sbr.rel (%p969) target = $region60
    $region59: #{_lambda_.4} parent=5 // pred_region
      %s972 = ssub.s32 %s10, 2
      // Predicated region
      $region61: #{_lambda_.4} parent=59 // pred_check
        %p973 = pneg %p164
      $region62: #{_lambda_.4} parent=59 // pred_check_branch
        %975 = sbr.rel (%p973) target = $region64
      $region63: #{_lambda_.4} parent=59 // pred_region
        %s976 = smul.u32 32, %s25
        %p977 = scmp.lt.s32.totalorder %s976, 63
        %s978 = scalar_select %p977, %s976, 63
        %p979 = scmp.lt.s32.totalorder %s23, 0
        %s980 = scalar_select %p979, %s23, 0
        %s981 = sadd.s32 %s980, %s978
        %s982 = smul.addr %s981, 8
        %s983 = scalar_lea.vmem %s4, %s982
      $region64: #{_lambda_.4} parent=59 // pred_fallthru
        _
    $region60: #{_lambda_.4} parent=5 // pred_fallthru
      _
  $region6: #{_lambda_.4} parent=0 // loop_footer
    %s14 = sadd.s32 1, %s10
  $region7: #{_lambda_.4} parent=0 // loop_footer_branch
    %9 = sbr.rel target = $region3
  $region8: #{_lambda_.4} parent=0 // loop_exit
    _

// kernel: _lambda_.6
$region0: #{_lambda_.6}
  #allocation0 [shape = 'u32[]', space=smem, size = 0x4, offset = 0x4, fixed_abs, tag = 'smem constant byte address 0x4 - core index']
  #allocation1 [shape = 'u32[144,128]{1,0:T(1,128)}', space=vmem, size = 0x12000, scoped, tag = 'internal scratch']
  #allocation2 [shape = 'f32[1,128]{1,0:T(1,128)}', space=vmem, size = 0x200, scoped, tag = 'scratch operand']
  #allocation3 [shape = 'f32[1,128]{1,0:T(1,128)}', space=vmem, size = 0x200, scoped, tag = 'scratch operand']
  #allocation4 [shape = 'f32[1,128]{1,0:T(1,128)}', space=vmem, size = 0x200, scoped, tag = 'scratch operand']
  #allocation5 [shape = 'f32[1,128]{1,0:T(1,128)}', space=vmem, size = 0x200, scoped, tag = 'scratch operand']
  %s0 = inlined_call_operand.vmem [shape: f32[128,72], index: 0, kind: input, shape index: {}]
  %s1 = inlined_call_operand.vmem [shape: f32[72,128], index: 1, kind: input, shape index: {}]
  %s2 = inlined_call_operand.vmem [shape: f32[1,128], index: 2, kind: input, shape index: {}]
  %s3 = inlined_call_operand.vmem [shape: f32[1,128], index: 3, kind: input, shape index: {}]
  %s4 = inlined_call_operand.vmem [shape: f32[128,128], index: 4, kind: output, shape index: {}]
  %s5 = sld [smem:[#allocation0]]
  $region65: #{_lambda_.6} parent=0
    _
  %s7 = ssub.s32 1, %s5
  %s8 = scalar_select 0, %s7, %s5
  loop: start=0, step=1, limit=4
  $region2: #{_lambda_.6} parent=0 // loop_pre_header
    _
  $region3: #{_lambda_.6} parent=0 // loop_header
    %s10 = sphi 0, %s14
    %p11 = scmp.ge.s32.totalorder %s10, 4
    %s17 = sphi 0, %s36
    %s18 = sphi 0, %s32
    %s19 = sphi 0, %s28
    %s20 = sphi 0, %s17
    %s21 = sphi 0, %s18
    %s22 = sphi 0, %s19
    %s23 = sphi 0, %s20
    %s24 = sphi 0, %s21
    %s25 = sphi 0, %s22
    %s39 = sphi 0, %s41
    %s42 = sphi 0, %s39
    %s43 = sphi 0, %s42
    %s59 = sphi 0, %s43
    %s65 = sphi 0, %s67
    %s68 = sphi 0, %s65
    %s69 = sphi 0, %s68
    %s85 = sphi 0, %s69
    %s91 = sphi 0, %s93
    %s94 = sphi 0, %s91
    %s95 = sphi 0, %s94
    %s111 = sphi 0, %s95
    %s117 = sphi 0, %s119
    %s120 = sphi 0, %s117
    %s121 = sphi 0, %s120
    %s137 = sphi 0, %s121
    %s145 = sphi 0, %s147
    %s148 = sphi 0, %s145
    %s149 = sphi 0, %s148
    %s165 = sphi 0, %s149
  $region4: #{_lambda_.6} parent=0 // loop_header_branch
    %13 = sbr.rel (%p11) target = $region8
  $region5: #{_lambda_.6} parent=0 // loop_body
    %s15 = ssub.s32 %s10, 1
    %s16 = ssub.s32 %s10, 2
    %s26 = sadd.s32 1, %s19
    %p27 = scmp.ge.s32.totalorder %s26, 1
    %s28 = scalar_select %p27, 0, %s26
    %s29 = sadd.s32 1, %s18
    %s30 = scalar_select %p27, %s29, %s18
    %p31 = scmp.ge.s32.totalorder %s30, 2
    %s32 = scalar_select %p31, 0, %s30
    %s33 = sadd.s32 1, %s17
    %s34 = scalar_select %p31, %s33, %s17
    %p35 = scmp.ge.s32.totalorder %s34, 1
    %s36 = scalar_select %p35, 0, %s34
    %s37 = ssub.s32 %s19, %s28
    %p38 = scmp.eq.s32.totalorder %s37, 0
    %s40 = sadd.s32 %s39, 1
    %s41 = scalar_select %p38, %s39, %s40
    %p44 = pneg %p38
    %p45 = scmp.eq.s32.totalorder %s10, 1
    %p46 = por %p44, %p45
    %p47 = scmp.ne.s32.totalorder %s39, %s42
    %p48 = scmp.eq.s32.totalorder %s10, 0
    %p49 = por %p47, %p48
    %p50 = scmp.ne.s32.totalorder %s39, %s42
    %p51 = scmp.eq.s32.totalorder %s15, 1
    %p52 = por %p50, %p51
    %p53 = scmp.ne.s32.totalorder %s42, %s43
    %p54 = scmp.eq.s32.totalorder %s15, 0
    %p55 = por %p53, %p54
    %p56 = scmp.ne.s32.totalorder %s42, %s43
    %p57 = scmp.eq.s32.totalorder %s16, 1
    %p58 = por %p56, %p57
    %p60 = scmp.ne.s32.totalorder %s43, %s59
    %p61 = scmp.eq.s32.totalorder %s16, 0
    %p62 = por %p60, %p61
    %s63 = ssub.s32 %s17, %s36
    %p64 = scmp.eq.s32.totalorder %s63, 0
    %s66 = sadd.s32 %s65, 1
    %s67 = scalar_select %p64, %s65, %s66
    %p70 = pneg %p64
    %p71 = scmp.eq.s32.totalorder %s10, 1
    %p72 = por %p70, %p71
    %p73 = scmp.ne.s32.totalorder %s65, %s68
    %p74 = scmp.eq.s32.totalorder %s10, 0
    %p75 = por %p73, %p74
    %p76 = scmp.ne.s32.totalorder %s65, %s68
    %p77 = scmp.eq.s32.totalorder %s15, 1
    %p78 = por %p76, %p77
    %p79 = scmp.ne.s32.totalorder %s68, %s69
    %p80 = scmp.eq.s32.totalorder %s15, 0
    %p81 = por %p79, %p80
    %p82 = scmp.ne.s32.totalorder %s68, %s69
    %p83 = scmp.eq.s32.totalorder %s16, 1
    %p84 = por %p82, %p83
    %p86 = scmp.ne.s32.totalorder %s69, %s85
    %p87 = scmp.eq.s32.totalorder %s16, 0
    %p88 = por %p86, %p87
    %s89 = ssub.s32 %s17, %s36
    %p90 = scmp.eq.s32.totalorder %s89, 0
    %s92 = sadd.s32 %s91, 1
    %s93 = scalar_select %p90, %s91, %s92
    %p96 = pneg %p90
    %p97 = scmp.eq.s32.totalorder %s10, 1
    %p98 = por %p96, %p97
    %p99 = scmp.ne.s32.totalorder %s91, %s94
    %p100 = scmp.eq.s32.totalorder %s10, 0
    %p101 = por %p99, %p100
    %p102 = scmp.ne.s32.totalorder %s91, %s94
    %p103 = scmp.eq.s32.totalorder %s15, 1
    %p104 = por %p102, %p103
    %p105 = scmp.ne.s32.totalorder %s94, %s95
    %p106 = scmp.eq.s32.totalorder %s15, 0
    %p107 = por %p105, %p106
    %p108 = scmp.ne.s32.totalorder %s94, %s95
    %p109 = scmp.eq.s32.totalorder %s16, 1
    %p110 = por %p108, %p109
    %p112 = scmp.ne.s32.totalorder %s95, %s111
    %p113 = scmp.eq.s32.totalorder %s16, 0
    %p114 = por %p112, %p113
    %s115 = ssub.s32 %s17, %s36
    %p116 = scmp.eq.s32.totalorder %s115, 0
    %s118 = sadd.s32 %s117, 1
    %s119 = scalar_select %p116, %s117, %s118
    %p122 = pneg %p116
    %p123 = scmp.eq.s32.totalorder %s10, 1
    %p124 = por %p122, %p123
    %p125 = scmp.ne.s32.totalorder %s117, %s120
    %p126 = scmp.eq.s32.totalorder %s10, 0
    %p127 = por %p125, %p126
    %p128 = scmp.ne.s32.totalorder %s117, %s120
    %p129 = scmp.eq.s32.totalorder %s15, 1
    %p130 = por %p128, %p129
    %p131 = scmp.ne.s32.totalorder %s120, %s121
    %p132 = scmp.eq.s32.totalorder %s15, 0
    %p133 = por %p131, %p132
    %p134 = scmp.ne.s32.totalorder %s120, %s121
    %p135 = scmp.eq.s32.totalorder %s16, 1
    %p136 = por %p134, %p135
    %p138 = scmp.ne.s32.totalorder %s121, %s137
    %p139 = scmp.eq.s32.totalorder %s16, 0
    %p140 = por %p138, %p139
    %s141 = ssub.s32 %s19, %s28
    %s142 = ssub.s32 %s17, %s36
    %s143 = sor.u32 %s141, %s142
    %p144 = scmp.eq.s32.totalorder %s143, 0
    %s146 = sadd.s32 %s145, 1
    %s147 = scalar_select %p144, %s145, %s146
    %p150 = pneg %p144
    %p151 = scmp.eq.s32.totalorder %s10, 1
    %p152 = por %p150, %p151
    %p153 = scmp.ne.s32.totalorder %s145, %s148
    %p154 = scmp.eq.s32.totalorder %s10, 0
    %p155 = por %p153, %p154
    %p156 = scmp.ne.s32.totalorder %s145, %s148
    %p157 = scmp.eq.s32.totalorder %s15, 1
    %p158 = por %p156, %p157
    %p159 = scmp.ne.s32.totalorder %s148, %s149
    %p160 = scmp.eq.s32.totalorder %s15, 0
    %p161 = por %p159, %p160
    %p162 = scmp.ne.s32.totalorder %s148, %s149
    %p163 = scmp.eq.s32.totalorder %s16, 1
    %p164 = por %p162, %p163
    %p166 = scmp.ne.s32.totalorder %s149, %s165
    %p167 = scmp.eq.s32.totalorder %s16, 0
    %p168 = por %p166, %p167
    %p169 = scmp.le.s32.totalorder 1, %s10
    %p170 = scmp.lt.s32.totalorder %s10, 3
    %p171 = pnand %p169, %p170
    %p172 = pneg %p171
    // Predicated region
    $region9: #{_lambda_.6} parent=5 // pred_check
      _
    $region10: #{_lambda_.6} parent=5 // pred_check_branch
      %174 = sbr.rel (%p171) target = $region12
    $region11: #{_lambda_.6} parent=5 // pred_region
      %s175 = ssub.s32 %s10, 1
      // Predicated region
      $region13: #{_lambda_.6} parent=11 // pred_check
        %p176 = pneg %p55
      $region14: #{_lambda_.6} parent=11 // pred_check_branch
        %178 = sbr.rel (%p176) target = $region16
      $region15: #{_lambda_.6} parent=11 // pred_region
        %s179 = smul.u32 16, %s22
        %p180 = scmp.lt.s32.totalorder %s179, 15
        %s181 = scalar_select %p180, %s179, 15
        %s182 = smul.addr %s181, 8
        %s183 = scalar_lea.vmem %s0, %s182
        %s184 = smul.u32 16, %s22
      $region16: #{_lambda_.6} parent=11 // pred_fallthru
        _
      // Predicated region
      $region17: #{_lambda_.6} parent=11 // pred_check
        %p185 = pneg %p81
      $region18: #{_lambda_.6} parent=11 // pred_check_branch
        %187 = sbr.rel (%p185) target = $region20
      $region19: #{_lambda_.6} parent=11 // pred_region
        %p188 = scmp.lt.s32.totalorder %s20, 0
        %s189 = scalar_select %p188, %s20, 0
        %s190 = smul.addr %s189, 8
        %s191 = scalar_lea.vmem %s1, %s190
      $region20: #{_lambda_.6} parent=11 // pred_fallthru
        _
      // Predicated region
      $region21: #{_lambda_.6} parent=11 // pred_check
        %p192 = pneg %p107
      $region22: #{_lambda_.6} parent=11 // pred_check_branch
        %194 = sbr.rel (%p192) target = $region24
      $region23: #{_lambda_.6} parent=11 // pred_region
        %p195 = scmp.lt.s32.totalorder %s20, 0
        %s196 = scalar_select %p195, %s20, 0
        %s197 = scalar_lea.vmem %s2, %s196
      $region24: #{_lambda_.6} parent=11 // pred_fallthru
        _
      // Predicated region
      $region25: #{_lambda_.6} parent=11 // pred_check
        %p198 = pneg %p133
      $region26: #{_lambda_.6} parent=11 // pred_check_branch
        %200 = sbr.rel (%p198) target = $region28
      $region27: #{_lambda_.6} parent=11 // pred_region
        %p201 = scmp.lt.s32.totalorder %s20, 0
        %s202 = scalar_select %p201, %s20, 0
        %s203 = scalar_lea.vmem %s3, %s202
      $region28: #{_lambda_.6} parent=11 // pred_fallthru
        _
    $region12: #{_lambda_.6} parent=5 // pred_fallthru
      _
    %p204 = scmp.lt.s32.totalorder %s10, 2
    // Predicated region
    $region29: #{_lambda_.6} parent=5 // pred_check
      %p205 = pneg %p204
    $region30: #{_lambda_.6} parent=5 // pred_check_branch
      %207 = sbr.rel (%p205) target = $region32
    $region31: #{_lambda_.6} parent=5 // pred_region
      _
    $region32: #{_lambda_.6} parent=5 // pred_fallthru
      _
    %p208 = scmp.le.s32.totalorder 1, %s10
    %p209 = scmp.lt.s32.totalorder %s10, 3
    %p210 = pnand %p208, %p209
    %p211 = pneg %p210
    // Predicated region
    $region33: #{_lambda_.6} parent=5 // pred_check
      _
    $region34: #{_lambda_.6} parent=5 // pred_check_branch
      %213 = sbr.rel (%p210) target = $region36
    $region35: #{_lambda_.6} parent=5 // pred_region
      %s214 = ssub.s32 %s10, 1
      %s215 = smul.u32 16, %s22
      %p216 = scmp.lt.s32.totalorder %s215, 15
      %s217 = scalar_select %p216, %s215, 15
      %s218 = smul.addr %s217, 8
      %s219 = scalar_lea.vmem %s0, %s218
      %p220 = pneg %p55
      %p221 = pneg %p52
      %p222 = scmp.lt.s32.totalorder %s20, 0
      %s223 = scalar_select %p222, %s20, 0
      %s224 = smul.addr %s223, 8
      %s225 = scalar_lea.vmem %s1, %s224
      %p226 = pneg %p81
      %p227 = pneg %p78
      %p228 = scmp.lt.s32.totalorder %s20, 0
      %s229 = scalar_select %p228, %s20, 0
      %s230 = scalar_lea.vmem %s2, %s229
      %p231 = pneg %p107
      %p232 = pneg %p104
      %p233 = scmp.lt.s32.totalorder %s20, 0
      %s234 = scalar_select %p233, %s20, 0
      %s235 = scalar_lea.vmem %s3, %s234
      %p236 = pneg %p133
      %p237 = pneg %p130
      %p238 = pneg %p161
      %p239 = pneg %p158
      %s240 = smul.u32 16, %s22
      %p241 = scmp.lt.s32.totalorder %s240, 15
      %s242 = scalar_select %p241, %s240, 15
      %p243 = scmp.lt.s32.totalorder %s20, 0
      %s244 = scalar_select %p243, %s20, 0
      %s245 = sadd.s32 %s244, %s242
      %s246 = smul.addr %s245, 8
      %s247 = scalar_lea.vmem %s4, %s246
      %s248 = smul.u32 16, %s22
      %p249 = scmp.lt.s32.totalorder %s248, 15
      %s250 = scalar_select %p249, %s248, 15
      %s251 = smul.addr %s250, 8
      %s252 = scalar_lea.vmem %s0, %s251
      %s253 = smul.u32 16, %s22
      %p254 = scmp.lt.s32.totalorder %s20, 0
      %s255 = scalar_select %p254, %s20, 0
      %s256 = smul.addr %s255, 8
      %s257 = scalar_lea.vmem %s1, %s256
      %p258 = scmp.lt.s32.totalorder %s20, 0
      %s259 = scalar_select %p258, %s20, 0
      %s260 = scalar_lea.vmem %s2, %s259
      %p261 = scmp.lt.s32.totalorder %s20, 0
      %s262 = scalar_select %p261, %s20, 0
      %s263 = scalar_lea.vmem %s3, %s262
      %s264 = smul.u32 16, %s22
      %p265 = scmp.lt.s32.totalorder %s264, 15
      %s266 = scalar_select %p265, %s264, 15
      %p267 = scmp.lt.s32.totalorder %s20, 0
      %s268 = scalar_select %p267, %s20, 0
      %s269 = sadd.s32 %s268, %s266
      %s270 = smul.addr %s269, 8
      %s271 = scalar_lea.vmem %s4, %s270
      %s272 = smul.u32 16, %s22
      %v273 = vld [vmem:[%s252] sm:$0xff]
      %v274 = vld [vmem:[%s252 + $0x8] sm:$0xff]
      %v275 = vld [vmem:[%s252 + $0x10] sm:$0xff]
      %v276 = vld [vmem:[%s252 + $0x18] sm:$0xff]
      %v277 = vld [vmem:[%s252 + $0x20] sm:$0xff]
      %v278 = vld [vmem:[%s252 + $0x28] sm:$0xff]
      %v279 = vld [vmem:[%s252 + $0x30] sm:$0xff]
      %v280 = vld [vmem:[%s252 + $0x38] sm:$0xff]
      %v281 = vld [vmem:[%s252 + $0x40] sm:$0xff]
      %v282 = vld [vmem:[%s252 + $0x48] sm:$0xff]
      %v283 = vld [vmem:[%s252 + $0x50] sm:$0xff]
      %v284 = vld [vmem:[%s252 + $0x58] sm:$0xff]
      %v285 = vld [vmem:[%s252 + $0x60] sm:$0xff]
      %v286 = vld [vmem:[%s252 + $0x68] sm:$0xff]
      %v287 = vld [vmem:[%s252 + $0x70] sm:$0xff]
      %v288 = vld [vmem:[%s252 + $0x78] sm:$0xff]
      %v289 = vld [vmem:[%s257] sm:$0xff]
      %v290 = vld [vmem:[%s257 + $0x8] sm:$0xff]
      %v291 = vld [vmem:[%s257 + $0x10] sm:$0xff]
      %v292 = vld [vmem:[%s257 + $0x18] sm:$0xff]
      %v293 = vld [vmem:[%s257 + $0x20] sm:$0xff]
      %v294 = vld [vmem:[%s257 + $0x28] sm:$0xff]
      %v295 = vld [vmem:[%s257 + $0x30] sm:$0xff]
      %v296 = vld [vmem:[%s257 + $0x38] sm:$0xff]
      %v297 = vld [vmem:[%s257 + $0x40] sm:$0xff]
      %vm298 = vcmask 588800
      %v300 = vsel %vm298, %v273, 0
      %v303 = vsel %vm298, %v274, 0
      %v306 = vsel %vm298, %v275, 0
      %v309 = vsel %vm298, %v276, 0
      %v312 = vsel %vm298, %v277, 0
      %v315 = vsel %vm298, %v278, 0
      %v318 = vsel %vm298, %v279, 0
      %v321 = vsel %vm298, %v280, 0
      %v324 = vsel %vm298, %v281, 0
      %v327 = vsel %vm298, %v282, 0
      %v330 = vsel %vm298, %v283, 0
      %v333 = vsel %vm298, %v284, 0
      %v336 = vsel %vm298, %v285, 0
      %v339 = vsel %vm298, %v286, 0
      %v342 = vsel %vm298, %v287, 0
      %v345 = vsel %vm298, %v288, 0
      %347 = vmatprep.subr.mxu0 0.0
      %348 = vmatpush1.msra.mxu0 0.0
      %349 = vmatprep.subr.mxu0 0.0
      %350 = vmatpush1.msra.mxu0 0.0
      %351 = vmatprep.subr.mxu0 0.0
      %352 = vmatpush1.msra.mxu0 0.0
      %353 = vmatprep.subr.mxu0 0.0
      %354 = vmatpush1.msra.mxu0 0.0
      %355 = vmatprep.subr.mxu0 0.0
      %356 = vmatpush1.msra.mxu0 0.0
      %357 = vmatprep.subr.mxu0 0.0
      %358 = vmatpush1.msra.mxu0 0.0
      %359 = vmatprep.subr.mxu0 0.0
      %360 = vmatpush1.msra.mxu0 0.0
      %361 = vmatprep.subr.mxu0 0.0
      %362 = vmatpush1.msra.mxu0 %v297
      %363 = vmatprep.subr.mxu0 0.0
      %364 = vmatpush1.msra.mxu0 %v296
      %365 = vmatprep.subr.mxu0 0.0
      %366 = vmatpush1.msra.mxu0 %v295
      %367 = vmatprep.subr.mxu0 0.0
      %368 = vmatpush1.msra.mxu0 %v294
      %369 = vmatprep.subr.mxu0 0.0
      %370 = vmatpush1.msra.mxu0 %v293
      %371 = vmatprep.subr.mxu0 0.0
      %372 = vmatpush1.msra.mxu0 %v292
      %373 = vmatprep.subr.mxu0 0.0
      %374 = vmatpush1.msra.mxu0 %v291
      %375 = vmatprep.subr.mxu0 0.0
      %376 = vmatpush1.msra.mxu0 %v290
      %377 = vmatprep.subr.mxu0 0.0
      %378 = vmatpush1.msra.mxu0 %v289
      %379 = vmatprep.subr.mxu0 0.0
      %380 = vmatpush2.msra.mxu0 0.0
      %381 = vmatprep.subr.mxu0 0.0
      %382 = vmatpush2.msra.mxu0 0.0
      %383 = vmatprep.subr.mxu0 0.0
      %384 = vmatpush2.msra.mxu0 0.0
      %385 = vmatprep.subr.mxu0 0.0
      %386 = vmatpush2.msra.mxu0 0.0
      %387 = vmatprep.subr.mxu0 0.0
      %388 = vmatpush2.msra.mxu0 0.0
      %389 = vmatprep.subr.mxu0 0.0
      %390 = vmatpush2.msra.mxu0 0.0
      %391 = vmatprep.subr.mxu0 0.0
      %392 = vmatpush2.msra.mxu0 0.0
      %393 = vmatprep.subr.mxu0 0.0
      %394 = vmatpush2.msra.mxu0 0.0
      %395 = vmatprep.subr.mxu0 0.0
      %396 = vmatpush2.msra.mxu0 0.0
      %397 = vmatprep.subr.mxu0 0.0
      %398 = vmatpush2.msra.mxu0 0.0
      %399 = vmatprep.subr.mxu0 0.0
      %400 = vmatpush2.msra.mxu0 0.0
      %401 = vmatprep.subr.mxu0 0.0
      %402 = vmatpush2.msra.mxu0 0.0
      %403 = vmatprep.subr.mxu0 0.0
      %404 = vmatpush2.msra.mxu0 0.0
      %405 = vmatprep.subr.mxu0 0.0
      %406 = vmatpush2.msra.mxu0 0.0
      %407 = vmatprep.subr.mxu0 0.0
      %408 = vmatpush2.msra.mxu0 0.0
      %409 = vmatprep.subr.mxu0 0.0
      %410 = vmatpush2.msra.mxu0 0.0
      %411 = vmatprep.mubr.f32.mxu0 0.0
      %412 = vmatmul.mubr.f32.gmra.mxu0 %v300
      %v413 = vpop.f32.mrf.mxu0
      %v414 = vadd.f32 0.0, %v413
      %v415 = vpop.f32.mrf.mxu0
      %416 = vmatprep.mubr.f32.mxu0 0.0
      %417 = vmatmul.mubr.f32.gmra.mxu0 %v303
      %v418 = vpop.f32.mrf.mxu0
      %v419 = vadd.f32 0.0, %v418
      %v420 = vpop.f32.mrf.mxu0
      %421 = vmatprep.mubr.f32.mxu0 0.0
      %422 = vmatmul.mubr.f32.gmra.mxu0 %v306
      %v423 = vpop.f32.mrf.mxu0
      %v424 = vadd.f32 0.0, %v423
      %v425 = vpop.f32.mrf.mxu0
      %426 = vmatprep.mubr.f32.mxu0 0.0
      %427 = vmatmul.mubr.f32.gmra.mxu0 %v309
      %v428 = vpop.f32.mrf.mxu0
      %v429 = vadd.f32 0.0, %v428
      %v430 = vpop.f32.mrf.mxu0
      %431 = vmatprep.mubr.f32.mxu0 0.0
      %432 = vmatmul.mubr.f32.gmra.mxu0 %v312
      %v433 = vpop.f32.mrf.mxu0
      %v434 = vadd.f32 0.0, %v433
      %v435 = vpop.f32.mrf.mxu0
      %436 = vmatprep.mubr.f32.mxu0 0.0
      %437 = vmatmul.mubr.f32.gmra.mxu0 %v315
      %v438 = vpop.f32.mrf.mxu0
      %v439 = vadd.f32 0.0, %v438
      %v440 = vpop.f32.mrf.mxu0
      %441 = vmatprep.mubr.f32.mxu0 0.0
      %442 = vmatmul.mubr.f32.gmra.mxu0 %v318
      %v443 = vpop.f32.mrf.mxu0
      %v444 = vadd.f32 0.0, %v443
      %v445 = vpop.f32.mrf.mxu0
      %446 = vmatprep.mubr.f32.mxu0 0.0
      %447 = vmatmul.mubr.f32.gmra.mxu0 %v321
      %v448 = vpop.f32.mrf.mxu0
      %v449 = vadd.f32 0.0, %v448
      %v450 = vpop.f32.mrf.mxu0
      %451 = vmatprep.mubr.f32.mxu0 0.0
      %452 = vmatmul.mubr.f32.gmra.mxu0 %v324
      %v453 = vpop.f32.mrf.mxu0
      %v454 = vadd.f32 0.0, %v453
      %v455 = vpop.f32.mrf.mxu0
      %456 = vmatprep.mubr.f32.mxu0 0.0
      %457 = vmatmul.mubr.f32.gmra.mxu0 %v327
      %v458 = vpop.f32.mrf.mxu0
      %v459 = vadd.f32 0.0, %v458
      %v460 = vpop.f32.mrf.mxu0
      %461 = vmatprep.mubr.f32.mxu0 0.0
      %462 = vmatmul.mubr.f32.gmra.mxu0 %v330
      %v463 = vpop.f32.mrf.mxu0
      %v464 = vadd.f32 0.0, %v463
      %v465 = vpop.f32.mrf.mxu0
      %466 = vmatprep.mubr.f32.mxu0 0.0
      %467 = vmatmul.mubr.f32.gmra.mxu0 %v333
      %v468 = vpop.f32.mrf.mxu0
      %v469 = vadd.f32 0.0, %v468
      %v470 = vpop.f32.mrf.mxu0
      %471 = vmatprep.mubr.f32.mxu0 0.0
      %472 = vmatmul.mubr.f32.gmra.mxu0 %v336
      %v473 = vpop.f32.mrf.mxu0
      %v474 = vadd.f32 0.0, %v473
      %v475 = vpop.f32.mrf.mxu0
      %476 = vmatprep.mubr.f32.mxu0 0.0
      %477 = vmatmul.mubr.f32.gmra.mxu0 %v339
      %v478 = vpop.f32.mrf.mxu0
      %v479 = vadd.f32 0.0, %v478
      %v480 = vpop.f32.mrf.mxu0
      %481 = vmatprep.mubr.f32.mxu0 0.0
      %482 = vmatmul.mubr.f32.gmra.mxu0 %v342
      %v483 = vpop.f32.mrf.mxu0
      %v484 = vadd.f32 0.0, %v483
      %v485 = vpop.f32.mrf.mxu0
      %486 = vmatprep.mubr.f32.mxu0 0.0
      %487 = vmatmul.mubr.f32.gmra.mxu0 %v345
      %v488 = vpop.f32.mrf.mxu0
      %v489 = vadd.f32 0.0, %v488
      %v490 = vpop.f32.mrf.mxu0
      %491 = vdwg.mxu0
      %p492 = scmp.eq.s32.totalorder %s21, 0
      // Predicated region
      $region37: #{_lambda_.6} parent=35 // pred_check
        %p493 = pneg %p492
      $region38: #{_lambda_.6} parent=35 // pred_check_branch
        %495 = sbr.rel (%p493) target = $region40
      $region39: #{_lambda_.6} parent=35 // pred_region
        %p496 = scmp.eq.s32.totalorder %s22, 0
        // Predicated region
        $region41: #{_lambda_.6} parent=39 // pred_check
          %p497 = pneg %p496
        $region42: #{_lambda_.6} parent=39 // pred_check_branch
          %499 = sbr.rel (%p497) target = $region44
        $region43: #{_lambda_.6} parent=39 // pred_region
          %500 = vst [vmem:[#allocation2] sm:$0x1] 0.0
          %501 = vst [vmem:[#allocation3] sm:$0x1] 0.0
        $region44: #{_lambda_.6} parent=39 // pred_fallthru
          _
        %v502 = vld [vmem:[#allocation2] sm:$0x1]
        %v503 = vadd.f32 %v414, %v419
        %v504 = vadd.f32 %v503, %v424
        %v505 = vadd.f32 %v504, %v429
        %v506 = vadd.f32 %v505, %v434
        %v507 = vadd.f32 %v506, %v439
        %v508 = vadd.f32 %v507, %v444
        %v509 = vadd.f32 %v508, %v449
        %v510 = vadd.f32 %v509, %v454
        %v511 = vadd.f32 %v510, %v459
        %v512 = vadd.f32 %v511, %v464
        %v513 = vadd.f32 %v512, %v469
        %v514 = vadd.f32 %v513, %v474
        %v515 = vadd.f32 %v514, %v479
        %v516 = vadd.f32 %v515, %v484
        %v517 = vadd.f32 %v516, %v489
        %v518 = vrot.slane %v517, 4
        %v519 = vadd.f32 %v517, %v518
        %v520 = vrot.slane %v519, 2
        %v521 = vadd.f32 %v519, %v520
        %v522 = vrot.slane %v521, 1
        %v523 = vadd.f32 %v521, %v522
        %v524 = vadd.f32 %v502, %v523
        %525 = vst [vmem:[#allocation2] sm:$0x1] %v524
        %v526 = vld [vmem:[#allocation3] sm:$0x1]
        %v527 = vmul.f32 %v414, %v414
        %v528 = vmul.f32 %v419, %v419
        %v529 = vmul.f32 %v424, %v424
        %v530 = vmul.f32 %v429, %v429
        %v531 = vmul.f32 %v434, %v434
        %v532 = vmul.f32 %v439, %v439
        %v533 = vmul.f32 %v444, %v444
        %v534 = vmul.f32 %v449, %v449
        %v535 = vmul.f32 %v454, %v454
        %v536 = vmul.f32 %v459, %v459
        %v537 = vmul.f32 %v464, %v464
        %v538 = vmul.f32 %v469, %v469
        %v539 = vmul.f32 %v474, %v474
        %v540 = vmul.f32 %v479, %v479
        %v541 = vmul.f32 %v484, %v484
        %v542 = vmul.f32 %v489, %v489
        %v543 = vadd.f32 %v527, %v528
        %v544 = vadd.f32 %v543, %v529
        %v545 = vadd.f32 %v544, %v530
        %v546 = vadd.f32 %v545, %v531
        %v547 = vadd.f32 %v546, %v532
        %v548 = vadd.f32 %v547, %v533
        %v549 = vadd.f32 %v548, %v534
        %v550 = vadd.f32 %v549, %v535
        %v551 = vadd.f32 %v550, %v536
        %v552 = vadd.f32 %v551, %v537
        %v553 = vadd.f32 %v552, %v538
        %v554 = vadd.f32 %v553, %v539
        %v555 = vadd.f32 %v554, %v540
        %v556 = vadd.f32 %v555, %v541
        %v557 = vadd.f32 %v556, %v542
        %v558 = vrot.slane %v557, 4
        %v559 = vadd.f32 %v557, %v558
        %v560 = vrot.slane %v559, 2
        %v561 = vadd.f32 %v559, %v560
        %v562 = vrot.slane %v561, 1
        %v563 = vadd.f32 %v561, %v562
        %v564 = vadd.f32 %v526, %v563
        %565 = vst [vmem:[#allocation3] sm:$0x1] %v564
        %566 = vst [vmem:[%s271] sm:$0xff] %v414
        %567 = vst [vmem:[%s271 + $0x8] sm:$0xff] %v419
        %568 = vst [vmem:[%s271 + $0x10] sm:$0xff] %v424
        %569 = vst [vmem:[%s271 + $0x18] sm:$0xff] %v429
        %570 = vst [vmem:[%s271 + $0x20] sm:$0xff] %v434
        %571 = vst [vmem:[%s271 + $0x28] sm:$0xff] %v439
        %572 = vst [vmem:[%s271 + $0x30] sm:$0xff] %v444
        %573 = vst [vmem:[%s271 + $0x38] sm:$0xff] %v449
        %574 = vst [vmem:[%s271 + $0x40] sm:$0xff] %v454
        %575 = vst [vmem:[%s271 + $0x48] sm:$0xff] %v459
        %576 = vst [vmem:[%s271 + $0x50] sm:$0xff] %v464
        %577 = vst [vmem:[%s271 + $0x58] sm:$0xff] %v469
        %578 = vst [vmem:[%s271 + $0x60] sm:$0xff] %v474
        %579 = vst [vmem:[%s271 + $0x68] sm:$0xff] %v479
        %580 = vst [vmem:[%s271 + $0x70] sm:$0xff] %v484
        %581 = vst [vmem:[%s271 + $0x78] sm:$0xff] %v489
        // Predicated region
        $region45: #{_lambda_.6} parent=39 // pred_check
          %p582 = pneg %p496
        $region46: #{_lambda_.6} parent=39 // pred_check_branch
          %584 = sbr.rel (%p582) target = $region48
        $region47: #{_lambda_.6} parent=39 // pred_region
          %v585 = vld [vmem:[#allocation2] sm:$0x1]
          %v586 = vmul.f32 %v585, 0.0078125
          %v587 = vld [vmem:[#allocation3] sm:$0x1]
          %v588 = vmul.f32 %v587, 0.0078125
          %v589 = vmul.f32 %v586, %v586
          %v590 = vsub.f32 %v588, %v589
          %v591 = vmax.f32 %v590, 0.0
          %v592 = vld [vmem:[%s260] sm:$0x1]
          %v593 = vadd.f32 %v591, 1e-05
          %v594 = vrsqrt.pop %v593
          %v595 = vmul.f32 %v592, %v594
          %596 = vst [vmem:[#allocation4] sm:$0x1] %v595
          %v597 = vld [vmem:[%s263] sm:$0x1]
          %v598 = vmul.f32 %v586, %v595
          %v599 = vsub.f32 %v597, %v598
          %600 = vst [vmem:[#allocation5] sm:$0x1] %v599
        $region48: #{_lambda_.6} parent=39 // pred_fallthru
          _
      $region40: #{_lambda_.6} parent=35 // pred_fallthru
        _
      %p601 = scmp.eq.s32.totalorder %s21, 1
      // Predicated region
      $region49: #{_lambda_.6} parent=35 // pred_check
        %p602 = pneg %p601
      $region50: #{_lambda_.6} parent=35 // pred_check_branch
        %604 = sbr.rel (%p602) target = $region52
      $region51: #{_lambda_.6} parent=35 // pred_region
        %v605 = vld [vmem:[#allocation4] sm:$0x1]
        %v607 = vlaneseq
        %v608 = vshrl.u32 %v607, 7
        %v609 = vsub.s32 0, %v608
        %v610 = vrot.slane %v605, %v609
        %v612 = vmul.f32 %v414, %v610
        %v613 = vmul.f32 %v419, %v610
        %v614 = vmul.f32 %v424, %v610
        %v615 = vmul.f32 %v429, %v610
        %v616 = vmul.f32 %v434, %v610
        %v617 = vmul.f32 %v439, %v610
        %v618 = vmul.f32 %v444, %v610
        %v619 = vmul.f32 %v449, %v610
        %v620 = vmul.f32 %v454, %v610
        %v621 = vmul.f32 %v459, %v610
        %v622 = vmul.f32 %v464, %v610
        %v623 = vmul.f32 %v469, %v610
        %v624 = vmul.f32 %v474, %v610
        %v625 = vmul.f32 %v479, %v610
        %v626 = vmul.f32 %v484, %v610
        %v627 = vmul.f32 %v489, %v610
        %v628 = vld [vmem:[#allocation5] sm:$0x1]
        %v630 = vlaneseq
        %v631 = vshrl.u32 %v630, 7
        %v632 = vsub.s32 0, %v631
        %v633 = vrot.slane %v628, %v632
        %v635 = vadd.f32 %v612, %v633
        %v636 = vadd.f32 %v613, %v633
        %v637 = vadd.f32 %v614, %v633
        %v638 = vadd.f32 %v615, %v633
        %v639 = vadd.f32 %v616, %v633
        %v640 = vadd.f32 %v617, %v633
        %v641 = vadd.f32 %v618, %v633
        %v642 = vadd.f32 %v619, %v633
        %v643 = vadd.f32 %v620, %v633
        %v644 = vadd.f32 %v621, %v633
        %v645 = vadd.f32 %v622, %v633
        %v646 = vadd.f32 %v623, %v633
        %v647 = vadd.f32 %v624, %v633
        %v648 = vadd.f32 %v625, %v633
        %v649 = vadd.f32 %v626, %v633
        %v650 = vadd.f32 %v627, %v633
        %v651 = vmax.f32 %v635, 0.0
        %v652 = vmax.f32 %v636, 0.0
        %v653 = vmax.f32 %v637, 0.0
        %v654 = vmax.f32 %v638, 0.0
        %v655 = vmax.f32 %v639, 0.0
        %v656 = vmax.f32 %v640, 0.0
        %v657 = vmax.f32 %v641, 0.0
        %v658 = vmax.f32 %v642, 0.0
        %v659 = vmax.f32 %v643, 0.0
        %v660 = vmax.f32 %v644, 0.0
        %v661 = vmax.f32 %v645, 0.0
        %v662 = vmax.f32 %v646, 0.0
        %v663 = vmax.f32 %v647, 0.0
        %v664 = vmax.f32 %v648, 0.0
        %v665 = vmax.f32 %v649, 0.0
        %v666 = vmax.f32 %v650, 0.0
        %667 = vst [vmem:[%s271] sm:$0xff] %v651
        %668 = vst [vmem:[%s271 + $0x8] sm:$0xff] %v652
        %669 = vst [vmem:[%s271 + $0x10] sm:$0xff] %v653
        %670 = vst [vmem:[%s271 + $0x18] sm:$0xff] %v654
        %671 = vst [vmem:[%s271 + $0x20] sm:$0xff] %v655
        %672 = vst [vmem:[%s271 + $0x28] sm:$0xff] %v656
        %673 = vst [vmem:[%s271 + $0x30] sm:$0xff] %v657
        %674 = vst [vmem:[%s271 + $0x38] sm:$0xff] %v658
        %675 = vst [vmem:[%s271 + $0x40] sm:$0xff] %v659
        %676 = vst [vmem:[%s271 + $0x48] sm:$0xff] %v660
        %677 = vst [vmem:[%s271 + $0x50] sm:$0xff] %v661
        %678 = vst [vmem:[%s271 + $0x58] sm:$0xff] %v662
        %679 = vst [vmem:[%s271 + $0x60] sm:$0xff] %v663
        %680 = vst [vmem:[%s271 + $0x68] sm:$0xff] %v664
        %681 = vst [vmem:[%s271 + $0x70] sm:$0xff] %v665
        %682 = vst [vmem:[%s271 + $0x78] sm:$0xff] %v666
      $region52: #{_lambda_.6} parent=35 // pred_fallthru
        _
      %s683 = smul.u32 16, %s22
      %p684 = scmp.lt.s32.totalorder %s683, 15
      %s685 = scalar_select %p684, %s683, 15
      %p686 = scmp.lt.s32.totalorder %s20, 0
      %s687 = scalar_select %p686, %s20, 0
      %s688 = sadd.s32 %s687, %s685
      %s689 = smul.addr %s688, 8
      %s690 = scalar_lea.vmem %s4, %s689
      // Predicated region
      $region53: #{_lambda_.6} parent=35 // pred_check
        %p691 = pneg %p158
      $region54: #{_lambda_.6} parent=35 // pred_check_branch
        %693 = sbr.rel (%p691) target = $region56
      $region55: #{_lambda_.6} parent=35 // pred_region
        %s694 = smul.u32 16, %s22
      $region56: #{_lambda_.6} parent=35 // pred_fallthru
        _
      // Predicated region
      $region57: #{_lambda_.6} parent=35 // pred_check
        %p695 = pneg %p158
      $region58: #{_lambda_.6} parent=35 // pred_check_branch
        %697 = sbr.rel (%p695) target = $region60
      $region59: #{_lambda_.6} parent=35 // pred_region
        %s698 = smul.u32 16, %s22
        %p699 = scmp.lt.s32.totalorder %s698, 15
        %s700 = scalar_select %p699, %s698, 15
        %p701 = scmp.lt.s32.totalorder %s20, 0
        %s702 = scalar_select %p701, %s20, 0
        %s703 = sadd.s32 %s702, %s700
        %s704 = smul.addr %s703, 8
        %s705 = scalar_lea.vmem %s4, %s704
      $region60: #{_lambda_.6} parent=35 // pred_fallthru
        _
    $region36: #{_lambda_.6} parent=5 // pred_fallthru
      _
    %p706 = scmp.le.s32.totalorder 2, %s10
    // Predicated region
    $region61: #{_lambda_.6} parent=5 // pred_check
      %p707 = pneg %p706
    $region62: #{_lambda_.6} parent=5 // pred_check_branch
      %709 = sbr.rel (%p707) target = $region64
    $region63: #{_lambda_.6} parent=5 // pred_region
      %s710 = ssub.s32 %s10, 2
    $region64: #{_lambda_.6} parent=5 // pred_fallthru
      _
  $region6: #{_lambda_.6} parent=0 // loop_footer
    %s14 = sadd.s32 1, %s10
  $region7: #{_lambda_.6} parent=0 // loop_footer_branch
    %9 = sbr.rel target = $region3
  $region8: #{_lambda_.6} parent=0 // loop_exit
    _

// kernel: _lambda_.7
$region0: #{_lambda_.7}
  #allocation0 [shape = 'u32[]', space=smem, size = 0x4, offset = 0x4, fixed_abs, tag = 'smem constant byte address 0x4 - core index']
  #allocation1 [shape = 'u32[144,128]{1,0:T(1,128)}', space=vmem, size = 0x12000, scoped, tag = 'internal scratch']
  %s0 = inlined_call_operand.vmem [shape: f32[16,8,8], index: 0, kind: input, shape index: {}]
  %s1 = inlined_call_operand.vmem [shape: f32[16,8], index: 1, kind: input, shape index: {}]
  %s2 = inlined_call_operand.vmem [shape: f32[8,16], index: 2, kind: input, shape index: {}]
  %s3 = inlined_call_operand.vmem [shape: f32[16,16,16], index: 3, kind: input, shape index: {}]
  %s4 = inlined_call_operand.hbm [shape: f32[16,16,16], index: 4, kind: output, shape index: {}]
  %s5 = sld [smem:[#allocation0]]
  $region49: #{_lambda_.7} parent=0
    _
  %s7 = ssub.s32 1, %s5
  %s8 = scalar_select 0, %s7, %s5
  $region1: #{_lambda_.7} parent=0
    #allocation2 [shape = 'u8[16384]{0}', space=vmem, size = 0x4000, scoped, tag = 'output window, operand 0']
    #allocation3 [shape = 's32[2]{0}', space=sflag, size = 0x8, scoped, tag = 'scoped memory for _lambda_.7']
    %9 = vsyncpa [#allocation3], 0
    %s10 = scalar_lea.sflag [#allocation3], 1
    %11 = vsyncpa %s10, 0
    loop: start=0, step=1, limit=18
    $region2: #{_lambda_.7} parent=1 // loop_pre_header
      _
    $region3: #{_lambda_.7} parent=1 // loop_header
      %s13 = sphi 0, %s17
      %p14 = scmp.ge.s32.totalorder %s13, 18
      %s23 = sphi 0, %s25
      %s26 = sphi 0, %s23
      %s27 = sphi 0, %s26
      %s43 = sphi 0, %s27
      %s47 = sphi 0, %s47
      %s49 = sphi 0, %s47
      %s50 = sphi 0, %s49
      %s64 = sphi 0, %s50
      %s68 = sphi 0, %s68
      %s70 = sphi 0, %s68
      %s71 = sphi 0, %s70
      %s85 = sphi 0, %s71
      %s91 = sphi 0, %s93
      %s94 = sphi 0, %s91
      %s95 = sphi 0, %s94
      %s111 = sphi 0, %s95
      %s117 = sphi 0, %s119
      %s120 = sphi 0, %s117
      %s121 = sphi 0, %s120
      %s137 = sphi 0, %s121
    $region4: #{_lambda_.7} parent=1 // loop_header_branch
      %16 = sbr.rel (%p14) target = $region8
    $region5: #{_lambda_.7} parent=1 // loop_body
      %s18 = ssub.s32 %s13, 1
      %s19 = ssub.s32 %s13, 2
      %s20 = sadd.s32 %s13, 1
      %s21 = ssub.s32 %s13, %s20
      %p22 = scmp.eq.s32.totalorder %s21, 0
      %s24 = sadd.s32 %s23, 1
      %s25 = scalar_select %p22, %s23, %s24
      %p28 = pneg %p22
      %p29 = scmp.eq.s32.totalorder %s13, 15
      %p30 = por %p28, %p29
      %p31 = scmp.ne.s32.totalorder %s23, %s26
      %p32 = scmp.eq.s32.totalorder %s13, 0
      %p33 = por %p31, %p32
      %p34 = scmp.ne.s32.totalorder %s23, %s26
      %p35 = scmp.eq.s32.totalorder %s18, 15
      %p36 = por %p34, %p35
      %p37 = scmp.ne.s32.totalorder %s26, %s27
      %p38 = scmp.eq.s32.totalorder %s18, 0
      %p39 = por %p37, %p38
      %p40 = scmp.ne.s32.totalorder %s26, %s27
      %p41 = scmp.eq.s32.totalorder %s19, 15
      %p42 = por %p40, %p41
      %p44 = scmp.ne.s32.totalorder %s27, %s43
      %p45 = scmp.eq.s32.totalorder %s19, 0
      %p46 = por %p44, %p45
      %s48 = sadd.s32 %s47, 1
      %p51 = scmp.eq.s32.totalorder %s13, 15
      %p52 = scmp.ne.s32.totalorder %s47, %s49
      %p53 = scmp.eq.s32.totalorder %s13, 0
      %p54 = por %p52, %p53
      %p55 = scmp.ne.s32.totalorder %s47, %s49
      %p56 = scmp.eq.s32.totalorder %s18, 15
      %p57 = por %p55, %p56
      %p58 = scmp.ne.s32.totalorder %s49, %s50
      %p59 = scmp.eq.s32.totalorder %s18, 0
      %p60 = por %p58, %p59
      %p61 = scmp.ne.s32.totalorder %s49, %s50
      %p62 = scmp.eq.s32.totalorder %s19, 15
      %p63 = por %p61, %p62
      %p65 = scmp.ne.s32.totalorder %s50, %s64
      %p66 = scmp.eq.s32.totalorder %s19, 0
      %p67 = por %p65, %p66
      %s69 = sadd.s32 %s68, 1
      %p72 = scmp.eq.s32.totalorder %s13, 15
      %p73 = scmp.ne.s32.totalorder %s68, %s70
      %p74 = scmp.eq.s32.totalorder %s13, 0
      %p75 = por %p73, %p74
      %p76 = scmp.ne.s32.totalorder %s68, %s70
      %p77 = scmp.eq.s32.totalorder %s18, 15
      %p78 = por %p76, %p77
      %p79 = scmp.ne.s32.totalorder %s70, %s71
      %p80 = scmp.eq.s32.totalorder %s18, 0
      %p81 = por %p79, %p80
      %p82 = scmp.ne.s32.totalorder %s70, %s71
      %p83 = scmp.eq.s32.totalorder %s19, 15
      %p84 = por %p82, %p83
      %p86 = scmp.ne.s32.totalorder %s71, %s85
      %p87 = scmp.eq.s32.totalorder %s19, 0
      %p88 = por %p86, %p87
      %s89 = ssub.s32 %s13, %s20
      %p90 = scmp.eq.s32.totalorder %s89, 0
      %s92 = sadd.s32 %s91, 1
      %s93 = scalar_select %p90, %s91, %s92
      %p96 = pneg %p90
      %p97 = scmp.eq.s32.totalorder %s13, 15
      %p98 = por %p96, %p97
      %p99 = scmp.ne.s32.totalorder %s91, %s94
      %p100 = scmp.eq.s32.totalorder %s13, 0
      %p101 = por %p99, %p100
      %p102 = scmp.ne.s32.totalorder %s91, %s94
      %p103 = scmp.eq.s32.totalorder %s18, 15
      %p104 = por %p102, %p103
      %p105 = scmp.ne.s32.totalorder %s94, %s95
      %p106 = scmp.eq.s32.totalorder %s18, 0
      %p107 = por %p105, %p106
      %p108 = scmp.ne.s32.totalorder %s94, %s95
      %p109 = scmp.eq.s32.totalorder %s19, 15
      %p110 = por %p108, %p109
      %p112 = scmp.ne.s32.totalorder %s95, %s111
      %p113 = scmp.eq.s32.totalorder %s19, 0
      %p114 = por %p112, %p113
      %s115 = ssub.s32 %s13, %s20
      %p116 = scmp.eq.s32.totalorder %s115, 0
      %s118 = sadd.s32 %s117, 1
      %s119 = scalar_select %p116, %s117, %s118
      %p122 = pneg %p116
      %p123 = scmp.eq.s32.totalorder %s13, 15
      %p124 = por %p122, %p123
      %p125 = scmp.ne.s32.totalorder %s117, %s120
      %p126 = scmp.eq.s32.totalorder %s13, 0
      %p127 = por %p125, %p126
      %p128 = scmp.ne.s32.totalorder %s117, %s120
      %p129 = scmp.eq.s32.totalorder %s18, 15
      %p130 = por %p128, %p129
      %p131 = scmp.ne.s32.totalorder %s120, %s121
      %p132 = scmp.eq.s32.totalorder %s18, 0
      %p133 = por %p131, %p132
      %p134 = scmp.ne.s32.totalorder %s120, %s121
      %p135 = scmp.eq.s32.totalorder %s19, 15
      %p136 = por %p134, %p135
      %p138 = scmp.ne.s32.totalorder %s121, %s137
      %p139 = scmp.eq.s32.totalorder %s19, 0
      %p140 = por %p138, %p139
      %p141 = scmp.le.s32.totalorder 1, %s13
      %p142 = scmp.lt.s32.totalorder %s13, 17
      %p143 = pnand %p141, %p142
      %p144 = pneg %p143
      // Predicated region
      $region9: #{_lambda_.7} parent=5 // pred_check
        _
      $region10: #{_lambda_.7} parent=5 // pred_check_branch
        %146 = sbr.rel (%p143) target = $region12
      $region11: #{_lambda_.7} parent=5 // pred_region
        %s147 = ssub.s32 %s13, 1
        // Predicated region
        $region13: #{_lambda_.7} parent=11 // pred_check
          %p148 = pneg %p60
        $region14: #{_lambda_.7} parent=11 // pred_check_branch
          %150 = sbr.rel (%p148) target = $region16
        $region15: #{_lambda_.7} parent=11 // pred_region
          _
        $region16: #{_lambda_.7} parent=11 // pred_fallthru
          _
        // Predicated region
        $region17: #{_lambda_.7} parent=11 // pred_check
          %p151 = pneg %p81
        $region18: #{_lambda_.7} parent=11 // pred_check_branch
          %153 = sbr.rel (%p151) target = $region20
        $region19: #{_lambda_.7} parent=11 // pred_region
          _
        $region20: #{_lambda_.7} parent=11 // pred_fallthru
          _
      $region12: #{_lambda_.7} parent=5 // pred_fallthru
        _
      %p154 = scmp.lt.s32.totalorder %s13, 16
      // Predicated region
      $region21: #{_lambda_.7} parent=5 // pred_check
        %p155 = pneg %p154
      $region22: #{_lambda_.7} parent=5 // pred_check_branch
        %157 = sbr.rel (%p155) target = $region24
      $region23: #{_lambda_.7} parent=5 // pred_region
        // Predicated region
        $region25: #{_lambda_.7} parent=23 // pred_check
          %p158 = pneg %p33
        $region26: #{_lambda_.7} parent=23 // pred_check_branch
          %160 = sbr.rel (%p158) target = $region28
        $region27: #{_lambda_.7} parent=23 // pred_region
          %p161 = scmp.lt.s32.totalorder %s13, 15
          %s162 = scalar_select %p161, %s13, 15
          %s163 = smul.addr %s162, 8
          %s164 = scalar_lea.vmem %s0, %s163
        $region28: #{_lambda_.7} parent=23 // pred_fallthru
          _
        // Predicated region
        $region29: #{_lambda_.7} parent=23 // pred_check
          %p165 = pneg %p101
        $region30: #{_lambda_.7} parent=23 // pred_check_branch
          %167 = sbr.rel (%p165) target = $region32
        $region31: #{_lambda_.7} parent=23 // pred_region
          %p168 = scmp.lt.s32.totalorder %s13, 15
          %s169 = scalar_select %p168, %s13, 15
          %s170 = smul.addr %s169, 2
          %s171 = smul.addr %s170, 8
          %s172 = scalar_lea.vmem %s3, %s171
        $region32: #{_lambda_.7} parent=23 // pred_fallthru
          _
      $region24: #{_lambda_.7} parent=5 // pred_fallthru
        _
      %p173 = scmp.le.s32.totalorder 1, %s13
      %p174 = scmp.lt.s32.totalorder %s13, 17
      %p175 = pnand %p173, %p174
      %p176 = pneg %p175
      // Predicated region
      $region33: #{_lambda_.7} parent=5 // pred_check
        _
      $region34: #{_lambda_.7} parent=5 // pred_check_branch
        %178 = sbr.rel (%p175) target = $region36
      $region35: #{_lambda_.7} parent=5 // pred_region
        %s179 = ssub.s32 %s13, 1
        %p180 = scmp.lt.s32.totalorder %s18, 15
        %s181 = scalar_select %p180, %s18, 15
        %s182 = smul.addr %s181, 8
        %s183 = scalar_lea.vmem %s0, %s182
        %p184 = pneg %p39
        %p185 = pneg %p36
        %p186 = pneg %p60
        %p187 = pneg %p57
        %p188 = pneg %p81
        %p189 = pneg %p78
        %p190 = scmp.lt.s32.totalorder %s18, 15
        %s191 = scalar_select %p190, %s18, 15
        %s192 = smul.addr %s191, 2
        %s193 = smul.addr %s192, 8
        %s194 = scalar_lea.vmem %s3, %s193
        %p195 = pneg %p107
        %p196 = pneg %p104
        %p197 = pneg %p133
        %p198 = pneg %p130
        %s199 = sand.u32 %s120, 1
        %s200 = scalar_lea.sflag [#allocation3], %s199
        %s201 = sand.u32 %s120, 1
        %s202 = smul.addr %s201, 16
        %s203 = scalar_lea.vmem [#allocation2], %s202
        %p204 = scmp.lt.s32.totalorder %s18, 15
        %s205 = scalar_select %p204, %s18, 15
        %s206 = smul.addr %s205, 8
        %s207 = scalar_lea.vmem %s0, %s206
        %p208 = scmp.lt.s32.totalorder %s18, 15
        %s209 = scalar_select %p208, %s18, 15
        %s210 = smul.addr %s209, 2
        %s211 = smul.addr %s210, 8
        %s212 = scalar_lea.vmem %s3, %s211
        %v213 = vld [vmem:[%s207] sm:$0xff]
        %v214 = vld [vmem:[%s2] sm:$0xff]
        %vm215 = vcmask 64512
        %v217 = vsel %vm215, %v213, 0
        %219 = vmatprep.subr.mxu0 0.0
        %220 = vmatpush1.msra.mxu0 0.0
        %221 = vmatprep.subr.mxu0 0.0
        %222 = vmatpush1.msra.mxu0 0.0
        %223 = vmatprep.subr.mxu0 0.0
        %224 = vmatpush1.msra.mxu0 0.0
        %225 = vmatprep.subr.mxu0 0.0
        %226 = vmatpush1.msra.mxu0 0.0
        %227 = vmatprep.subr.mxu0 0.0
        %228 = vmatpush1.msra.mxu0 0.0
        %229 = vmatprep.subr.mxu0 0.0
        %230 = vmatpush1.msra.mxu0 0.0
        %231 = vmatprep.subr.mxu0 0.0
        %232 = vmatpush1.msra.mxu0 0.0
        %233 = vmatprep.subr.mxu0 0.0
        %234 = vmatpush1.msra.mxu0 0.0
        %235 = vmatprep.subr.mxu0 0.0
        %236 = vmatpush1.msra.mxu0 0.0
        %237 = vmatprep.subr.mxu0 0.0
        %238 = vmatpush1.msra.mxu0 0.0
        %239 = vmatprep.subr.mxu0 0.0
        %240 = vmatpush1.msra.mxu0 0.0
        %241 = vmatprep.subr.mxu0 0.0
        %242 = vmatpush1.msra.mxu0 0.0
        %243 = vmatprep.subr.mxu0 0.0
        %244 = vmatpush1.msra.mxu0 0.0
        %245 = vmatprep.subr.mxu0 0.0
        %246 = vmatpush1.msra.mxu0 0.0
        %247 = vmatprep.subr.mxu0 0.0
        %248 = vmatpush1.msra.mxu0 0.0
        %249 = vmatprep.subr.mxu0 0.0
        %250 = vmatpush1.msra.mxu0 %v214
        %251 = vmatprep.subr.mxu0 0.0
        %252 = vmatpush2.msra.mxu0 0.0
        %253 = vmatprep.subr.mxu0 0.0
        %254 = vmatpush2.msra.mxu0 0.0
        %255 = vmatprep.subr.mxu0 0.0
        %256 = vmatpush2.msra.mxu0 0.0
        %257 = vmatprep.subr.mxu0 0.0
        %258 = vmatpush2.msra.mxu0 0.0
        %259 = vmatprep.subr.mxu0 0.0
        %260 = vmatpush2.msra.mxu0 0.0
        %261 = vmatprep.subr.mxu0 0.0
        %262 = vmatpush2.msra.mxu0 0.0
        %263 = vmatprep.subr.mxu0 0.0
        %264 = vmatpush2.msra.mxu0 0.0
        %265 = vmatprep.subr.mxu0 0.0
        %266 = vmatpush2.msra.mxu0 0.0
        %267 = vmatprep.subr.mxu0 0.0
        %268 = vmatpush2.msra.mxu0 0.0
        %269 = vmatprep.subr.mxu0 0.0
        %270 = vmatpush2.msra.mxu0 0.0
        %271 = vmatprep.subr.mxu0 0.0
        %272 = vmatpush2.msra.mxu0 0.0
        %273 = vmatprep.subr.mxu0 0.0
        %274 = vmatpush2.msra.mxu0 0.0
        %275 = vmatprep.subr.mxu0 0.0
        %276 = vmatpush2.msra.mxu0 0.0
        %277 = vmatprep.subr.mxu0 0.0
        %278 = vmatpush2.msra.mxu0 0.0
        %279 = vmatprep.subr.mxu0 0.0
        %280 = vmatpush2.msra.mxu0 0.0
        %281 = vmatprep.subr.mxu0 0.0
        %282 = vmatpush2.msra.mxu0 0.0
        %283 = vmatprep.mubr.f32.mxu0 0.0
        %284 = vmatmul.mubr.f32.gmra.mxu0 %v217
        %v285 = vpop.f32.mrf.mxu0
        %v286 = vadd.f32 0.0, %v285
        %v287 = vpop.f32.mrf.mxu0
        %288 = vdwg.mxu0
        %v289 = vld [vmem:[%s1] sm:$0xff]
        %v290 = vld [vmem:[%s1 + $0x8] sm:$0xff]
        %v291 = vld [vmem:[%s212] sm:$0xff]
        %v292 = vld [vmem:[%s212 + $0x8] sm:$0xff]
        %v294 = vsel %vm215, %v289, 0
        %v297 = vsel %vm215, %v290, 0
        %299 = vmatprep.subr.mxu0 0.0
        %300 = vmatpush1.msra.mxu0 0.0
        %301 = vmatprep.subr.mxu0 0.0
        %302 = vmatpush1.msra.mxu0 0.0
        %303 = vmatprep.subr.mxu0 0.0
        %304 = vmatpush1.msra.mxu0 0.0
        %305 = vmatprep.subr.mxu0 0.0
        %306 = vmatpush1.msra.mxu0 0.0
        %307 = vmatprep.subr.mxu0 0.0
        %308 = vmatpush1.msra.mxu0 0.0
        %309 = vmatprep.subr.mxu0 0.0
        %310 = vmatpush1.msra.mxu0 0.0
        %311 = vmatprep.subr.mxu0 0.0
        %312 = vmatpush1.msra.mxu0 0.0
        %313 = vmatprep.subr.mxu0 0.0
        %314 = vmatpush1.msra.mxu0 0.0
        %315 = vmatprep.subr.mxu0 0.0
        %316 = vmatpush1.msra.mxu0 0.0
        %317 = vmatprep.subr.mxu0 0.0
        %318 = vmatpush1.msra.mxu0 0.0
        %319 = vmatprep.subr.mxu0 0.0
        %320 = vmatpush1.msra.mxu0 0.0
        %321 = vmatprep.subr.mxu0 0.0
        %322 = vmatpush1.msra.mxu0 0.0
        %323 = vmatprep.subr.mxu0 0.0
        %324 = vmatpush1.msra.mxu0 0.0
        %325 = vmatprep.subr.mxu0 0.0
        %326 = vmatpush1.msra.mxu0 0.0
        %327 = vmatprep.subr.mxu0 0.0
        %328 = vmatpush1.msra.mxu0 0.0
        %329 = vmatprep.subr.mxu0 0.0
        %330 = vmatpush1.msra.mxu0 %v286
        %331 = vmatprep.subr.mxu0 0.0
        %332 = vmatpush2.msra.mxu0 0.0
        %333 = vmatprep.subr.mxu0 0.0
        %334 = vmatpush2.msra.mxu0 0.0
        %335 = vmatprep.subr.mxu0 0.0
        %336 = vmatpush2.msra.mxu0 0.0
        %337 = vmatprep.subr.mxu0 0.0
        %338 = vmatpush2.msra.mxu0 0.0
        %339 = vmatprep.subr.mxu0 0.0
        %340 = vmatpush2.msra.mxu0 0.0
        %341 = vmatprep.subr.mxu0 0.0
        %342 = vmatpush2.msra.mxu0 0.0
        %343 = vmatprep.subr.mxu0 0.0
        %344 = vmatpush2.msra.mxu0 0.0
        %345 = vmatprep.subr.mxu0 0.0
        %346 = vmatpush2.msra.mxu0 0.0
        %347 = vmatprep.subr.mxu0 0.0
        %348 = vmatpush2.msra.mxu0 0.0
        %349 = vmatprep.subr.mxu0 0.0
        %350 = vmatpush2.msra.mxu0 0.0
        %351 = vmatprep.subr.mxu0 0.0
        %352 = vmatpush2.msra.mxu0 0.0
        %353 = vmatprep.subr.mxu0 0.0
        %354 = vmatpush2.msra.mxu0 0.0
        %355 = vmatprep.subr.mxu0 0.0
        %356 = vmatpush2.msra.mxu0 0.0
        %357 = vmatprep.subr.mxu0 0.0
        %358 = vmatpush2.msra.mxu0 0.0
        %359 = vmatprep.subr.mxu0 0.0
        %360 = vmatpush2.msra.mxu0 0.0
        %361 = vmatprep.subr.mxu0 0.0
        %362 = vmatpush2.msra.mxu0 0.0
        %363 = vmatprep.mubr.f32.mxu0 0.0
        %364 = vmatmul.mubr.f32.gmra.mxu0 %v294
        %v365 = vpop.f32.mrf.mxu0
        %v366 = vadd.f32 %v291, %v365
        %v367 = vpop.f32.mrf.mxu0
        %368 = vmatprep.mubr.f32.mxu0 0.0
        %369 = vmatmul.mubr.f32.gmra.mxu0 %v297
        %v370 = vpop.f32.mrf.mxu0
        %v371 = vadd.f32 %v292, %v370
        %v372 = vpop.f32.mrf.mxu0
        %373 = vdwg.mxu0
        %vm374 = vcmask 130048
        %375 = vst.msk [vmem:[%s203] sm:$0xff] %vm374, %v366
        %376 = vst.msk [vmem:[%s203 + $0x8] sm:$0xff] %vm374, %v371
        %s377 = sand.u32 %s120, 1
        %s378 = scalar_lea.sflag [#allocation3], %s377
        %s379 = sand.u32 %s120, 1
        %s380 = smul.addr %s379, 16
        %s381 = scalar_lea.vmem [#allocation2], %s380
        // Predicated region
        $region37: #{_lambda_.7} parent=35 // pred_check
          %p382 = pneg %p130
        $region38: #{_lambda_.7} parent=35 // pred_check_branch
          %384 = sbr.rel (%p382) target = $region40
        $region39: #{_lambda_.7} parent=35 // pred_region
          %s386 = ssub.s32 256, 256
          %387 = vsyncadd %s378, %s386
          %s388 = smul.addr %s18, 2
          %s389 = smul.addr %s388, 128
          %s390 = scalar_lea.hbm %s4, %s389
          %s391 = sshll.u32 %s381, 4
          %s392 = int_to_ptr.vmem [resolvable:$true] %s391
          %397 = dma.vmem_to_hbm [thread:$0]  %s392, 256, %s390, %s378, 128, 128, 8
        $region40: #{_lambda_.7} parent=35 // pred_fallthru
          _
      $region36: #{_lambda_.7} parent=5 // pred_fallthru
        _
      %p398 = scmp.le.s32.totalorder 2, %s13
      // Predicated region
      $region41: #{_lambda_.7} parent=5 // pred_check
        %p399 = pneg %p398
      $region42: #{_lambda_.7} parent=5 // pred_check_branch
        %401 = sbr.rel (%p399) target = $region44
      $region43: #{_lambda_.7} parent=5 // pred_region
        %s402 = ssub.s32 %s13, 2
        // Predicated region
        $region45: #{_lambda_.7} parent=43 // pred_check
          %p403 = pneg %p136
        $region46: #{_lambda_.7} parent=43 // pred_check_branch
          %405 = sbr.rel (%p403) target = $region48
        $region47: #{_lambda_.7} parent=43 // pred_region
          %s406 = sand.u32 %s121, 1
          %s407 = scalar_lea.sflag [#allocation3], %s406
          %s408 = sand.u32 %s121, 1
          %s409 = smul.addr %s408, 16
          %s410 = scalar_lea.vmem [#allocation2], %s409
          %411 = dma.done %s407, 256
        $region48: #{_lambda_.7} parent=43 // pred_fallthru
          _
      $region44: #{_lambda_.7} parent=5 // pred_fallthru
        _
    $region6: #{_lambda_.7} parent=1 // loop_footer
      %s17 = sadd.s32 1, %s13
    $region7: #{_lambda_.7} parent=1 // loop_footer_branch
      %12 = sbr.rel target = $region3
    $region8: #{_lambda_.7} parent=1 // loop_exit
      _
    %412 = vsyncpa [#allocation3], 1
    %s413 = scalar_lea.sflag [#allocation3], 1
    %414 = vsyncpa %s413, 1

// kernel: _lambda_.5
$region0: #{_lambda_.5}
  #allocation0 [shape = 'u32[]', space=smem, size = 0x4, offset = 0x4, fixed_abs, tag = 'smem constant byte address 0x4 - core index']
  #allocation1 [shape = 'u32[144,128]{1,0:T(1,128)}', space=vmem, size = 0x12000, scoped, tag = 'internal scratch']
  %s0 = inlined_call_operand.vmem [shape: f32[16,16,16], index: 0, kind: input, shape index: {}]
  %s1 = inlined_call_operand.hbm [shape: f32[8,16], index: 1, kind: input, shape index: {}]
  %s2 = inlined_call_operand.vmem [shape: f32[16,8], index: 2, kind: input, shape index: {}]
  %s3 = inlined_call_operand.vmem [shape: f32[16,8,8], index: 3, kind: input, shape index: {}]
  %s4 = inlined_call_operand.hbm [shape: f32[16,8,8], index: 4, kind: output, shape index: {}]
  %s5 = sld [smem:[#allocation0]]
  $region53: #{_lambda_.5} parent=0
    _
  %s7 = ssub.s32 1, %s5
  %s8 = scalar_select 0, %s7, %s5
  $region1: #{_lambda_.5} parent=0
    #allocation2 [shape = 'u8[4096]{0}', space=vmem, size = 0x1000, scoped, tag = 'input window, operand 1, single buffered']
    #allocation3 [shape = 's32[2]{0}', space=sflag, size = 0x8, scoped, tag = 'scoped memory for _lambda_.5']
    #allocation4 [shape = 's32[2]{0}', space=sflag, size = 0x8, scoped, tag = 'scoped memory for _lambda_.5']
    #allocation5 [shape = 'u8[8192]{0}', space=vmem, size = 0x2000, scoped, tag = 'output window, operand 0']
    %9 = vsyncpa [#allocation3], 0
    %10 = vsyncpa [#allocation4], 0
    %s11 = scalar_lea.sflag [#allocation4], 1
    %12 = vsyncpa %s11, 0
    loop: start=0, step=1, limit=18
    $region2: #{_lambda_.5} parent=1 // loop_pre_header
      _
    $region3: #{_lambda_.5} parent=1 // loop_header
      %s14 = sphi 0, %s18
      %p15 = scmp.ge.s32.totalorder %s14, 18
      %s24 = sphi 0, %s26
      %s27 = sphi 0, %s24
      %s28 = sphi 0, %s27
      %s44 = sphi 0, %s28
      %s48 = sphi 0, %s48
      %s50 = sphi 0, %s48
      %s51 = sphi 0, %s50
      %s65 = sphi 0, %s51
      %s69 = sphi 0, %s69
      %s71 = sphi 0, %s69
      %s72 = sphi 0, %s71
      %s86 = sphi 0, %s72
      %s92 = sphi 0, %s94
      %s95 = sphi 0, %s92
      %s96 = sphi 0, %s95
      %s112 = sphi 0, %s96
      %s118 = sphi 0, %s120
      %s121 = sphi 0, %s118
      %s122 = sphi 0, %s121
      %s138 = sphi 0, %s122
    $region4: #{_lambda_.5} parent=1 // loop_header_branch
      %17 = sbr.rel (%p15) target = $region8
    $region5: #{_lambda_.5} parent=1 // loop_body
      %s19 = ssub.s32 %s14, 1
      %s20 = ssub.s32 %s14, 2
      %s21 = sadd.s32 %s14, 1
      %s22 = ssub.s32 %s14, %s21
      %p23 = scmp.eq.s32.totalorder %s22, 0
      %s25 = sadd.s32 %s24, 1
      %s26 = scalar_select %p23, %s24, %s25
      %p29 = pneg %p23
      %p30 = scmp.eq.s32.totalorder %s14, 15
      %p31 = por %p29, %p30
      %p32 = scmp.ne.s32.totalorder %s24, %s27
      %p33 = scmp.eq.s32.totalorder %s14, 0
      %p34 = por %p32, %p33
      %p35 = scmp.ne.s32.totalorder %s24, %s27
      %p36 = scmp.eq.s32.totalorder %s19, 15
      %p37 = por %p35, %p36
      %p38 = scmp.ne.s32.totalorder %s27, %s28
      %p39 = scmp.eq.s32.totalorder %s19, 0
      %p40 = por %p38, %p39
      %p41 = scmp.ne.s32.totalorder %s27, %s28
      %p42 = scmp.eq.s32.totalorder %s20, 15
      %p43 = por %p41, %p42
      %p45 = scmp.ne.s32.totalorder %s28, %s44
      %p46 = scmp.eq.s32.totalorder %s20, 0
      %p47 = por %p45, %p46
      %s49 = sadd.s32 %s48, 1
      %p52 = scmp.eq.s32.totalorder %s14, 15
      %p53 = scmp.ne.s32.totalorder %s48, %s50
      %p54 = scmp.eq.s32.totalorder %s14, 0
      %p55 = por %p53, %p54
      %p56 = scmp.ne.s32.totalorder %s48, %s50
      %p57 = scmp.eq.s32.totalorder %s19, 15
      %p58 = por %p56, %p57
      %p59 = scmp.ne.s32.totalorder %s50, %s51
      %p60 = scmp.eq.s32.totalorder %s19, 0
      %p61 = por %p59, %p60
      %p62 = scmp.ne.s32.totalorder %s50, %s51
      %p63 = scmp.eq.s32.totalorder %s20, 15
      %p64 = por %p62, %p63
      %p66 = scmp.ne.s32.totalorder %s51, %s65
      %p67 = scmp.eq.s32.totalorder %s20, 0
      %p68 = por %p66, %p67
      %s70 = sadd.s32 %s69, 1
      %p73 = scmp.eq.s32.totalorder %s14, 15
      %p74 = scmp.ne.s32.totalorder %s69, %s71
      %p75 = scmp.eq.s32.totalorder %s14, 0
      %p76 = por %p74, %p75
      %p77 = scmp.ne.s32.totalorder %s69, %s71
      %p78 = scmp.eq.s32.totalorder %s19, 15
      %p79 = por %p77, %p78
      %p80 = scmp.ne.s32.totalorder %s71, %s72
      %p81 = scmp.eq.s32.totalorder %s19, 0
      %p82 = por %p80, %p81
      %p83 = scmp.ne.s32.totalorder %s71, %s72
      %p84 = scmp.eq.s32.totalorder %s20, 15
      %p85 = por %p83, %p84
      %p87 = scmp.ne.s32.totalorder %s72, %s86
      %p88 = scmp.eq.s32.totalorder %s20, 0
      %p89 = por %p87, %p88
      %s90 = ssub.s32 %s14, %s21
      %p91 = scmp.eq.s32.totalorder %s90, 0
      %s93 = sadd.s32 %s92, 1
      %s94 = scalar_select %p91, %s92, %s93
      %p97 = pneg %p91
      %p98 = scmp.eq.s32.totalorder %s14, 15
      %p99 = por %p97, %p98
      %p100 = scmp.ne.s32.totalorder %s92, %s95
      %p101 = scmp.eq.s32.totalorder %s14, 0
      %p102 = por %p100, %p101
      %p103 = scmp.ne.s32.totalorder %s92, %s95
      %p104 = scmp.eq.s32.totalorder %s19, 15
      %p105 = por %p103, %p104
      %p106 = scmp.ne.s32.totalorder %s95, %s96
      %p107 = scmp.eq.s32.totalorder %s19, 0
      %p108 = por %p106, %p107
      %p109 = scmp.ne.s32.totalorder %s95, %s96
      %p110 = scmp.eq.s32.totalorder %s20, 15
      %p111 = por %p109, %p110
      %p113 = scmp.ne.s32.totalorder %s96, %s112
      %p114 = scmp.eq.s32.totalorder %s20, 0
      %p115 = por %p113, %p114
      %s116 = ssub.s32 %s14, %s21
      %p117 = scmp.eq.s32.totalorder %s116, 0
      %s119 = sadd.s32 %s118, 1
      %s120 = scalar_select %p117, %s118, %s119
      %p123 = pneg %p117
      %p124 = scmp.eq.s32.totalorder %s14, 15
      %p125 = por %p123, %p124
      %p126 = scmp.ne.s32.totalorder %s118, %s121
      %p127 = scmp.eq.s32.totalorder %s14, 0
      %p128 = por %p126, %p127
      %p129 = scmp.ne.s32.totalorder %s118, %s121
      %p130 = scmp.eq.s32.totalorder %s19, 15
      %p131 = por %p129, %p130
      %p132 = scmp.ne.s32.totalorder %s121, %s122
      %p133 = scmp.eq.s32.totalorder %s19, 0
      %p134 = por %p132, %p133
      %p135 = scmp.ne.s32.totalorder %s121, %s122
      %p136 = scmp.eq.s32.totalorder %s20, 15
      %p137 = por %p135, %p136
      %p139 = scmp.ne.s32.totalorder %s122, %s138
      %p140 = scmp.eq.s32.totalorder %s20, 0
      %p141 = por %p139, %p140
      %p142 = scmp.le.s32.totalorder 1, %s14
      %p143 = scmp.lt.s32.totalorder %s14, 17
      %p144 = pnand %p142, %p143
      %p145 = pneg %p144
      // Predicated region
      $region9: #{_lambda_.5} parent=5 // pred_check
        _
      $region10: #{_lambda_.5} parent=5 // pred_check_branch
        %147 = sbr.rel (%p144) target = $region12
      $region11: #{_lambda_.5} parent=5 // pred_region
        %s148 = ssub.s32 %s14, 1
        // Predicated region
        $region13: #{_lambda_.5} parent=11 // pred_check
          %p149 = pneg %p61
        $region14: #{_lambda_.5} parent=11 // pred_check_branch
          %151 = sbr.rel (%p149) target = $region16
        $region15: #{_lambda_.5} parent=11 // pred_region
          %s153 = ssub.s32 128, 128
          %154 = vsyncadd [#allocation3], %s153
          %s156 = sshll.u32 [#allocation2], 4
          %s157 = int_to_ptr.vmem [resolvable:$true] %s156
          %159 = dma.hbm_to_vmem [thread:$0]  %s1, 128, %s157, [#allocation3]
        $region16: #{_lambda_.5} parent=11 // pred_fallthru
          _
        // Predicated region
        $region17: #{_lambda_.5} parent=11 // pred_check
          %p160 = pneg %p82
        $region18: #{_lambda_.5} parent=11 // pred_check_branch
          %162 = sbr.rel (%p160) target = $region20
        $region19: #{_lambda_.5} parent=11 // pred_region
          _
        $region20: #{_lambda_.5} parent=11 // pred_fallthru
          _
      $region12: #{_lambda_.5} parent=5 // pred_fallthru
        _
      %p163 = scmp.lt.s32.totalorder %s14, 16
      // Predicated region
      $region21: #{_lambda_.5} parent=5 // pred_check
        %p164 = pneg %p163
      $region22: #{_lambda_.5} parent=5 // pred_check_branch
        %166 = sbr.rel (%p164) target = $region24
      $region23: #{_lambda_.5} parent=5 // pred_region
        // Predicated region
        $region25: #{_lambda_.5} parent=23 // pred_check
          %p167 = pneg %p34
        $region26: #{_lambda_.5} parent=23 // pred_check_branch
          %169 = sbr.rel (%p167) target = $region28
        $region27: #{_lambda_.5} parent=23 // pred_region
          %p170 = scmp.lt.s32.totalorder %s14, 15
          %s171 = scalar_select %p170, %s14, 15
          %s172 = smul.addr %s171, 2
          %s173 = smul.addr %s172, 8
          %s174 = scalar_lea.vmem %s0, %s173
        $region28: #{_lambda_.5} parent=23 // pred_fallthru
          _
        // Predicated region
        $region29: #{_lambda_.5} parent=23 // pred_check
          %p175 = pneg %p102
        $region30: #{_lambda_.5} parent=23 // pred_check_branch
          %177 = sbr.rel (%p175) target = $region32
        $region31: #{_lambda_.5} parent=23 // pred_region
          %p178 = scmp.lt.s32.totalorder %s14, 15
          %s179 = scalar_select %p178, %s14, 15
          %s180 = smul.addr %s179, 8
          %s181 = scalar_lea.vmem %s3, %s180
        $region32: #{_lambda_.5} parent=23 // pred_fallthru
          _
      $region24: #{_lambda_.5} parent=5 // pred_fallthru
        _
      %p182 = scmp.le.s32.totalorder 1, %s14
      %p183 = scmp.lt.s32.totalorder %s14, 17
      %p184 = pnand %p182, %p183
      %p185 = pneg %p184
      // Predicated region
      $region33: #{_lambda_.5} parent=5 // pred_check
        _
      $region34: #{_lambda_.5} parent=5 // pred_check_branch
        %187 = sbr.rel (%p184) target = $region36
      $region35: #{_lambda_.5} parent=5 // pred_region
        %s188 = ssub.s32 %s14, 1
        // Predicated region
        $region37: #{_lambda_.5} parent=35 // pred_check
          %p189 = pneg %p61
        $region38: #{_lambda_.5} parent=35 // pred_check_branch
          %191 = sbr.rel (%p189) target = $region40
        $region39: #{_lambda_.5} parent=35 // pred_region
          %192 = dma.done [#allocation3], 128
        $region40: #{_lambda_.5} parent=35 // pred_fallthru
          _
        %p193 = scmp.lt.s32.totalorder %s19, 15
        %s194 = scalar_select %p193, %s19, 15
        %s195 = smul.addr %s194, 2
        %s196 = smul.addr %s195, 8
        %s197 = scalar_lea.vmem %s0, %s196
        %p198 = pneg %p40
        %p199 = pneg %p37
        %p200 = pneg %p61
        %p201 = pneg %p58
        %p202 = pneg %p82
        %p203 = pneg %p79
        %p204 = scmp.lt.s32.totalorder %s19, 15
        %s205 = scalar_select %p204, %s19, 15
        %s206 = smul.addr %s205, 8
        %s207 = scalar_lea.vmem %s3, %s206
        %p208 = pneg %p108
        %p209 = pneg %p105
        %p210 = pneg %p134
        %p211 = pneg %p131
        %s212 = sand.u32 %s121, 1
        %s213 = scalar_lea.sflag [#allocation4], %s212
        %s214 = sand.u32 %s121, 1
        %s215 = smul.addr %s214, 8
        %s216 = scalar_lea.vmem [#allocation5], %s215
        %p217 = scmp.lt.s32.totalorder %s19, 15
        %s218 = scalar_select %p217, %s19, 15
        %s219 = smul.addr %s218, 2
        %s220 = smul.addr %s219, 8
        %s221 = scalar_lea.vmem %s0, %s220
        %p222 = scmp.lt.s32.totalorder %s19, 15
        %s223 = scalar_select %p222, %s19, 15
        %s224 = smul.addr %s223, 8
        %s225 = scalar_lea.vmem %s3, %s224
        %v226 = vld [vmem:[%s221] sm:$0xff]
        %v227 = vld [vmem:[%s221 + $0x8] sm:$0xff]
        %v228 = vld [vmem:[%s2] sm:$0xff]
        %v229 = vld [vmem:[%s2 + $0x8] sm:$0xff]
        %vm230 = vcmask 130048
        %v232 = vsel %vm230, %v226, 0
        %v235 = vsel %vm230, %v227, 0
        %237 = vmatprep.subr.mxu0 0.0
        %238 = vmatpush1.msra.mxu0 0.0
        %239 = vmatprep.subr.mxu0 0.0
        %240 = vmatpush1.msra.mxu0 0.0
        %241 = vmatprep.subr.mxu0 0.0
        %242 = vmatpush1.msra.mxu0 0.0
        %243 = vmatprep.subr.mxu0 0.0
        %244 = vmatpush1.msra.mxu0 0.0
        %245 = vmatprep.subr.mxu0 0.0
        %246 = vmatpush1.msra.mxu0 0.0
        %247 = vmatprep.subr.mxu0 0.0
        %248 = vmatpush1.msra.mxu0 0.0
        %249 = vmatprep.subr.mxu0 0.0
        %250 = vmatpush1.msra.mxu0 0.0
        %251 = vmatprep.subr.mxu0 0.0
        %252 = vmatpush1.msra.mxu0 0.0
        %253 = vmatprep.subr.mxu0 0.0
        %254 = vmatpush1.msra.mxu0 0.0
        %255 = vmatprep.subr.mxu0 0.0
        %256 = vmatpush1.msra.mxu0 0.0
        %257 = vmatprep.subr.mxu0 0.0
        %258 = vmatpush1.msra.mxu0 0.0
        %259 = vmatprep.subr.mxu0 0.0
        %260 = vmatpush1.msra.mxu0 0.0
        %261 = vmatprep.subr.mxu0 0.0
        %262 = vmatpush1.msra.mxu0 0.0
        %263 = vmatprep.subr.mxu0 0.0
        %264 = vmatpush1.msra.mxu0 0.0
        %265 = vmatprep.subr.mxu0 0.0
        %266 = vmatpush1.msra.mxu0 %v229
        %267 = vmatprep.subr.mxu0 0.0
        %268 = vmatpush1.msra.mxu0 %v228
        %269 = vmatprep.subr.mxu0 0.0
        %270 = vmatpush2.msra.mxu0 0.0
        %271 = vmatprep.subr.mxu0 0.0
        %272 = vmatpush2.msra.mxu0 0.0
        %273 = vmatprep.subr.mxu0 0.0
        %274 = vmatpush2.msra.mxu0 0.0
        %275 = vmatprep.subr.mxu0 0.0
        %276 = vmatpush2.msra.mxu0 0.0
        %277 = vmatprep.subr.mxu0 0.0
        %278 = vmatpush2.msra.mxu0 0.0
        %279 = vmatprep.subr.mxu0 0.0
        %280 = vmatpush2.msra.mxu0 0.0
        %281 = vmatprep.subr.mxu0 0.0
        %282 = vmatpush2.msra.mxu0 0.0
        %283 = vmatprep.subr.mxu0 0.0
        %284 = vmatpush2.msra.mxu0 0.0
        %285 = vmatprep.subr.mxu0 0.0
        %286 = vmatpush2.msra.mxu0 0.0
        %287 = vmatprep.subr.mxu0 0.0
        %288 = vmatpush2.msra.mxu0 0.0
        %289 = vmatprep.subr.mxu0 0.0
        %290 = vmatpush2.msra.mxu0 0.0
        %291 = vmatprep.subr.mxu0 0.0
        %292 = vmatpush2.msra.mxu0 0.0
        %293 = vmatprep.subr.mxu0 0.0
        %294 = vmatpush2.msra.mxu0 0.0
        %295 = vmatprep.subr.mxu0 0.0
        %296 = vmatpush2.msra.mxu0 0.0
        %297 = vmatprep.subr.mxu0 0.0
        %298 = vmatpush2.msra.mxu0 0.0
        %299 = vmatprep.subr.mxu0 0.0
        %300 = vmatpush2.msra.mxu0 0.0
        %301 = vmatprep.mubr.f32.mxu0 0.0
        %302 = vmatmul.mubr.f32.gmra.mxu0 %v232
        %v303 = vpop.f32.mrf.mxu0
        %v304 = vadd.f32 0.0, %v303
        %v305 = vpop.f32.mrf.mxu0
        %306 = vmatprep.mubr.f32.mxu0 0.0
        %307 = vmatmul.mubr.f32.gmra.mxu0 %v235
        %v308 = vpop.f32.mrf.mxu0
        %v309 = vadd.f32 0.0, %v308
        %v310 = vpop.f32.mrf.mxu0
        %311 = vdwg.mxu0
        %v312 = vld [vmem:[#allocation2] sm:$0xff]
        %v313 = vld [vmem:[%s225] sm:$0xff]
        %v315 = vsel %vm230, %v312, 0
        %317 = vmatprep.subr.mxu0 0.0
        %318 = vmatpush1.msra.mxu0 0.0
        %319 = vmatprep.subr.mxu0 0.0
        %320 = vmatpush1.msra.mxu0 0.0
        %321 = vmatprep.subr.mxu0 0.0
        %322 = vmatpush1.msra.mxu0 0.0
        %323 = vmatprep.subr.mxu0 0.0
        %324 = vmatpush1.msra.mxu0 0.0
        %325 = vmatprep.subr.mxu0 0.0
        %326 = vmatpush1.msra.mxu0 0.0
        %327 = vmatprep.subr.mxu0 0.0
        %328 = vmatpush1.msra.mxu0 0.0
        %329 = vmatprep.subr.mxu0 0.0
        %330 = vmatpush1.msra.mxu0 0.0
        %331 = vmatprep.subr.mxu0 0.0
        %332 = vmatpush1.msra.mxu0 0.0
        %333 = vmatprep.subr.mxu0 0.0
        %334 = vmatpush1.msra.mxu0 0.0
        %335 = vmatprep.subr.mxu0 0.0
        %336 = vmatpush1.msra.mxu0 0.0
        %337 = vmatprep.subr.mxu0 0.0
        %338 = vmatpush1.msra.mxu0 0.0
        %339 = vmatprep.subr.mxu0 0.0
        %340 = vmatpush1.msra.mxu0 0.0
        %341 = vmatprep.subr.mxu0 0.0
        %342 = vmatpush1.msra.mxu0 0.0
        %343 = vmatprep.subr.mxu0 0.0
        %344 = vmatpush1.msra.mxu0 0.0
        %345 = vmatprep.subr.mxu0 0.0
        %346 = vmatpush1.msra.mxu0 %v309
        %347 = vmatprep.subr.mxu0 0.0
        %348 = vmatpush1.msra.mxu0 %v304
        %349 = vmatprep.subr.mxu0 0.0
        %350 = vmatpush2.msra.mxu0 0.0
        %351 = vmatprep.subr.mxu0 0.0
        %352 = vmatpush2.msra.mxu0 0.0
        %353 = vmatprep.subr.mxu0 0.0
        %354 = vmatpush2.msra.mxu0 0.0
        %355 = vmatprep.subr.mxu0 0.0
        %356 = vmatpush2.msra.mxu0 0.0
        %357 = vmatprep.subr.mxu0 0.0
        %358 = vmatpush2.msra.mxu0 0.0
        %359 = vmatprep.subr.mxu0 0.0
        %360 = vmatpush2.msra.mxu0 0.0
        %361 = vmatprep.subr.mxu0 0.0
        %362 = vmatpush2.msra.mxu0 0.0
        %363 = vmatprep.subr.mxu0 0.0
        %364 = vmatpush2.msra.mxu0 0.0
        %365 = vmatprep.subr.mxu0 0.0
        %366 = vmatpush2.msra.mxu0 0.0
        %367 = vmatprep.subr.mxu0 0.0
        %368 = vmatpush2.msra.mxu0 0.0
        %369 = vmatprep.subr.mxu0 0.0
        %370 = vmatpush2.msra.mxu0 0.0
        %371 = vmatprep.subr.mxu0 0.0
        %372 = vmatpush2.msra.mxu0 0.0
        %373 = vmatprep.subr.mxu0 0.0
        %374 = vmatpush2.msra.mxu0 0.0
        %375 = vmatprep.subr.mxu0 0.0
        %376 = vmatpush2.msra.mxu0 0.0
        %377 = vmatprep.subr.mxu0 0.0
        %378 = vmatpush2.msra.mxu0 0.0
        %379 = vmatprep.subr.mxu0 0.0
        %380 = vmatpush2.msra.mxu0 0.0
        %381 = vmatprep.mubr.f32.mxu0 0.0
        %382 = vmatmul.mubr.f32.gmra.mxu0 %v315
        %v383 = vpop.f32.mrf.mxu0
        %v384 = vadd.f32 %v313, %v383
        %v385 = vpop.f32.mrf.mxu0
        %386 = vdwg.mxu0
        %vm387 = vcmask 64512
        %388 = vst.msk [vmem:[%s216] sm:$0xff] %vm387, %v384
        %s389 = sand.u32 %s121, 1
        %s390 = scalar_lea.sflag [#allocation4], %s389
        %s391 = sand.u32 %s121, 1
        %s392 = smul.addr %s391, 8
        %s393 = scalar_lea.vmem [#allocation5], %s392
        // Predicated region
        $region41: #{_lambda_.5} parent=35 // pred_check
          %p394 = pneg %p131
        $region42: #{_lambda_.5} parent=35 // pred_check_branch
          %396 = sbr.rel (%p394) target = $region44
        $region43: #{_lambda_.5} parent=35 // pred_region
          %s398 = ssub.s32 128, 128
          %399 = vsyncadd %s390, %s398
          %s400 = smul.addr %s19, 128
          %s401 = scalar_lea.hbm %s4, %s400
          %s403 = sshll.u32 %s393, 4
          %s404 = int_to_ptr.vmem [resolvable:$true] %s403
          %406 = dma.vmem_to_hbm [thread:$0]  %s404, 128, %s401, %s390
        $region44: #{_lambda_.5} parent=35 // pred_fallthru
          _
      $region36: #{_lambda_.5} parent=5 // pred_fallthru
        _
      %p407 = scmp.le.s32.totalorder 2, %s14
      // Predicated region
      $region45: #{_lambda_.5} parent=5 // pred_check
        %p408 = pneg %p407
      $region46: #{_lambda_.5} parent=5 // pred_check_branch
        %410 = sbr.rel (%p408) target = $region48
      $region47: #{_lambda_.5} parent=5 // pred_region
        %s411 = ssub.s32 %s14, 2
        // Predicated region
        $region49: #{_lambda_.5} parent=47 // pred_check
          %p412 = pneg %p137
        $region50: #{_lambda_.5} parent=47 // pred_check_branch
          %414 = sbr.rel (%p412) target = $region52
        $region51: #{_lambda_.5} parent=47 // pred_region
          %s415 = sand.u32 %s122, 1
          %s416 = scalar_lea.sflag [#allocation4], %s415
          %s417 = sand.u32 %s122, 1
          %s418 = smul.addr %s417, 8
          %s419 = scalar_lea.vmem [#allocation5], %s418
          %420 = dma.done %s416, 128
        $region52: #{_lambda_.5} parent=47 // pred_fallthru
          _
      $region48: #{_lambda_.5} parent=5 // pred_fallthru
        _
    $region6: #{_lambda_.5} parent=1 // loop_footer
      %s18 = sadd.s32 1, %s14
    $region7: #{_lambda_.5} parent=1 // loop_footer_branch
      %13 = sbr.rel target = $region3
    $region8: #{_lambda_.5} parent=1 // loop_exit
      _
    %421 = vsyncpa [#allocation3], 1
    %s422 = scalar_lea.sflag [#allocation3], 1
    %423 = vsyncpa %s422, 1
    %424 = vsyncpa [#allocation4], 1
    %s425 = scalar_lea.sflag [#allocation4], 1
    %426 = vsyncpa %s425, 1

</llo_original>
